<compile_context>
chip_gen: v6e
topology: v6e:2x2x1
jax: 0.10.0
libtpu: 0.0.40
codegen_flags: <defaults>
</compile_context>

<pallas_src>
import jax
import jax.numpy as jnp
from jax import lax
from jax.experimental import pallas as pl
from jax.experimental.pallas import tpu as pltpu


# ----------------------------- Pallas kernels ----------------------------- #

def _convmm_kernel(w_ref, b_ref, a_ref, o_ref):
    # w: (Co, K) bf16, a: (K, TM) bf16, b: (Co, 1) f32 -> o: (Co, TM) f32
    acc = jnp.dot(w_ref[...], a_ref[...], preferred_element_type=jnp.float32)
    o_ref[...] = (acc + b_ref[...]).astype(o_ref.dtype)


def _convmm_res_relu_kernel(w_ref, b_ref, a_ref, r_ref, o_ref):
    # Fused conv_cat: matmul + bias + residual (conv_res output) + ReLU
    acc = jnp.dot(w_ref[...], a_ref[...], preferred_element_type=jnp.float32)
    acc = acc + b_ref[...] + r_ref[...].astype(jnp.float32)
    o_ref[...] = jnp.maximum(acc, 0.0).astype(o_ref.dtype)


# ------------------------- matmul launch wrapper --------------------------- #

def _pick_tile_m(M):
    # Largest lane tile in {512, 256, 128} that still yields a grid of >= 2
    # steps (keeps both TensorCores busy on v7x and enables pipelining).
    for t in (512, 256, 128):
        if M >= 2 * t:
            return t
    return 128


def _conv_matmul(wm, bias, A, residual=None):
    """out = wm @ A + bias  (optionally + residual, then ReLU).

    wm: (Co, K) bf16 (BN-folded weights), A: (K, M) bf16, bias: (Co, 1) f32,
    residual: (Co, M) f32 or None.  Returns (Co, M) f32.
    """
    Co, K = wm.shape
    M = A.shape[1]
    tm = _pick_tile_m(M)
    Mp = pl.cdiv(M, tm) * tm
    if Mp != M:
        A = jnp.pad(A, ((0, 0), (0, Mp - M)))
        if residual is not None:
            residual = jnp.pad(residual, ((0, 0), (0, Mp - M)))

    grid = (Mp // tm,)
    in_specs = [
        pl.BlockSpec((Co, K), lambda i: (0, 0)),   # folded weights, resident
        pl.BlockSpec((Co, 1), lambda i: (0, 0)),   # BN shift, resident
        pl.BlockSpec((K, tm), lambda i: (0, i)),   # activation column tile
    ]
    args = [wm, bias, A]
    if residual is not None:
        in_specs.append(pl.BlockSpec((Co, tm), lambda i: (0, i)))
        args.append(residual)
        kernel = _convmm_res_relu_kernel
    else:
        kernel = _convmm_kernel

    bytes_accessed = (Co * K * 2 + Co * 4 + K * Mp * 2 + Co * Mp * 4
                      + (Co * Mp * 4 if residual is not None else 0))
    out = pl.pallas_call(
        kernel,
        out_shape=jax.ShapeDtypeStruct((Co, Mp), jnp.float32),
        grid=grid,
        in_specs=in_specs,
        out_specs=pl.BlockSpec((Co, tm), lambda i: (0, i)),
        compiler_params=pltpu.CompilerParams(
            dimension_semantics=("parallel",),
            vmem_limit_bytes=32 * 1024 * 1024),
        cost_estimate=pl.CostEstimate(
            flops=2 * Co * K * Mp,
            transcendentals=0,
            bytes_accessed=bytes_accessed),
    )(*args)
    return out[:, :M] if Mp != M else out


# ------------------------------ conv wrappers ------------------------------ #

def _im2col_t(x, KH, KW, padding, dilation):
    # x: (C, N, H, W) bf16 -> (KH*KW*C, N*H*W), row order (kh, kw, c).
    C, N, H, W = x.shape
    ph, pw = padding
    dh, dw = dilation
    xp = jnp.pad(x, ((0, 0), (0, 0), (ph, ph), (pw, pw)))
    cols = []
    for kh in range(KH):
        for kw in range(KW):
            cols.append(xp[:, :, kh * dh:kh * dh + H, kw * dw:kw * dw + W])
    A = jnp.concatenate(cols, axis=0)          # (KH*KW*C, N, H, W)
    return A.reshape(KH * KW * C, N * H * W)


def basic_conv2d(x, prep, kernel_size, *, padding=(0, 0), dilation=(1, 1),
                 residual=None):
    """BN-folded Conv2d.  x: (C, N, H, W) f32.  Returns (Co, N, H, W) f32.

    If `residual` (Co, N, H, W) is given, fuses relu(conv(x) + residual).
    """
    C, N, H, W = x.shape
    KH, KW = kernel_size
    M = N * H * W
    if KH == 1 and KW == 1:
        A = x.reshape(C, M).astype(jnp.bfloat16)
    else:
        A = _im2col_t(x.astype(jnp.bfloat16), KH, KW, padding, dilation)
    Co = prep["wm"].shape[0]
    r = None if residual is None else residual.reshape(Co, M)
    y = _conv_matmul(prep["wm"], prep["bias"], A, residual=r)
    return y.reshape(Co, N, H, W)


def head_convs_1x1(x, prep_heads, cout):
    """One matmul for the four 1x1 convs that all read x:
    branch0[0], branch1[0], branch2[0], conv_res -> lane-dense 4*Cout output."""
    C, N, H, W = x.shape
    M = N * H * W
    A = x.reshape(C, M).astype(jnp.bfloat16)
    y = _conv_matmul(prep_heads["wm"], prep_heads["bias"], A)   # (4*Cout, M)
    y = y.reshape(4, cout, N, H, W)
    return y[0], y[1], y[2], y[3]


# ----------------------------- parameter init ------------------------------ #

def init_basic_conv2d(key, cin, cout, k):
    if isinstance(k, int):
        k = (k, k)
    kw_, kb_, kg_, km_, kv_ = jax.random.split(key, 5)
    w = jax.random.normal(kw_, (cout, cin, k[0], k[1]), jnp.float32) * 0.1
    gamma = 1.0 + 0.1 * jax.random.normal(kg_, (cout,), jnp.float32)
    beta = 0.1 * jax.random.normal(kb_, (cout,), jnp.float32)
    mean = 0.1 * jax.random.normal(km_, (cout,), jnp.float32)
    var = 1.0 + 0.1 * jnp.abs(jax.random.normal(kv_, (cout,), jnp.float32))
    eps = 1e-5
    scale = gamma / jnp.sqrt(var + eps)
    shift = beta - mean * scale
    return {"w": w, "scale": scale, "shift": shift}


def init_rfb_params(key, cin, cout):
    keys = jax.random.split(key, 11)
    return {
        "b0_0":     init_basic_conv2d(keys[0], cin, cout, 1),
        "b1_0":     init_basic_conv2d(keys[1], cin, cout, 1),
        "b1_1":     init_basic_conv2d(keys[2], cout, cout, (1, 3)),
        "b1_2":     init_basic_conv2d(keys[3], cout, cout, (3, 1)),
        "b1_3":     init_basic_conv2d(keys[4], cout, cout, 3),
        "b2_0":     init_basic_conv2d(keys[5], cin, cout, 1),
        "b2_1":     init_basic_conv2d(keys[6], cout, cout, (1, 5)),
        "b2_2":     init_basic_conv2d(keys[7], cout, cout, (5, 1)),
        "b2_3":     init_basic_conv2d(keys[8], cout, cout, 3),
        "conv_cat": init_basic_conv2d(keys[9], 3 * cout, cout, 3),
        "conv_res": init_basic_conv2d(keys[10], cin, cout, 1),
    }


def _prepare_conv(raw):
    # Fold BN (eval) into the conv once:  y = conv(x, w)*scale + shift
    # and pre-transpose to the (Cout, KH*KW*Cin) matmul layout in bf16.
    w, scale, shift = raw["w"], raw["scale"], raw["shift"]
    cout, cin, kh, kw = w.shape
    wf = w * scale[:, None, None, None]
    wm = jnp.transpose(wf, (0, 2, 3, 1)).reshape(cout, kh * kw * cin)
    return {"wm": wm.astype(jnp.bfloat16),
            "bias": shift.reshape(cout, 1).astype(jnp.float32)}


def prepare_rfb_params(raw):
    prep = {name: _prepare_conv(p) for name, p in raw.items()}
    heads = [prep[n] for n in ("b0_0", "b1_0", "b2_0", "conv_res")]
    prep["heads"] = {
        "wm": jnp.concatenate([h["wm"] for h in heads], axis=0),
        "bias": jnp.concatenate([h["bias"] for h in heads], axis=0),
    }
    return prep


# -------------------------------- RFB forward ------------------------------ #

def rfb_forward(prep, x_nchw):
    cout = prep["b0_0"]["wm"].shape[0]
    # NCHW -> CNHW (channels-major): channels map to sublanes, N*H*W to lanes.
    x = jnp.transpose(x_nchw, (1, 0, 2, 3))
    # Four 1x1 branch heads + conv_res in a single lane-dense matmul.
    x0, x1, x2, x_res = head_convs_1x1(x, prep["heads"], cout)
    # branch1: (1,3) -> (3,1) -> 3x3 dil 3
    x1 = basic_conv2d(x1, prep["b1_1"], (1, 3), padding=(0, 1))
    x1 = basic_conv2d(x1, prep["b1_2"], (3, 1), padding=(1, 0))
    x1 = basic_conv2d(x1, prep["b1_3"], (3, 3), padding=(3, 3), dilation=(3, 3))
    # branch2: (1,5) -> (5,1) -> 3x3 dil 5
    x2 = basic_conv2d(x2, prep["b2_1"], (1, 5), padding=(0, 2))
    x2 = basic_conv2d(x2, prep["b2_2"], (5, 1), padding=(2, 0))
    x2 = basic_conv2d(x2, prep["b2_3"], (3, 3), padding=(5, 5), dilation=(5, 5))
    # concat along channels (axis 0 in CNHW == torch.cat dim 1 in NCHW)
    x_cat_in = jnp.concatenate([x0, x1, x2], axis=0)
    # conv_cat with fused residual add + ReLU inside the Pallas kernel
    out = basic_conv2d(x_cat_in, prep["conv_cat"], (3, 3), padding=(1, 1),
                       residual=x_res)
    return jnp.transpose(out, (1, 0, 2, 3))     # CNHW -> NCHW


# ---------------------------- pure-JAX reference ---------------------------- #

def _conv_ref(x, params, padding=(0, 0), dilation=(1, 1)):
    w = params["w"] * params["scale"][:, None, None, None]
    y = lax.conv_general_dilated(
        x, jnp.transpose(w, (2, 3, 1, 0)),
        window_strides=(1, 1),
        padding=[(padding[0], padding[0]), (padding[1], padding[1])],
        rhs_dilation=dilation,
        dimension_numbers=("NHWC", "HWIO", "NHWC"),
        precision=lax.Precision.HIGHEST)
    return y + params["shift"][None, None, None, :]


def rfb_forward_ref(params, x_nchw):
    x = jnp.transpose(x_nchw, (0, 2, 3, 1))
    p = params
    x0 = _conv_ref(x, p["b0_0"])
    x1 = _conv_ref(x, p["b1_0"])
    x1 = _conv_ref(x1, p["b1_1"], padding=(0, 1))
    x1 = _conv_ref(x1, p["b1_2"], padding=(1, 0))
    x1 = _conv_ref(x1, p["b1_3"], padding=(3, 3), dilation=(3, 3))
    x2 = _conv_ref(x, p["b2_0"])
    x2 = _conv_ref(x2, p["b2_1"], padding=(0, 2))
    x2 = _conv_ref(x2, p["b2_2"], padding=(2, 0))
    x2 = _conv_ref(x2, p["b2_3"], padding=(5, 5), dilation=(5, 5))
    x_cat = _conv_ref(jnp.concatenate([x0, x1, x2], axis=-1),
                      p["conv_cat"], padding=(1, 1))
    x_res = _conv_ref(x, p["conv_res"])
    out = jnp.maximum(x_cat + x_res, 0.0)
    return jnp.transpose(out, (0, 3, 1, 2))


# ----------------------------------- main ----------------------------------- #

if __name__ == "__main__":
    key = jax.random.PRNGKey(0)
    kx, kp = jax.random.split(key)

    N, Cin, H, W = 2, 4, 16, 16
    Cout = 8
    x = jax.random.normal(kx, (N, Cin, H, W), jnp.float32)
    raw_params = init_rfb_params(kp, Cin, Cout)
    prep = prepare_rfb_params(raw_params)      # fold BN + transpose weights once

    fwd = jax.jit(rfb_forward)
    out = jax.block_until_ready(fwd(prep, x))
    ref = jax.block_until_ready(rfb_forward_ref(raw_params, x))

    assert out.shape == (N, Cout, H, W), out.shape
    # bf16 MXU operands vs f32 HIGHEST reference -> modest tolerance.
    if not bool(jnp.allclose(out, ref, atol=2e-2, rtol=2e-2)):
        err = float(jnp.max(jnp.abs(out - ref)))
        raise AssertionError(f"Pallas RFB output mismatch vs reference "
                             f"(max abs err {err:.3e})")
    print("KERNEL_OK")
</pallas_src>

<mosaic_0001>
module attributes {stable_mosaic.version = 11 : i64} {
  func.func @_convmm_kernel(%arg0: i32, %arg1: memref<32x4xbf16, #tpu.memory_space<vmem>>, %arg2: memref<32x1xf32, #tpu.memory_space<vmem>>, %arg3: memref<4x256xbf16, #tpu.memory_space<vmem>>, %arg4: memref<32x256xf32, #tpu.memory_space<vmem>>) attributes {dimension_semantics = [#tpu.dimension_semantics<parallel>], iteration_bounds = array<i64: 2>, scalar_prefetch = 0 : i64, scratch_operands = 0 : i64, tpu.core_type = #tpu.core_type<tc>, window_params = [{pipeline_mode = #tpu.pipeline_mode<synchronous>, transform_indices = @transform_0, window_bounds = array<i64: 32, 4>}, {pipeline_mode = #tpu.pipeline_mode<synchronous>, transform_indices = @transform_1, window_bounds = array<i64: 32, 1>}, {transform_indices = @transform_2, window_bounds = array<i64: 4, 256>}, {transform_indices = @transform_3, window_bounds = array<i64: 32, 256>}]} {
    %c0 = arith.constant 0 : index
    %c0_0 = arith.constant 0 : index
    %0 = vector.load %arg1[%c0, %c0_0] : memref<32x4xbf16, #tpu.memory_space<vmem>>, vector<32x4xbf16>
    %c0_1 = arith.constant 0 : index
    %c0_2 = arith.constant 0 : index
    %1 = vector.load %arg3[%c0_1, %c0_2] : memref<4x256xbf16, #tpu.memory_space<vmem>>, vector<4x256xbf16>
    %cst = arith.constant dense<0.000000e+00> : vector<32x256xf32>
    %2 = tpu.matmul %0, %1, %cst {dimension_numbers = #tpu.dot_dimension_numbers<[1], [0], [0], [1], [0, 0, 1, 1], [], []>} : vector<32x4xbf16>, vector<4x256xbf16>, vector<32x256xf32> -> vector<32x256xf32>
    %c0_3 = arith.constant 0 : index
    %c0_4 = arith.constant 0 : index
    %3 = vector.load %arg2[%c0_3, %c0_4] : memref<32x1xf32, #tpu.memory_space<vmem>>, vector<32x1xf32>
    %4 = vector.broadcast %3 : vector<32x1xf32> to vector<32x256xf32>
    %5 = arith.addf %2, %4 : vector<32x256xf32>
    %c0_5 = arith.constant 0 : index
    %c0_6 = arith.constant 0 : index
    %6 = vector.load %arg4[%c0_5, %c0_6] : memref<32x256xf32, #tpu.memory_space<vmem>>, vector<32x256xf32>
    tpu.vector_store %arg4[%c0_5, %c0_6], %5 {strides = array<i32>} : memref<32x256xf32, #tpu.memory_space<vmem>>, vector<32x256xf32>,
    return
  }
  func.func @transform_0(%arg0: i32) -> (i32, i32) {
    %c0_i32 = arith.constant 0 : i32
    %c0_i32_0 = arith.constant 0 : i32
    %c0_i32_1 = arith.constant 0 : i32
    return %c0_i32, %c0_i32_0 : i32, i32
  }
  func.func @transform_1(%arg0: i32) -> (i32, i32) {
    %c0_i32 = arith.constant 0 : i32
    %c0_i32_0 = arith.constant 0 : i32
    %c0_i32_1 = arith.constant 0 : i32
    return %c0_i32, %c0_i32_0 : i32, i32
  }
  func.func @transform_2(%arg0: i32) -> (i32, i32) {
    %c0_i32 = arith.constant 0 : i32
    %c0_i32_0 = arith.constant 0 : i32
    return %c0_i32, %arg0 : i32, i32
  }
  func.func @transform_3(%arg0: i32) -> (i32, i32) {
    %c0_i32 = arith.constant 0 : i32
    %c0_i32_0 = arith.constant 0 : i32
    return %c0_i32, %arg0 : i32, i32
  }
}

module attributes {stable_mosaic.version = 11 : i64} {
  func.func @_convmm_kernel(%arg0: i32, %arg1: memref<8x24xbf16, #tpu.memory_space<vmem>>, %arg2: memref<8x1xf32, #tpu.memory_space<vmem>>, %arg3: memref<24x256xbf16, #tpu.memory_space<vmem>>, %arg4: memref<8x256xf32, #tpu.memory_space<vmem>>) attributes {dimension_semantics = [#tpu.dimension_semantics<parallel>], iteration_bounds = array<i64: 2>, scalar_prefetch = 0 : i64, scratch_operands = 0 : i64, tpu.core_type = #tpu.core_type<tc>, window_params = [{pipeline_mode = #tpu.pipeline_mode<synchronous>, transform_indices = @transform_0, window_bounds = array<i64: 8, 24>}, {pipeline_mode = #tpu.pipeline_mode<synchronous>, transform_indices = @transform_1, window_bounds = array<i64: 8, 1>}, {transform_indices = @transform_2, window_bounds = array<i64: 24, 256>}, {transform_indices = @transform_3, window_bounds = array<i64: 8, 256>}]} {
    %c0 = arith.constant 0 : index
    %c0_0 = arith.constant 0 : index
    %0 = vector.load %arg1[%c0, %c0_0] : memref<8x24xbf16, #tpu.memory_space<vmem>>, vector<8x24xbf16>
    %c0_1 = arith.constant 0 : index
    %c0_2 = arith.constant 0 : index
    %1 = vector.load %arg3[%c0_1, %c0_2] : memref<24x256xbf16, #tpu.memory_space<vmem>>, vector<24x256xbf16>
    %cst = arith.constant dense<0.000000e+00> : vector<8x256xf32>
    %2 = tpu.matmul %0, %1, %cst {dimension_numbers = #tpu.dot_dimension_numbers<[1], [0], [0], [1], [0, 0, 1, 1], [], []>} : vector<8x24xbf16>, vector<24x256xbf16>, vector<8x256xf32> -> vector<8x256xf32>
    %c0_3 = arith.constant 0 : index
    %c0_4 = arith.constant 0 : index
    %3 = vector.load %arg2[%c0_3, %c0_4] : memref<8x1xf32, #tpu.memory_space<vmem>>, vector<8x1xf32>
    %4 = vector.broadcast %3 : vector<8x1xf32> to vector<8x256xf32>
    %5 = arith.addf %2, %4 : vector<8x256xf32>
    %c0_5 = arith.constant 0 : index
    %c0_6 = arith.constant 0 : index
    %6 = vector.load %arg4[%c0_5, %c0_6] : memref<8x256xf32, #tpu.memory_space<vmem>>, vector<8x256xf32>
    tpu.vector_store %arg4[%c0_5, %c0_6], %5 {strides = array<i32>} : memref<8x256xf32, #tpu.memory_space<vmem>>, vector<8x256xf32>,
    return
  }
  func.func @transform_0(%arg0: i32) -> (i32, i32) {
    %c0_i32 = arith.constant 0 : i32
    %c0_i32_0 = arith.constant 0 : i32
    %c0_i32_1 = arith.constant 0 : i32
    return %c0_i32, %c0_i32_0 : i32, i32
  }
  func.func @transform_1(%arg0: i32) -> (i32, i32) {
    %c0_i32 = arith.constant 0 : i32
    %c0_i32_0 = arith.constant 0 : i32
    %c0_i32_1 = arith.constant 0 : i32
    return %c0_i32, %c0_i32_0 : i32, i32
  }
  func.func @transform_2(%arg0: i32) -> (i32, i32) {
    %c0_i32 = arith.constant 0 : i32
    %c0_i32_0 = arith.constant 0 : i32
    return %c0_i32, %arg0 : i32, i32
  }
  func.func @transform_3(%arg0: i32) -> (i32, i32) {
    %c0_i32 = arith.constant 0 : i32
    %c0_i32_0 = arith.constant 0 : i32
    return %c0_i32, %arg0 : i32, i32
  }
}

module attributes {stable_mosaic.version = 11 : i64} {
  func.func @_convmm_kernel(%arg0: i32, %arg1: memref<8x40xbf16, #tpu.memory_space<vmem>>, %arg2: memref<8x1xf32, #tpu.memory_space<vmem>>, %arg3: memref<40x256xbf16, #tpu.memory_space<vmem>>, %arg4: memref<8x256xf32, #tpu.memory_space<vmem>>) attributes {dimension_semantics = [#tpu.dimension_semantics<parallel>], iteration_bounds = array<i64: 2>, scalar_prefetch = 0 : i64, scratch_operands = 0 : i64, tpu.core_type = #tpu.core_type<tc>, window_params = [{pipeline_mode = #tpu.pipeline_mode<synchronous>, transform_indices = @transform_0, window_bounds = array<i64: 8, 40>}, {pipeline_mode = #tpu.pipeline_mode<synchronous>, transform_indices = @transform_1, window_bounds = array<i64: 8, 1>}, {transform_indices = @transform_2, window_bounds = array<i64: 40, 256>}, {transform_indices = @transform_3, window_bounds = array<i64: 8, 256>}]} {
    %c0 = arith.constant 0 : index
    %c0_0 = arith.constant 0 : index
    %0 = vector.load %arg1[%c0, %c0_0] : memref<8x40xbf16, #tpu.memory_space<vmem>>, vector<8x40xbf16>
    %c0_1 = arith.constant 0 : index
    %c0_2 = arith.constant 0 : index
    %1 = vector.load %arg3[%c0_1, %c0_2] : memref<40x256xbf16, #tpu.memory_space<vmem>>, vector<40x256xbf16>
    %cst = arith.constant dense<0.000000e+00> : vector<8x256xf32>
    %2 = tpu.matmul %0, %1, %cst {dimension_numbers = #tpu.dot_dimension_numbers<[1], [0], [0], [1], [0, 0, 1, 1], [], []>} : vector<8x40xbf16>, vector<40x256xbf16>, vector<8x256xf32> -> vector<8x256xf32>
    %c0_3 = arith.constant 0 : index
    %c0_4 = arith.constant 0 : index
    %3 = vector.load %arg2[%c0_3, %c0_4] : memref<8x1xf32, #tpu.memory_space<vmem>>, vector<8x1xf32>
    %4 = vector.broadcast %3 : vector<8x1xf32> to vector<8x256xf32>
    %5 = arith.addf %2, %4 : vector<8x256xf32>
    %c0_5 = arith.constant 0 : index
    %c0_6 = arith.constant 0 : index
    %6 = vector.load %arg4[%c0_5, %c0_6] : memref<8x256xf32, #tpu.memory_space<vmem>>, vector<8x256xf32>
    tpu.vector_store %arg4[%c0_5, %c0_6], %5 {strides = array<i32>} : memref<8x256xf32, #tpu.memory_space<vmem>>, vector<8x256xf32>,
    return
  }
  func.func @transform_0(%arg0: i32) -> (i32, i32) {
    %c0_i32 = arith.constant 0 : i32
    %c0_i32_0 = arith.constant 0 : i32
    %c0_i32_1 = arith.constant 0 : i32
    return %c0_i32, %c0_i32_0 : i32, i32
  }
  func.func @transform_1(%arg0: i32) -> (i32, i32) {
    %c0_i32 = arith.constant 0 : i32
    %c0_i32_0 = arith.constant 0 : i32
    %c0_i32_1 = arith.constant 0 : i32
    return %c0_i32, %c0_i32_0 : i32, i32
  }
  func.func @transform_2(%arg0: i32) -> (i32, i32) {
    %c0_i32 = arith.constant 0 : i32
    %c0_i32_0 = arith.constant 0 : i32
    return %c0_i32, %arg0 : i32, i32
  }
  func.func @transform_3(%arg0: i32) -> (i32, i32) {
    %c0_i32 = arith.constant 0 : i32
    %c0_i32_0 = arith.constant 0 : i32
    return %c0_i32, %arg0 : i32, i32
  }
}

module attributes {stable_mosaic.version = 11 : i64} {
  func.func @_convmm_kernel(%arg0: i32, %arg1: memref<8x72xbf16, #tpu.memory_space<vmem>>, %arg2: memref<8x1xf32, #tpu.memory_space<vmem>>, %arg3: memref<72x256xbf16, #tpu.memory_space<vmem>>, %arg4: memref<8x256xf32, #tpu.memory_space<vmem>>) attributes {dimension_semantics = [#tpu.dimension_semantics<parallel>], iteration_bounds = array<i64: 2>, scalar_prefetch = 0 : i64, scratch_operands = 0 : i64, tpu.core_type = #tpu.core_type<tc>, window_params = [{pipeline_mode = #tpu.pipeline_mode<synchronous>, transform_indices = @transform_0, window_bounds = array<i64: 8, 72>}, {pipeline_mode = #tpu.pipeline_mode<synchronous>, transform_indices = @transform_1, window_bounds = array<i64: 8, 1>}, {transform_indices = @transform_2, window_bounds = array<i64: 72, 256>}, {transform_indices = @transform_3, window_bounds = array<i64: 8, 256>}]} {
    %c0 = arith.constant 0 : index
    %c0_0 = arith.constant 0 : index
    %0 = vector.load %arg1[%c0, %c0_0] : memref<8x72xbf16, #tpu.memory_space<vmem>>, vector<8x72xbf16>
    %c0_1 = arith.constant 0 : index
    %c0_2 = arith.constant 0 : index
    %1 = vector.load %arg3[%c0_1, %c0_2] : memref<72x256xbf16, #tpu.memory_space<vmem>>, vector<72x256xbf16>
    %cst = arith.constant dense<0.000000e+00> : vector<8x256xf32>
    %2 = tpu.matmul %0, %1, %cst {dimension_numbers = #tpu.dot_dimension_numbers<[1], [0], [0], [1], [0, 0, 1, 1], [], []>} : vector<8x72xbf16>, vector<72x256xbf16>, vector<8x256xf32> -> vector<8x256xf32>
    %c0_3 = arith.constant 0 : index
    %c0_4 = arith.constant 0 : index
    %3 = vector.load %arg2[%c0_3, %c0_4] : memref<8x1xf32, #tpu.memory_space<vmem>>, vector<8x1xf32>
    %4 = vector.broadcast %3 : vector<8x1xf32> to vector<8x256xf32>
    %5 = arith.addf %2, %4 : vector<8x256xf32>
    %c0_5 = arith.constant 0 : index
    %c0_6 = arith.constant 0 : index
    %6 = vector.load %arg4[%c0_5, %c0_6] : memref<8x256xf32, #tpu.memory_space<vmem>>, vector<8x256xf32>
    tpu.vector_store %arg4[%c0_5, %c0_6], %5 {strides = array<i32>} : memref<8x256xf32, #tpu.memory_space<vmem>>, vector<8x256xf32>,
    return
  }
  func.func @transform_0(%arg0: i32) -> (i32, i32) {
    %c0_i32 = arith.constant 0 : i32
    %c0_i32_0 = arith.constant 0 : i32
    %c0_i32_1 = arith.constant 0 : i32
    return %c0_i32, %c0_i32_0 : i32, i32
  }
  func.func @transform_1(%arg0: i32) -> (i32, i32) {
    %c0_i32 = arith.constant 0 : i32
    %c0_i32_0 = arith.constant 0 : i32
    %c0_i32_1 = arith.constant 0 : i32
    return %c0_i32, %c0_i32_0 : i32, i32
  }
  func.func @transform_2(%arg0: i32) -> (i32, i32) {
    %c0_i32 = arith.constant 0 : i32
    %c0_i32_0 = arith.constant 0 : i32
    return %c0_i32, %arg0 : i32, i32
  }
  func.func @transform_3(%arg0: i32) -> (i32, i32) {
    %c0_i32 = arith.constant 0 : i32
    %c0_i32_0 = arith.constant 0 : i32
    return %c0_i32, %arg0 : i32, i32
  }
}

module attributes {stable_mosaic.version = 11 : i64} {
  func.func @_convmm_res_relu_kernel(%arg0: i32, %arg1: memref<8x216xbf16, #tpu.memory_space<vmem>>, %arg2: memref<8x1xf32, #tpu.memory_space<vmem>>, %arg3: memref<216x256xbf16, #tpu.memory_space<vmem>>, %arg4: memref<8x256xf32, #tpu.memory_space<vmem>>, %arg5: memref<8x256xf32, #tpu.memory_space<vmem>>) attributes {dimension_semantics = [#tpu.dimension_semantics<parallel>], iteration_bounds = array<i64: 2>, scalar_prefetch = 0 : i64, scratch_operands = 0 : i64, tpu.core_type = #tpu.core_type<tc>, window_params = [{pipeline_mode = #tpu.pipeline_mode<synchronous>, transform_indices = @transform_0, window_bounds = array<i64: 8, 216>}, {pipeline_mode = #tpu.pipeline_mode<synchronous>, transform_indices = @transform_1, window_bounds = array<i64: 8, 1>}, {transform_indices = @transform_2, window_bounds = array<i64: 216, 256>}, {transform_indices = @transform_3, window_bounds = array<i64: 8, 256>}, {transform_indices = @transform_4, window_bounds = array<i64: 8, 256>}]} {
    %c0 = arith.constant 0 : index
    %c0_0 = arith.constant 0 : index
    %0 = vector.load %arg1[%c0, %c0_0] : memref<8x216xbf16, #tpu.memory_space<vmem>>, vector<8x216xbf16>
    %c0_1 = arith.constant 0 : index
    %c0_2 = arith.constant 0 : index
    %1 = vector.load %arg3[%c0_1, %c0_2] : memref<216x256xbf16, #tpu.memory_space<vmem>>, vector<216x256xbf16>
    %cst = arith.constant dense<0.000000e+00> : vector<8x256xf32>
    %2 = tpu.matmul %0, %1, %cst {dimension_numbers = #tpu.dot_dimension_numbers<[1], [0], [0], [1], [0, 0, 1, 1], [], []>} : vector<8x216xbf16>, vector<216x256xbf16>, vector<8x256xf32> -> vector<8x256xf32>
    %c0_3 = arith.constant 0 : index
    %c0_4 = arith.constant 0 : index
    %3 = vector.load %arg2[%c0_3, %c0_4] : memref<8x1xf32, #tpu.memory_space<vmem>>, vector<8x1xf32>
    %4 = vector.broadcast %3 : vector<8x1xf32> to vector<8x256xf32>
    %5 = arith.addf %2, %4 : vector<8x256xf32>
    %c0_5 = arith.constant 0 : index
    %c0_6 = arith.constant 0 : index
    %6 = vector.load %arg4[%c0_5, %c0_6] : memref<8x256xf32, #tpu.memory_space<vmem>>, vector<8x256xf32>
    %7 = arith.addf %5, %6 : vector<8x256xf32>
    %cst_7 = arith.constant 0.000000e+00 : f32
    %8 = vector.broadcast %cst_7 : f32 to vector<8x256xf32>
    %9 = arith.maximumf %7, %8 : vector<8x256xf32>
    %c0_8 = arith.constant 0 : index
    %c0_9 = arith.constant 0 : index
    %10 = vector.load %arg5[%c0_8, %c0_9] : memref<8x256xf32, #tpu.memory_space<vmem>>, vector<8x256xf32>
    tpu.vector_store %arg5[%c0_8, %c0_9], %9 {strides = array<i32>} : memref<8x256xf32, #tpu.memory_space<vmem>>, vector<8x256xf32>,
    return
  }
  func.func @transform_0(%arg0: i32) -> (i32, i32) {
    %c0_i32 = arith.constant 0 : i32
    %c0_i32_0 = arith.constant 0 : i32
    %c0_i32_1 = arith.constant 0 : i32
    return %c0_i32, %c0_i32_0 : i32, i32
  }
  func.func @transform_1(%arg0: i32) -> (i32, i32) {
    %c0_i32 = arith.constant 0 : i32
    %c0_i32_0 = arith.constant 0 : i32
    %c0_i32_1 = arith.constant 0 : i32
    return %c0_i32, %c0_i32_0 : i32, i32
  }
  func.func @transform_2(%arg0: i32) -> (i32, i32) {
    %c0_i32 = arith.constant 0 : i32
    %c0_i32_0 = arith.constant 0 : i32
    return %c0_i32, %arg0 : i32, i32
  }
  func.func @transform_3(%arg0: i32) -> (i32, i32) {
    %c0_i32 = arith.constant 0 : i32
    %c0_i32_0 = arith.constant 0 : i32
    return %c0_i32, %arg0 : i32, i32
  }
  func.func @transform_4(%arg0: i32) -> (i32, i32) {
    %c0_i32 = arith.constant 0 : i32
    %c0_i32_0 = arith.constant 0 : i32
    return %c0_i32, %arg0 : i32, i32
  }
}

</mosaic_0001>

<llo_original>
// kernel: squeeze.7
$region0: #{squeeze.7}
  %s0 = inlined_call_operand.vmem [shape: f32[1,8,2,16,16], index: 0, kind: input, shape index: {}]
  %s1 = inlined_call_operand.vmem [shape: f32[8,512], index: 1, kind: output, shape index: {}]
  %v2 = vld [vmem:[%s0] ss:$8 sm:$0xf]
  %v3 = vld [vmem:[%s0] ss:$8 sm:$0xf0]
  %vm4 = vcmask 1047556
  %v5 = vsel %vm4, %v3, %v2
  %vm6 = vcmask 130048
  %7 = vst.msk [vmem:[%s1] ss:$8 sm:$0xf] %vm6, %v5
  %s8 = scalar_lea.vmem %s1, 4294967265
  %9 = vst.msk [vmem:[%s8] ss:$8 sm:$0xf0] %vm6, %v5
  %s10 = scalar_lea.vmem %s0, 64
  %v11 = vld [vmem:[%s10] ss:$8 sm:$0xf]
  %s12 = scalar_lea.vmem %s0, 64
  %v13 = vld [vmem:[%s12] ss:$8 sm:$0xf0]
  %vm14 = vcmask 1047556
  %v15 = vsel %vm14, %v13, %v11
  %vm16 = vcmask 130048
  %s17 = scalar_lea.vmem %s1, 2
  %18 = vst.msk [vmem:[%s17] ss:$8 sm:$0xf] %vm16, %v15
  %s19 = scalar_lea.vmem %s1, 4294967267
  %20 = vst.msk [vmem:[%s19] ss:$8 sm:$0xf0] %vm16, %v15
  %s21 = scalar_lea.vmem %s0, 128
  %v22 = vld [vmem:[%s21] ss:$8 sm:$0xf]
  %s23 = scalar_lea.vmem %s0, 128
  %v24 = vld [vmem:[%s23] ss:$8 sm:$0xf0]
  %vm25 = vcmask 1047556
  %v26 = vsel %vm25, %v24, %v22
  %vm27 = vcmask 130048
  %s28 = scalar_lea.vmem %s1, 4
  %29 = vst.msk [vmem:[%s28] ss:$8 sm:$0xf] %vm27, %v26
  %s30 = scalar_lea.vmem %s1, 4294967269
  %31 = vst.msk [vmem:[%s30] ss:$8 sm:$0xf0] %vm27, %v26
  %s32 = scalar_lea.vmem %s0, 192
  %v33 = vld [vmem:[%s32] ss:$8 sm:$0xf]
  %s34 = scalar_lea.vmem %s0, 192
  %v35 = vld [vmem:[%s34] ss:$8 sm:$0xf0]
  %vm36 = vcmask 1047556
  %v37 = vsel %vm36, %v35, %v33
  %vm38 = vcmask 130048
  %s39 = scalar_lea.vmem %s1, 6
  %40 = vst.msk [vmem:[%s39] ss:$8 sm:$0xf] %vm38, %v37
  %s41 = scalar_lea.vmem %s1, 4294967271
  %42 = vst.msk [vmem:[%s41] ss:$8 sm:$0xf0] %vm38, %v37
  %s43 = scalar_lea.vmem %s0, 7
  %v44 = vld [vmem:[%s43] sm:$0x1]
  %s45 = scalar_lea.vmem %s0, 38
  %v46 = vld [vmem:[%s45] sm:$0x2]
  %vm47 = vcmask 1041409
  %v48 = vsel %vm47, %v46, %v44
  %s49 = scalar_lea.vmem %s0, 69
  %v50 = vld [vmem:[%s49] sm:$0x4]
  %vm51 = vcmask 1042434
  %v52 = vsel %vm51, %v50, %v48
  %s53 = scalar_lea.vmem %s0, 100
  %v54 = vld [vmem:[%s53] sm:$0x8]
  %vm55 = vcmask 1043459
  %v56 = vsel %vm55, %v54, %v52
  %s57 = scalar_lea.vmem %s0, 131
  %v58 = vld [vmem:[%s57] sm:$0x10]
  %vm59 = vcmask 1044484
  %v60 = vsel %vm59, %v58, %v56
  %s61 = scalar_lea.vmem %s0, 162
  %v62 = vld [vmem:[%s61] sm:$0x20]
  %vm63 = vcmask 1045509
  %v64 = vsel %vm63, %v62, %v60
  %s65 = scalar_lea.vmem %s0, 193
  %v66 = vld [vmem:[%s65] sm:$0x40]
  %vm67 = vcmask 1046534
  %v68 = vsel %vm67, %v66, %v64
  %s69 = scalar_lea.vmem %s0, 224
  %v70 = vld [vmem:[%s69] sm:$0x80]
  %vm71 = vcmask 1047559
  %v72 = vsel %vm71, %v70, %v68
  %73 = vrot.lane.b32.xlu0 %v72, 112
  %v74 = vpop.permute.xlu0 %73
  %vm75 = vcmask 1048448
  %76 = vst.msk [vmem:[%s1] sm:$0xff] %vm75, %v74
  %s77 = scalar_lea.vmem %s0, 15
  %v78 = vld [vmem:[%s77] sm:$0x1]
  %s79 = scalar_lea.vmem %s0, 46
  %v80 = vld [vmem:[%s79] sm:$0x2]
  %vm81 = vcmask 1041409
  %v82 = vsel %vm81, %v80, %v78
  %s83 = scalar_lea.vmem %s0, 77
  %v84 = vld [vmem:[%s83] sm:$0x4]
  %vm85 = vcmask 1042434
  %v86 = vsel %vm85, %v84, %v82
  %s87 = scalar_lea.vmem %s0, 108
  %v88 = vld [vmem:[%s87] sm:$0x8]
  %vm89 = vcmask 1043459
  %v90 = vsel %vm89, %v88, %v86
  %s91 = scalar_lea.vmem %s0, 139
  %v92 = vld [vmem:[%s91] sm:$0x10]
  %vm93 = vcmask 1044484
  %v94 = vsel %vm93, %v92, %v90
  %s95 = scalar_lea.vmem %s0, 170
  %v96 = vld [vmem:[%s95] sm:$0x20]
  %vm97 = vcmask 1045509
  %v98 = vsel %vm97, %v96, %v94
  %s99 = scalar_lea.vmem %s0, 201
  %v100 = vld [vmem:[%s99] sm:$0x40]
  %vm101 = vcmask 1046534
  %v102 = vsel %vm101, %v100, %v98
  %s103 = scalar_lea.vmem %s0, 232
  %v104 = vld [vmem:[%s103] sm:$0x80]
  %vm105 = vcmask 1047559
  %v106 = vsel %vm105, %v104, %v102
  %107 = vrot.lane.b32.xlu0 %v106, 112
  %v108 = vpop.permute.xlu0 %107
  %vm109 = vcmask 1048448
  %s110 = scalar_lea.vmem %s1, 8
  %111 = vst.msk [vmem:[%s110] sm:$0xff] %vm109, %v108
  %s112 = scalar_lea.vmem %s0, 23
  %v113 = vld [vmem:[%s112] sm:$0x1]
  %s114 = scalar_lea.vmem %s0, 54
  %v115 = vld [vmem:[%s114] sm:$0x2]
  %vm116 = vcmask 1041409
  %v117 = vsel %vm116, %v115, %v113
  %s118 = scalar_lea.vmem %s0, 85
  %v119 = vld [vmem:[%s118] sm:$0x4]
  %vm120 = vcmask 1042434
  %v121 = vsel %vm120, %v119, %v117
  %s122 = scalar_lea.vmem %s0, 116
  %v123 = vld [vmem:[%s122] sm:$0x8]
  %vm124 = vcmask 1043459
  %v125 = vsel %vm124, %v123, %v121
  %s126 = scalar_lea.vmem %s0, 147
  %v127 = vld [vmem:[%s126] sm:$0x10]
  %vm128 = vcmask 1044484
  %v129 = vsel %vm128, %v127, %v125
  %s130 = scalar_lea.vmem %s0, 178
  %v131 = vld [vmem:[%s130] sm:$0x20]
  %vm132 = vcmask 1045509
  %v133 = vsel %vm132, %v131, %v129
  %s134 = scalar_lea.vmem %s0, 209
  %v135 = vld [vmem:[%s134] sm:$0x40]
  %vm136 = vcmask 1046534
  %v137 = vsel %vm136, %v135, %v133
  %s138 = scalar_lea.vmem %s0, 240
  %v139 = vld [vmem:[%s138] sm:$0x80]
  %vm140 = vcmask 1047559
  %v141 = vsel %vm140, %v139, %v137
  %142 = vrot.lane.b32.xlu0 %v141, 112
  %v143 = vpop.permute.xlu0 %142
  %vm144 = vcmask 1048448
  %s145 = scalar_lea.vmem %s1, 16
  %146 = vst.msk [vmem:[%s145] sm:$0xff] %vm144, %v143
  %s147 = scalar_lea.vmem %s0, 31
  %v148 = vld [vmem:[%s147] sm:$0x1]
  %s149 = scalar_lea.vmem %s0, 62
  %v150 = vld [vmem:[%s149] sm:$0x2]
  %vm151 = vcmask 1041409
  %v152 = vsel %vm151, %v150, %v148
  %s153 = scalar_lea.vmem %s0, 93
  %v154 = vld [vmem:[%s153] sm:$0x4]
  %vm155 = vcmask 1042434
  %v156 = vsel %vm155, %v154, %v152
  %s157 = scalar_lea.vmem %s0, 124
  %v158 = vld [vmem:[%s157] sm:$0x8]
  %vm159 = vcmask 1043459
  %v160 = vsel %vm159, %v158, %v156
  %s161 = scalar_lea.vmem %s0, 155
  %v162 = vld [vmem:[%s161] sm:$0x10]
  %vm163 = vcmask 1044484
  %v164 = vsel %vm163, %v162, %v160
  %s165 = scalar_lea.vmem %s0, 186
  %v166 = vld [vmem:[%s165] sm:$0x20]
  %vm167 = vcmask 1045509
  %v168 = vsel %vm167, %v166, %v164
  %s169 = scalar_lea.vmem %s0, 217
  %v170 = vld [vmem:[%s169] sm:$0x40]
  %vm171 = vcmask 1046534
  %v172 = vsel %vm171, %v170, %v168
  %s173 = scalar_lea.vmem %s0, 248
  %v174 = vld [vmem:[%s173] sm:$0x80]
  %vm175 = vcmask 1047559
  %v176 = vsel %vm175, %v174, %v172
  %177 = vrot.lane.b32.xlu0 %v176, 112
  %v178 = vpop.permute.xlu0 %177
  %vm179 = vcmask 1048448
  %s180 = scalar_lea.vmem %s1, 24
  %181 = vst.msk [vmem:[%s180] sm:$0xff] %vm179, %v178
  %s182 = scalar_lea.vmem %s0, 6
  %v183 = vld [vmem:[%s182] sm:$0x1]
  %s184 = scalar_lea.vmem %s0, 37
  %v185 = vld [vmem:[%s184] sm:$0x2]
  %vm186 = vcmask 1041409
  %v187 = vsel %vm186, %v185, %v183
  %s188 = scalar_lea.vmem %s0, 68
  %v189 = vld [vmem:[%s188] sm:$0x4]
  %vm190 = vcmask 1042434
  %v191 = vsel %vm190, %v189, %v187
  %s192 = scalar_lea.vmem %s0, 99
  %v193 = vld [vmem:[%s192] sm:$0x8]
  %vm194 = vcmask 1043459
  %v195 = vsel %vm194, %v193, %v191
  %s196 = scalar_lea.vmem %s0, 130
  %v197 = vld [vmem:[%s196] sm:$0x10]
  %vm198 = vcmask 1044484
  %v199 = vsel %vm198, %v197, %v195
  %s200 = scalar_lea.vmem %s0, 161
  %v201 = vld [vmem:[%s200] sm:$0x20]
  %vm202 = vcmask 1045509
  %v203 = vsel %vm202, %v201, %v199
  %s204 = scalar_lea.vmem %s0, 192
  %v205 = vld [vmem:[%s204] sm:$0x40]
  %vm206 = vcmask 1046534
  %v207 = vsel %vm206, %v205, %v203
  %s208 = scalar_lea.vmem %s0, 223
  %v209 = vld [vmem:[%s208] sm:$0x80]
  %vm210 = vcmask 1047559
  %v211 = vsel %vm210, %v209, %v207
  %212 = vrot.lane.b32.xlu0 %v211, 96
  %v213 = vpop.permute.xlu0 %212
  %vm214 = vcmask 917248
  %215 = vst.msk [vmem:[%s1] sm:$0xff] %vm214, %v213
  %s216 = scalar_lea.vmem %s0, 14
  %v217 = vld [vmem:[%s216] sm:$0x1]
  %s218 = scalar_lea.vmem %s0, 45
  %v219 = vld [vmem:[%s218] sm:$0x2]
  %vm220 = vcmask 1041409
  %v221 = vsel %vm220, %v219, %v217
  %s222 = scalar_lea.vmem %s0, 76
  %v223 = vld [vmem:[%s222] sm:$0x4]
  %vm224 = vcmask 1042434
  %v225 = vsel %vm224, %v223, %v221
  %s226 = scalar_lea.vmem %s0, 107
  %v227 = vld [vmem:[%s226] sm:$0x8]
  %vm228 = vcmask 1043459
  %v229 = vsel %vm228, %v227, %v225
  %s230 = scalar_lea.vmem %s0, 138
  %v231 = vld [vmem:[%s230] sm:$0x10]
  %vm232 = vcmask 1044484
  %v233 = vsel %vm232, %v231, %v229
  %s234 = scalar_lea.vmem %s0, 169
  %v235 = vld [vmem:[%s234] sm:$0x20]
  %vm236 = vcmask 1045509
  %v237 = vsel %vm236, %v235, %v233
  %s238 = scalar_lea.vmem %s0, 200
  %v239 = vld [vmem:[%s238] sm:$0x40]
  %vm240 = vcmask 1046534
  %v241 = vsel %vm240, %v239, %v237
  %s242 = scalar_lea.vmem %s0, 231
  %v243 = vld [vmem:[%s242] sm:$0x80]
  %vm244 = vcmask 1047559
  %v245 = vsel %vm244, %v243, %v241
  %246 = vrot.lane.b32.xlu0 %v245, 96
  %v247 = vpop.permute.xlu0 %246
  %vm248 = vcmask 917248
  %s249 = scalar_lea.vmem %s1, 8
  %250 = vst.msk [vmem:[%s249] sm:$0xff] %vm248, %v247
  %s251 = scalar_lea.vmem %s0, 22
  %v252 = vld [vmem:[%s251] sm:$0x1]
  %s253 = scalar_lea.vmem %s0, 53
  %v254 = vld [vmem:[%s253] sm:$0x2]
  %vm255 = vcmask 1041409
  %v256 = vsel %vm255, %v254, %v252
  %s257 = scalar_lea.vmem %s0, 84
  %v258 = vld [vmem:[%s257] sm:$0x4]
  %vm259 = vcmask 1042434
  %v260 = vsel %vm259, %v258, %v256
  %s261 = scalar_lea.vmem %s0, 115
  %v262 = vld [vmem:[%s261] sm:$0x8]
  %vm263 = vcmask 1043459
  %v264 = vsel %vm263, %v262, %v260
  %s265 = scalar_lea.vmem %s0, 146
  %v266 = vld [vmem:[%s265] sm:$0x10]
  %vm267 = vcmask 1044484
  %v268 = vsel %vm267, %v266, %v264
  %s269 = scalar_lea.vmem %s0, 177
  %v270 = vld [vmem:[%s269] sm:$0x20]
  %vm271 = vcmask 1045509
  %v272 = vsel %vm271, %v270, %v268
  %s273 = scalar_lea.vmem %s0, 208
  %v274 = vld [vmem:[%s273] sm:$0x40]
  %vm275 = vcmask 1046534
  %v276 = vsel %vm275, %v274, %v272
  %s277 = scalar_lea.vmem %s0, 239
  %v278 = vld [vmem:[%s277] sm:$0x80]
  %vm279 = vcmask 1047559
  %v280 = vsel %vm279, %v278, %v276
  %281 = vrot.lane.b32.xlu0 %v280, 96
  %v282 = vpop.permute.xlu0 %281
  %vm283 = vcmask 917248
  %s284 = scalar_lea.vmem %s1, 16
  %285 = vst.msk [vmem:[%s284] sm:$0xff] %vm283, %v282
  %s286 = scalar_lea.vmem %s0, 30
  %v287 = vld [vmem:[%s286] sm:$0x1]
  %s288 = scalar_lea.vmem %s0, 61
  %v289 = vld [vmem:[%s288] sm:$0x2]
  %vm290 = vcmask 1041409
  %v291 = vsel %vm290, %v289, %v287
  %s292 = scalar_lea.vmem %s0, 92
  %v293 = vld [vmem:[%s292] sm:$0x4]
  %vm294 = vcmask 1042434
  %v295 = vsel %vm294, %v293, %v291
  %s296 = scalar_lea.vmem %s0, 123
  %v297 = vld [vmem:[%s296] sm:$0x8]
  %vm298 = vcmask 1043459
  %v299 = vsel %vm298, %v297, %v295
  %s300 = scalar_lea.vmem %s0, 154
  %v301 = vld [vmem:[%s300] sm:$0x10]
  %vm302 = vcmask 1044484
  %v303 = vsel %vm302, %v301, %v299
  %s304 = scalar_lea.vmem %s0, 185
  %v305 = vld [vmem:[%s304] sm:$0x20]
  %vm306 = vcmask 1045509
  %v307 = vsel %vm306, %v305, %v303
  %s308 = scalar_lea.vmem %s0, 216
  %v309 = vld [vmem:[%s308] sm:$0x40]
  %vm310 = vcmask 1046534
  %v311 = vsel %vm310, %v309, %v307
  %s312 = scalar_lea.vmem %s0, 247
  %v313 = vld [vmem:[%s312] sm:$0x80]
  %vm314 = vcmask 1047559
  %v315 = vsel %vm314, %v313, %v311
  %316 = vrot.lane.b32.xlu0 %v315, 96
  %v317 = vpop.permute.xlu0 %316
  %vm318 = vcmask 917248
  %s319 = scalar_lea.vmem %s1, 24
  %320 = vst.msk [vmem:[%s319] sm:$0xff] %vm318, %v317
  %s321 = scalar_lea.vmem %s0, 5
  %v322 = vld [vmem:[%s321] sm:$0x1]
  %s323 = scalar_lea.vmem %s0, 36
  %v324 = vld [vmem:[%s323] sm:$0x2]
  %vm325 = vcmask 1041409
  %v326 = vsel %vm325, %v324, %v322
  %s327 = scalar_lea.vmem %s0, 67
  %v328 = vld [vmem:[%s327] sm:$0x4]
  %vm329 = vcmask 1042434
  %v330 = vsel %vm329, %v328, %v326
  %s331 = scalar_lea.vmem %s0, 98
  %v332 = vld [vmem:[%s331] sm:$0x8]
  %vm333 = vcmask 1043459
  %v334 = vsel %vm333, %v332, %v330
  %s335 = scalar_lea.vmem %s0, 129
  %v336 = vld [vmem:[%s335] sm:$0x10]
  %vm337 = vcmask 1044484
  %v338 = vsel %vm337, %v336, %v334
  %s339 = scalar_lea.vmem %s0, 160
  %v340 = vld [vmem:[%s339] sm:$0x20]
  %vm341 = vcmask 1045509
  %v342 = vsel %vm341, %v340, %v338
  %s343 = scalar_lea.vmem %s0, 191
  %v344 = vld [vmem:[%s343] sm:$0x40]
  %vm345 = vcmask 1046534
  %v346 = vsel %vm345, %v344, %v342
  %s347 = scalar_lea.vmem %s0, 222
  %v348 = vld [vmem:[%s347] sm:$0x80]
  %vm349 = vcmask 1047559
  %v350 = vsel %vm349, %v348, %v346
  %351 = vrot.lane.b32.xlu0 %v350, 80
  %v352 = vpop.permute.xlu0 %351
  %vm353 = vcmask 786048
  %354 = vst.msk [vmem:[%s1] sm:$0xff] %vm353, %v352
  %s355 = scalar_lea.vmem %s0, 13
  %v356 = vld [vmem:[%s355] sm:$0x1]
  %s357 = scalar_lea.vmem %s0, 44
  %v358 = vld [vmem:[%s357] sm:$0x2]
  %vm359 = vcmask 1041409
  %v360 = vsel %vm359, %v358, %v356
  %s361 = scalar_lea.vmem %s0, 75
  %v362 = vld [vmem:[%s361] sm:$0x4]
  %vm363 = vcmask 1042434
  %v364 = vsel %vm363, %v362, %v360
  %s365 = scalar_lea.vmem %s0, 106
  %v366 = vld [vmem:[%s365] sm:$0x8]
  %vm367 = vcmask 1043459
  %v368 = vsel %vm367, %v366, %v364
  %s369 = scalar_lea.vmem %s0, 137
  %v370 = vld [vmem:[%s369] sm:$0x10]
  %vm371 = vcmask 1044484
  %v372 = vsel %vm371, %v370, %v368
  %s373 = scalar_lea.vmem %s0, 168
  %v374 = vld [vmem:[%s373] sm:$0x20]
  %vm375 = vcmask 1045509
  %v376 = vsel %vm375, %v374, %v372
  %s377 = scalar_lea.vmem %s0, 199
  %v378 = vld [vmem:[%s377] sm:$0x40]
  %vm379 = vcmask 1046534
  %v380 = vsel %vm379, %v378, %v376
  %s381 = scalar_lea.vmem %s0, 230
  %v382 = vld [vmem:[%s381] sm:$0x80]
  %vm383 = vcmask 1047559
  %v384 = vsel %vm383, %v382, %v380
  %385 = vrot.lane.b32.xlu0 %v384, 80
  %v386 = vpop.permute.xlu0 %385
  %vm387 = vcmask 786048
  %s388 = scalar_lea.vmem %s1, 8
  %389 = vst.msk [vmem:[%s388] sm:$0xff] %vm387, %v386
  %s390 = scalar_lea.vmem %s0, 21
  %v391 = vld [vmem:[%s390] sm:$0x1]
  %s392 = scalar_lea.vmem %s0, 52
  %v393 = vld [vmem:[%s392] sm:$0x2]
  %vm394 = vcmask 1041409
  %v395 = vsel %vm394, %v393, %v391
  %s396 = scalar_lea.vmem %s0, 83
  %v397 = vld [vmem:[%s396] sm:$0x4]
  %vm398 = vcmask 1042434
  %v399 = vsel %vm398, %v397, %v395
  %s400 = scalar_lea.vmem %s0, 114
  %v401 = vld [vmem:[%s400] sm:$0x8]
  %vm402 = vcmask 1043459
  %v403 = vsel %vm402, %v401, %v399
  %s404 = scalar_lea.vmem %s0, 145
  %v405 = vld [vmem:[%s404] sm:$0x10]
  %vm406 = vcmask 1044484
  %v407 = vsel %vm406, %v405, %v403
  %s408 = scalar_lea.vmem %s0, 176
  %v409 = vld [vmem:[%s408] sm:$0x20]
  %vm410 = vcmask 1045509
  %v411 = vsel %vm410, %v409, %v407
  %s412 = scalar_lea.vmem %s0, 207
  %v413 = vld [vmem:[%s412] sm:$0x40]
  %vm414 = vcmask 1046534
  %v415 = vsel %vm414, %v413, %v411
  %s416 = scalar_lea.vmem %s0, 238
  %v417 = vld [vmem:[%s416] sm:$0x80]
  %vm418 = vcmask 1047559
  %v419 = vsel %vm418, %v417, %v415
  %420 = vrot.lane.b32.xlu0 %v419, 80
  %v421 = vpop.permute.xlu0 %420
  %vm422 = vcmask 786048
  %s423 = scalar_lea.vmem %s1, 16
  %424 = vst.msk [vmem:[%s423] sm:$0xff] %vm422, %v421
  %s425 = scalar_lea.vmem %s0, 29
  %v426 = vld [vmem:[%s425] sm:$0x1]
  %s427 = scalar_lea.vmem %s0, 60
  %v428 = vld [vmem:[%s427] sm:$0x2]
  %vm429 = vcmask 1041409
  %v430 = vsel %vm429, %v428, %v426
  %s431 = scalar_lea.vmem %s0, 91
  %v432 = vld [vmem:[%s431] sm:$0x4]
  %vm433 = vcmask 1042434
  %v434 = vsel %vm433, %v432, %v430
  %s435 = scalar_lea.vmem %s0, 122
  %v436 = vld [vmem:[%s435] sm:$0x8]
  %vm437 = vcmask 1043459
  %v438 = vsel %vm437, %v436, %v434
  %s439 = scalar_lea.vmem %s0, 153
  %v440 = vld [vmem:[%s439] sm:$0x10]
  %vm441 = vcmask 1044484
  %v442 = vsel %vm441, %v440, %v438
  %s443 = scalar_lea.vmem %s0, 184
  %v444 = vld [vmem:[%s443] sm:$0x20]
  %vm445 = vcmask 1045509
  %v446 = vsel %vm445, %v444, %v442
  %s447 = scalar_lea.vmem %s0, 215
  %v448 = vld [vmem:[%s447] sm:$0x40]
  %vm449 = vcmask 1046534
  %v450 = vsel %vm449, %v448, %v446
  %s451 = scalar_lea.vmem %s0, 246
  %v452 = vld [vmem:[%s451] sm:$0x80]
  %vm453 = vcmask 1047559
  %v454 = vsel %vm453, %v452, %v450
  %455 = vrot.lane.b32.xlu0 %v454, 80
  %v456 = vpop.permute.xlu0 %455
  %vm457 = vcmask 786048
  %s458 = scalar_lea.vmem %s1, 24
  %459 = vst.msk [vmem:[%s458] sm:$0xff] %vm457, %v456
  %s460 = scalar_lea.vmem %s0, 4
  %v461 = vld [vmem:[%s460] sm:$0x1]
  %s462 = scalar_lea.vmem %s0, 35
  %v463 = vld [vmem:[%s462] sm:$0x2]
  %vm464 = vcmask 1041409
  %v465 = vsel %vm464, %v463, %v461
  %s466 = scalar_lea.vmem %s0, 66
  %v467 = vld [vmem:[%s466] sm:$0x4]
  %vm468 = vcmask 1042434
  %v469 = vsel %vm468, %v467, %v465
  %s470 = scalar_lea.vmem %s0, 97
  %v471 = vld [vmem:[%s470] sm:$0x8]
  %vm472 = vcmask 1043459
  %v473 = vsel %vm472, %v471, %v469
  %s474 = scalar_lea.vmem %s0, 128
  %v475 = vld [vmem:[%s474] sm:$0x10]
  %vm476 = vcmask 1044484
  %v477 = vsel %vm476, %v475, %v473
  %s478 = scalar_lea.vmem %s0, 159
  %v479 = vld [vmem:[%s478] sm:$0x20]
  %vm480 = vcmask 1045509
  %v481 = vsel %vm480, %v479, %v477
  %s482 = scalar_lea.vmem %s0, 190
  %v483 = vld [vmem:[%s482] sm:$0x40]
  %vm484 = vcmask 1046534
  %v485 = vsel %vm484, %v483, %v481
  %s486 = scalar_lea.vmem %s0, 221
  %v487 = vld [vmem:[%s486] sm:$0x80]
  %vm488 = vcmask 1047559
  %v489 = vsel %vm488, %v487, %v485
  %490 = vrot.lane.b32.xlu0 %v489, 64
  %v491 = vpop.permute.xlu0 %490
  %vm492 = vcmask 654848
  %493 = vst.msk [vmem:[%s1] sm:$0xff] %vm492, %v491
  %s494 = scalar_lea.vmem %s0, 12
  %v495 = vld [vmem:[%s494] sm:$0x1]
  %s496 = scalar_lea.vmem %s0, 43
  %v497 = vld [vmem:[%s496] sm:$0x2]
  %vm498 = vcmask 1041409
  %v499 = vsel %vm498, %v497, %v495
  %s500 = scalar_lea.vmem %s0, 74
  %v501 = vld [vmem:[%s500] sm:$0x4]
  %vm502 = vcmask 1042434
  %v503 = vsel %vm502, %v501, %v499
  %s504 = scalar_lea.vmem %s0, 105
  %v505 = vld [vmem:[%s504] sm:$0x8]
  %vm506 = vcmask 1043459
  %v507 = vsel %vm506, %v505, %v503
  %s508 = scalar_lea.vmem %s0, 136
  %v509 = vld [vmem:[%s508] sm:$0x10]
  %vm510 = vcmask 1044484
  %v511 = vsel %vm510, %v509, %v507
  %s512 = scalar_lea.vmem %s0, 167
  %v513 = vld [vmem:[%s512] sm:$0x20]
  %vm514 = vcmask 1045509
  %v515 = vsel %vm514, %v513, %v511
  %s516 = scalar_lea.vmem %s0, 198
  %v517 = vld [vmem:[%s516] sm:$0x40]
  %vm518 = vcmask 1046534
  %v519 = vsel %vm518, %v517, %v515
  %s520 = scalar_lea.vmem %s0, 229
  %v521 = vld [vmem:[%s520] sm:$0x80]
  %vm522 = vcmask 1047559
  %v523 = vsel %vm522, %v521, %v519
  %524 = vrot.lane.b32.xlu0 %v523, 64
  %v525 = vpop.permute.xlu0 %524
  %vm526 = vcmask 654848
  %s527 = scalar_lea.vmem %s1, 8
  %528 = vst.msk [vmem:[%s527] sm:$0xff] %vm526, %v525
  %s529 = scalar_lea.vmem %s0, 20
  %v530 = vld [vmem:[%s529] sm:$0x1]
  %s531 = scalar_lea.vmem %s0, 51
  %v532 = vld [vmem:[%s531] sm:$0x2]
  %vm533 = vcmask 1041409
  %v534 = vsel %vm533, %v532, %v530
  %s535 = scalar_lea.vmem %s0, 82
  %v536 = vld [vmem:[%s535] sm:$0x4]
  %vm537 = vcmask 1042434
  %v538 = vsel %vm537, %v536, %v534
  %s539 = scalar_lea.vmem %s0, 113
  %v540 = vld [vmem:[%s539] sm:$0x8]
  %vm541 = vcmask 1043459
  %v542 = vsel %vm541, %v540, %v538
  %s543 = scalar_lea.vmem %s0, 144
  %v544 = vld [vmem:[%s543] sm:$0x10]
  %vm545 = vcmask 1044484
  %v546 = vsel %vm545, %v544, %v542
  %s547 = scalar_lea.vmem %s0, 175
  %v548 = vld [vmem:[%s547] sm:$0x20]
  %vm549 = vcmask 1045509
  %v550 = vsel %vm549, %v548, %v546
  %s551 = scalar_lea.vmem %s0, 206
  %v552 = vld [vmem:[%s551] sm:$0x40]
  %vm553 = vcmask 1046534
  %v554 = vsel %vm553, %v552, %v550
  %s555 = scalar_lea.vmem %s0, 237
  %v556 = vld [vmem:[%s555] sm:$0x80]
  %vm557 = vcmask 1047559
  %v558 = vsel %vm557, %v556, %v554
  %559 = vrot.lane.b32.xlu0 %v558, 64
  %v560 = vpop.permute.xlu0 %559
  %vm561 = vcmask 654848
  %s562 = scalar_lea.vmem %s1, 16
  %563 = vst.msk [vmem:[%s562] sm:$0xff] %vm561, %v560
  %s564 = scalar_lea.vmem %s0, 28
  %v565 = vld [vmem:[%s564] sm:$0x1]
  %s566 = scalar_lea.vmem %s0, 59
  %v567 = vld [vmem:[%s566] sm:$0x2]
  %vm568 = vcmask 1041409
  %v569 = vsel %vm568, %v567, %v565
  %s570 = scalar_lea.vmem %s0, 90
  %v571 = vld [vmem:[%s570] sm:$0x4]
  %vm572 = vcmask 1042434
  %v573 = vsel %vm572, %v571, %v569
  %s574 = scalar_lea.vmem %s0, 121
  %v575 = vld [vmem:[%s574] sm:$0x8]
  %vm576 = vcmask 1043459
  %v577 = vsel %vm576, %v575, %v573
  %s578 = scalar_lea.vmem %s0, 152
  %v579 = vld [vmem:[%s578] sm:$0x10]
  %vm580 = vcmask 1044484
  %v581 = vsel %vm580, %v579, %v577
  %s582 = scalar_lea.vmem %s0, 183
  %v583 = vld [vmem:[%s582] sm:$0x20]
  %vm584 = vcmask 1045509
  %v585 = vsel %vm584, %v583, %v581
  %s586 = scalar_lea.vmem %s0, 214
  %v587 = vld [vmem:[%s586] sm:$0x40]
  %vm588 = vcmask 1046534
  %v589 = vsel %vm588, %v587, %v585
  %s590 = scalar_lea.vmem %s0, 245
  %v591 = vld [vmem:[%s590] sm:$0x80]
  %vm592 = vcmask 1047559
  %v593 = vsel %vm592, %v591, %v589
  %594 = vrot.lane.b32.xlu0 %v593, 64
  %v595 = vpop.permute.xlu0 %594
  %vm596 = vcmask 654848
  %s597 = scalar_lea.vmem %s1, 24
  %598 = vst.msk [vmem:[%s597] sm:$0xff] %vm596, %v595
  %s599 = scalar_lea.vmem %s0, 3
  %v600 = vld [vmem:[%s599] sm:$0x1]
  %s601 = scalar_lea.vmem %s0, 34
  %v602 = vld [vmem:[%s601] sm:$0x2]
  %vm603 = vcmask 1041409
  %v604 = vsel %vm603, %v602, %v600
  %s605 = scalar_lea.vmem %s0, 65
  %v606 = vld [vmem:[%s605] sm:$0x4]
  %vm607 = vcmask 1042434
  %v608 = vsel %vm607, %v606, %v604
  %s609 = scalar_lea.vmem %s0, 96
  %v610 = vld [vmem:[%s609] sm:$0x8]
  %vm611 = vcmask 1043459
  %v612 = vsel %vm611, %v610, %v608
  %s613 = scalar_lea.vmem %s0, 127
  %v614 = vld [vmem:[%s613] sm:$0x10]
  %vm615 = vcmask 1044484
  %v616 = vsel %vm615, %v614, %v612
  %s617 = scalar_lea.vmem %s0, 158
  %v618 = vld [vmem:[%s617] sm:$0x20]
  %vm619 = vcmask 1045509
  %v620 = vsel %vm619, %v618, %v616
  %s621 = scalar_lea.vmem %s0, 189
  %v622 = vld [vmem:[%s621] sm:$0x40]
  %vm623 = vcmask 1046534
  %v624 = vsel %vm623, %v622, %v620
  %s625 = scalar_lea.vmem %s0, 220
  %v626 = vld [vmem:[%s625] sm:$0x80]
  %vm627 = vcmask 1047559
  %v628 = vsel %vm627, %v626, %v624
  %629 = vrot.lane.b32.xlu0 %v628, 48
  %v630 = vpop.permute.xlu0 %629
  %vm631 = vcmask 523648
  %632 = vst.msk [vmem:[%s1] sm:$0xff] %vm631, %v630
  %s633 = scalar_lea.vmem %s0, 11
  %v634 = vld [vmem:[%s633] sm:$0x1]
  %s635 = scalar_lea.vmem %s0, 42
  %v636 = vld [vmem:[%s635] sm:$0x2]
  %vm637 = vcmask 1041409
  %v638 = vsel %vm637, %v636, %v634
  %s639 = scalar_lea.vmem %s0, 73
  %v640 = vld [vmem:[%s639] sm:$0x4]
  %vm641 = vcmask 1042434
  %v642 = vsel %vm641, %v640, %v638
  %s643 = scalar_lea.vmem %s0, 104
  %v644 = vld [vmem:[%s643] sm:$0x8]
  %vm645 = vcmask 1043459
  %v646 = vsel %vm645, %v644, %v642
  %s647 = scalar_lea.vmem %s0, 135
  %v648 = vld [vmem:[%s647] sm:$0x10]
  %vm649 = vcmask 1044484
  %v650 = vsel %vm649, %v648, %v646
  %s651 = scalar_lea.vmem %s0, 166
  %v652 = vld [vmem:[%s651] sm:$0x20]
  %vm653 = vcmask 1045509
  %v654 = vsel %vm653, %v652, %v650
  %s655 = scalar_lea.vmem %s0, 197
  %v656 = vld [vmem:[%s655] sm:$0x40]
  %vm657 = vcmask 1046534
  %v658 = vsel %vm657, %v656, %v654
  %s659 = scalar_lea.vmem %s0, 228
  %v660 = vld [vmem:[%s659] sm:$0x80]
  %vm661 = vcmask 1047559
  %v662 = vsel %vm661, %v660, %v658
  %663 = vrot.lane.b32.xlu0 %v662, 48
  %v664 = vpop.permute.xlu0 %663
  %vm665 = vcmask 523648
  %s666 = scalar_lea.vmem %s1, 8
  %667 = vst.msk [vmem:[%s666] sm:$0xff] %vm665, %v664
  %s668 = scalar_lea.vmem %s0, 19
  %v669 = vld [vmem:[%s668] sm:$0x1]
  %s670 = scalar_lea.vmem %s0, 50
  %v671 = vld [vmem:[%s670] sm:$0x2]
  %vm672 = vcmask 1041409
  %v673 = vsel %vm672, %v671, %v669
  %s674 = scalar_lea.vmem %s0, 81
  %v675 = vld [vmem:[%s674] sm:$0x4]
  %vm676 = vcmask 1042434
  %v677 = vsel %vm676, %v675, %v673
  %s678 = scalar_lea.vmem %s0, 112
  %v679 = vld [vmem:[%s678] sm:$0x8]
  %vm680 = vcmask 1043459
  %v681 = vsel %vm680, %v679, %v677
  %s682 = scalar_lea.vmem %s0, 143
  %v683 = vld [vmem:[%s682] sm:$0x10]
  %vm684 = vcmask 1044484
  %v685 = vsel %vm684, %v683, %v681
  %s686 = scalar_lea.vmem %s0, 174
  %v687 = vld [vmem:[%s686] sm:$0x20]
  %vm688 = vcmask 1045509
  %v689 = vsel %vm688, %v687, %v685
  %s690 = scalar_lea.vmem %s0, 205
  %v691 = vld [vmem:[%s690] sm:$0x40]
  %vm692 = vcmask 1046534
  %v693 = vsel %vm692, %v691, %v689
  %s694 = scalar_lea.vmem %s0, 236
  %v695 = vld [vmem:[%s694] sm:$0x80]
  %vm696 = vcmask 1047559
  %v697 = vsel %vm696, %v695, %v693
  %698 = vrot.lane.b32.xlu0 %v697, 48
  %v699 = vpop.permute.xlu0 %698
  %vm700 = vcmask 523648
  %s701 = scalar_lea.vmem %s1, 16
  %702 = vst.msk [vmem:[%s701] sm:$0xff] %vm700, %v699
  %s703 = scalar_lea.vmem %s0, 27
  %v704 = vld [vmem:[%s703] sm:$0x1]
  %s705 = scalar_lea.vmem %s0, 58
  %v706 = vld [vmem:[%s705] sm:$0x2]
  %vm707 = vcmask 1041409
  %v708 = vsel %vm707, %v706, %v704
  %s709 = scalar_lea.vmem %s0, 89
  %v710 = vld [vmem:[%s709] sm:$0x4]
  %vm711 = vcmask 1042434
  %v712 = vsel %vm711, %v710, %v708
  %s713 = scalar_lea.vmem %s0, 120
  %v714 = vld [vmem:[%s713] sm:$0x8]
  %vm715 = vcmask 1043459
  %v716 = vsel %vm715, %v714, %v712
  %s717 = scalar_lea.vmem %s0, 151
  %v718 = vld [vmem:[%s717] sm:$0x10]
  %vm719 = vcmask 1044484
  %v720 = vsel %vm719, %v718, %v716
  %s721 = scalar_lea.vmem %s0, 182
  %v722 = vld [vmem:[%s721] sm:$0x20]
  %vm723 = vcmask 1045509
  %v724 = vsel %vm723, %v722, %v720
  %s725 = scalar_lea.vmem %s0, 213
  %v726 = vld [vmem:[%s725] sm:$0x40]
  %vm727 = vcmask 1046534
  %v728 = vsel %vm727, %v726, %v724
  %s729 = scalar_lea.vmem %s0, 244
  %v730 = vld [vmem:[%s729] sm:$0x80]
  %vm731 = vcmask 1047559
  %v732 = vsel %vm731, %v730, %v728
  %733 = vrot.lane.b32.xlu0 %v732, 48
  %v734 = vpop.permute.xlu0 %733
  %vm735 = vcmask 523648
  %s736 = scalar_lea.vmem %s1, 24
  %737 = vst.msk [vmem:[%s736] sm:$0xff] %vm735, %v734
  %s738 = scalar_lea.vmem %s0, 2
  %v739 = vld [vmem:[%s738] sm:$0x1]
  %s740 = scalar_lea.vmem %s0, 33
  %v741 = vld [vmem:[%s740] sm:$0x2]
  %vm742 = vcmask 1041409
  %v743 = vsel %vm742, %v741, %v739
  %s744 = scalar_lea.vmem %s0, 64
  %v745 = vld [vmem:[%s744] sm:$0x4]
  %vm746 = vcmask 1042434
  %v747 = vsel %vm746, %v745, %v743
  %s748 = scalar_lea.vmem %s0, 95
  %v749 = vld [vmem:[%s748] sm:$0x8]
  %vm750 = vcmask 1043459
  %v751 = vsel %vm750, %v749, %v747
  %s752 = scalar_lea.vmem %s0, 126
  %v753 = vld [vmem:[%s752] sm:$0x10]
  %vm754 = vcmask 1044484
  %v755 = vsel %vm754, %v753, %v751
  %s756 = scalar_lea.vmem %s0, 157
  %v757 = vld [vmem:[%s756] sm:$0x20]
  %vm758 = vcmask 1045509
  %v759 = vsel %vm758, %v757, %v755
  %s760 = scalar_lea.vmem %s0, 188
  %v761 = vld [vmem:[%s760] sm:$0x40]
  %vm762 = vcmask 1046534
  %v763 = vsel %vm762, %v761, %v759
  %s764 = scalar_lea.vmem %s0, 219
  %v765 = vld [vmem:[%s764] sm:$0x80]
  %vm766 = vcmask 1047559
  %v767 = vsel %vm766, %v765, %v763
  %768 = vrot.lane.b32.xlu0 %v767, 32
  %v769 = vpop.permute.xlu0 %768
  %vm770 = vcmask 392448
  %771 = vst.msk [vmem:[%s1] sm:$0xff] %vm770, %v769
  %s772 = scalar_lea.vmem %s0, 10
  %v773 = vld [vmem:[%s772] sm:$0x1]
  %s774 = scalar_lea.vmem %s0, 41
  %v775 = vld [vmem:[%s774] sm:$0x2]
  %vm776 = vcmask 1041409
  %v777 = vsel %vm776, %v775, %v773
  %s778 = scalar_lea.vmem %s0, 72
  %v779 = vld [vmem:[%s778] sm:$0x4]
  %vm780 = vcmask 1042434
  %v781 = vsel %vm780, %v779, %v777
  %s782 = scalar_lea.vmem %s0, 103
  %v783 = vld [vmem:[%s782] sm:$0x8]
  %vm784 = vcmask 1043459
  %v785 = vsel %vm784, %v783, %v781
  %s786 = scalar_lea.vmem %s0, 134
  %v787 = vld [vmem:[%s786] sm:$0x10]
  %vm788 = vcmask 1044484
  %v789 = vsel %vm788, %v787, %v785
  %s790 = scalar_lea.vmem %s0, 165
  %v791 = vld [vmem:[%s790] sm:$0x20]
  %vm792 = vcmask 1045509
  %v793 = vsel %vm792, %v791, %v789
  %s794 = scalar_lea.vmem %s0, 196
  %v795 = vld [vmem:[%s794] sm:$0x40]
  %vm796 = vcmask 1046534
  %v797 = vsel %vm796, %v795, %v793
  %s798 = scalar_lea.vmem %s0, 227
  %v799 = vld [vmem:[%s798] sm:$0x80]
  %vm800 = vcmask 1047559
  %v801 = vsel %vm800, %v799, %v797
  %802 = vrot.lane.b32.xlu0 %v801, 32
  %v803 = vpop.permute.xlu0 %802
  %vm804 = vcmask 392448
  %s805 = scalar_lea.vmem %s1, 8
  %806 = vst.msk [vmem:[%s805] sm:$0xff] %vm804, %v803
  %s807 = scalar_lea.vmem %s0, 18
  %v808 = vld [vmem:[%s807] sm:$0x1]
  %s809 = scalar_lea.vmem %s0, 49
  %v810 = vld [vmem:[%s809] sm:$0x2]
  %vm811 = vcmask 1041409
  %v812 = vsel %vm811, %v810, %v808
  %s813 = scalar_lea.vmem %s0, 80
  %v814 = vld [vmem:[%s813] sm:$0x4]
  %vm815 = vcmask 1042434
  %v816 = vsel %vm815, %v814, %v812
  %s817 = scalar_lea.vmem %s0, 111
  %v818 = vld [vmem:[%s817] sm:$0x8]
  %vm819 = vcmask 1043459
  %v820 = vsel %vm819, %v818, %v816
  %s821 = scalar_lea.vmem %s0, 142
  %v822 = vld [vmem:[%s821] sm:$0x10]
  %vm823 = vcmask 1044484
  %v824 = vsel %vm823, %v822, %v820
  %s825 = scalar_lea.vmem %s0, 173
  %v826 = vld [vmem:[%s825] sm:$0x20]
  %vm827 = vcmask 1045509
  %v828 = vsel %vm827, %v826, %v824
  %s829 = scalar_lea.vmem %s0, 204
  %v830 = vld [vmem:[%s829] sm:$0x40]
  %vm831 = vcmask 1046534
  %v832 = vsel %vm831, %v830, %v828
  %s833 = scalar_lea.vmem %s0, 235
  %v834 = vld [vmem:[%s833] sm:$0x80]
  %vm835 = vcmask 1047559
  %v836 = vsel %vm835, %v834, %v832
  %837 = vrot.lane.b32.xlu0 %v836, 32
  %v838 = vpop.permute.xlu0 %837
  %vm839 = vcmask 392448
  %s840 = scalar_lea.vmem %s1, 16
  %841 = vst.msk [vmem:[%s840] sm:$0xff] %vm839, %v838
  %s842 = scalar_lea.vmem %s0, 26
  %v843 = vld [vmem:[%s842] sm:$0x1]
  %s844 = scalar_lea.vmem %s0, 57
  %v845 = vld [vmem:[%s844] sm:$0x2]
  %vm846 = vcmask 1041409
  %v847 = vsel %vm846, %v845, %v843
  %s848 = scalar_lea.vmem %s0, 88
  %v849 = vld [vmem:[%s848] sm:$0x4]
  %vm850 = vcmask 1042434
  %v851 = vsel %vm850, %v849, %v847
  %s852 = scalar_lea.vmem %s0, 119
  %v853 = vld [vmem:[%s852] sm:$0x8]
  %vm854 = vcmask 1043459
  %v855 = vsel %vm854, %v853, %v851
  %s856 = scalar_lea.vmem %s0, 150
  %v857 = vld [vmem:[%s856] sm:$0x10]
  %vm858 = vcmask 1044484
  %v859 = vsel %vm858, %v857, %v855
  %s860 = scalar_lea.vmem %s0, 181
  %v861 = vld [vmem:[%s860] sm:$0x20]
  %vm862 = vcmask 1045509
  %v863 = vsel %vm862, %v861, %v859
  %s864 = scalar_lea.vmem %s0, 212
  %v865 = vld [vmem:[%s864] sm:$0x40]
  %vm866 = vcmask 1046534
  %v867 = vsel %vm866, %v865, %v863
  %s868 = scalar_lea.vmem %s0, 243
  %v869 = vld [vmem:[%s868] sm:$0x80]
  %vm870 = vcmask 1047559
  %v871 = vsel %vm870, %v869, %v867
  %872 = vrot.lane.b32.xlu0 %v871, 32
  %v873 = vpop.permute.xlu0 %872
  %vm874 = vcmask 392448
  %s875 = scalar_lea.vmem %s1, 24
  %876 = vst.msk [vmem:[%s875] sm:$0xff] %vm874, %v873
  %s877 = scalar_lea.vmem %s0, 1
  %v878 = vld [vmem:[%s877] sm:$0x1]
  %s879 = scalar_lea.vmem %s0, 32
  %v880 = vld [vmem:[%s879] sm:$0x2]
  %vm881 = vcmask 1041409
  %v882 = vsel %vm881, %v880, %v878
  %s883 = scalar_lea.vmem %s0, 63
  %v884 = vld [vmem:[%s883] sm:$0x4]
  %vm885 = vcmask 1042434
  %v886 = vsel %vm885, %v884, %v882
  %s887 = scalar_lea.vmem %s0, 94
  %v888 = vld [vmem:[%s887] sm:$0x8]
  %vm889 = vcmask 1043459
  %v890 = vsel %vm889, %v888, %v886
  %s891 = scalar_lea.vmem %s0, 125
  %v892 = vld [vmem:[%s891] sm:$0x10]
  %vm893 = vcmask 1044484
  %v894 = vsel %vm893, %v892, %v890
  %s895 = scalar_lea.vmem %s0, 156
  %v896 = vld [vmem:[%s895] sm:$0x20]
  %vm897 = vcmask 1045509
  %v898 = vsel %vm897, %v896, %v894
  %s899 = scalar_lea.vmem %s0, 187
  %v900 = vld [vmem:[%s899] sm:$0x40]
  %vm901 = vcmask 1046534
  %v902 = vsel %vm901, %v900, %v898
  %s903 = scalar_lea.vmem %s0, 218
  %v904 = vld [vmem:[%s903] sm:$0x80]
  %vm905 = vcmask 1047559
  %v906 = vsel %vm905, %v904, %v902
  %907 = vrot.lane.b32.xlu0 %v906, 16
  %v908 = vpop.permute.xlu0 %907
  %vm909 = vcmask 261248
  %910 = vst.msk [vmem:[%s1] sm:$0xff] %vm909, %v908
  %s911 = scalar_lea.vmem %s0, 9
  %v912 = vld [vmem:[%s911] sm:$0x1]
  %s913 = scalar_lea.vmem %s0, 40
  %v914 = vld [vmem:[%s913] sm:$0x2]
  %vm915 = vcmask 1041409
  %v916 = vsel %vm915, %v914, %v912
  %s917 = scalar_lea.vmem %s0, 71
  %v918 = vld [vmem:[%s917] sm:$0x4]
  %vm919 = vcmask 1042434
  %v920 = vsel %vm919, %v918, %v916
  %s921 = scalar_lea.vmem %s0, 102
  %v922 = vld [vmem:[%s921] sm:$0x8]
  %vm923 = vcmask 1043459
  %v924 = vsel %vm923, %v922, %v920
  %s925 = scalar_lea.vmem %s0, 133
  %v926 = vld [vmem:[%s925] sm:$0x10]
  %vm927 = vcmask 1044484
  %v928 = vsel %vm927, %v926, %v924
  %s929 = scalar_lea.vmem %s0, 164
  %v930 = vld [vmem:[%s929] sm:$0x20]
  %vm931 = vcmask 1045509
  %v932 = vsel %vm931, %v930, %v928
  %s933 = scalar_lea.vmem %s0, 195
  %v934 = vld [vmem:[%s933] sm:$0x40]
  %vm935 = vcmask 1046534
  %v936 = vsel %vm935, %v934, %v932
  %s937 = scalar_lea.vmem %s0, 226
  %v938 = vld [vmem:[%s937] sm:$0x80]
  %vm939 = vcmask 1047559
  %v940 = vsel %vm939, %v938, %v936
  %941 = vrot.lane.b32.xlu0 %v940, 16
  %v942 = vpop.permute.xlu0 %941
  %vm943 = vcmask 261248
  %s944 = scalar_lea.vmem %s1, 8
  %945 = vst.msk [vmem:[%s944] sm:$0xff] %vm943, %v942
  %s946 = scalar_lea.vmem %s0, 17
  %v947 = vld [vmem:[%s946] sm:$0x1]
  %s948 = scalar_lea.vmem %s0, 48
  %v949 = vld [vmem:[%s948] sm:$0x2]
  %vm950 = vcmask 1041409
  %v951 = vsel %vm950, %v949, %v947
  %s952 = scalar_lea.vmem %s0, 79
  %v953 = vld [vmem:[%s952] sm:$0x4]
  %vm954 = vcmask 1042434
  %v955 = vsel %vm954, %v953, %v951
  %s956 = scalar_lea.vmem %s0, 110
  %v957 = vld [vmem:[%s956] sm:$0x8]
  %vm958 = vcmask 1043459
  %v959 = vsel %vm958, %v957, %v955
  %s960 = scalar_lea.vmem %s0, 141
  %v961 = vld [vmem:[%s960] sm:$0x10]
  %vm962 = vcmask 1044484
  %v963 = vsel %vm962, %v961, %v959
  %s964 = scalar_lea.vmem %s0, 172
  %v965 = vld [vmem:[%s964] sm:$0x20]
  %vm966 = vcmask 1045509
  %v967 = vsel %vm966, %v965, %v963
  %s968 = scalar_lea.vmem %s0, 203
  %v969 = vld [vmem:[%s968] sm:$0x40]
  %vm970 = vcmask 1046534
  %v971 = vsel %vm970, %v969, %v967
  %s972 = scalar_lea.vmem %s0, 234
  %v973 = vld [vmem:[%s972] sm:$0x80]
  %vm974 = vcmask 1047559
  %v975 = vsel %vm974, %v973, %v971
  %976 = vrot.lane.b32.xlu0 %v975, 16
  %v977 = vpop.permute.xlu0 %976
  %vm978 = vcmask 261248
  %s979 = scalar_lea.vmem %s1, 16
  %980 = vst.msk [vmem:[%s979] sm:$0xff] %vm978, %v977
  %s981 = scalar_lea.vmem %s0, 25
  %v982 = vld [vmem:[%s981] sm:$0x1]
  %s983 = scalar_lea.vmem %s0, 56
  %v984 = vld [vmem:[%s983] sm:$0x2]
  %vm985 = vcmask 1041409
  %v986 = vsel %vm985, %v984, %v982
  %s987 = scalar_lea.vmem %s0, 87
  %v988 = vld [vmem:[%s987] sm:$0x4]
  %vm989 = vcmask 1042434
  %v990 = vsel %vm989, %v988, %v986
  %s991 = scalar_lea.vmem %s0, 118
  %v992 = vld [vmem:[%s991] sm:$0x8]
  %vm993 = vcmask 1043459
  %v994 = vsel %vm993, %v992, %v990
  %s995 = scalar_lea.vmem %s0, 149
  %v996 = vld [vmem:[%s995] sm:$0x10]
  %vm997 = vcmask 1044484
  %v998 = vsel %vm997, %v996, %v994
  %s999 = scalar_lea.vmem %s0, 180
  %v1000 = vld [vmem:[%s999] sm:$0x20]
  %vm1001 = vcmask 1045509
  %v1002 = vsel %vm1001, %v1000, %v998
  %s1003 = scalar_lea.vmem %s0, 211
  %v1004 = vld [vmem:[%s1003] sm:$0x40]
  %vm1005 = vcmask 1046534
  %v1006 = vsel %vm1005, %v1004, %v1002
  %s1007 = scalar_lea.vmem %s0, 242
  %v1008 = vld [vmem:[%s1007] sm:$0x80]
  %vm1009 = vcmask 1047559
  %v1010 = vsel %vm1009, %v1008, %v1006
  %1011 = vrot.lane.b32.xlu0 %v1010, 16
  %v1012 = vpop.permute.xlu0 %1011
  %vm1013 = vcmask 261248
  %s1014 = scalar_lea.vmem %s1, 24
  %1015 = vst.msk [vmem:[%s1014] sm:$0xff] %vm1013, %v1012

// kernel: rfb_forward.8
$region0: #{rfb_forward.8}
  #allocation0 [shape = 'u32[]', space=smem, size = 0x4, offset = 0x4, fixed_abs, tag = 'smem constant byte address 0x4 - core index']
  #allocation1 [shape = 'u32[144,128]{1,0:T(1,128)}', space=vmem, size = 0x12000, scoped, tag = 'internal scratch']
  %s0 = inlined_call_operand.vmem [shape: bf16[32,4], index: 0, kind: input, shape index: {}]
  %s1 = inlined_call_operand.vmem [shape: f32[32,1], index: 1, kind: input, shape index: {}]
  %s2 = inlined_call_operand.vmem [shape: bf16[4,512], index: 2, kind: input, shape index: {}]
  %s3 = inlined_call_operand.vmem [shape: f32[32,512], index: 3, kind: output, shape index: {}]
  %s4 = sld [smem:[#allocation0]]
  $region64: #{rfb_forward.8} parent=0
    _
  %s6 = ssub.s32 1, %s4
  %s7 = scalar_select 0, %s6, %s4
  $region1: #{rfb_forward.8} parent=0
    #allocation2 [shape = 'u8[65536]{0}', space=vmem, size = 0x10000, scoped, tag = 'output window, operand 0']
    loop: start=0, step=1, limit=4
    $region2: #{rfb_forward.8} parent=1 // loop_pre_header
      _
    $region3: #{rfb_forward.8} parent=1 // loop_header
      %s9 = sphi 0, %s13
      %p10 = scmp.ge.s32.totalorder %s9, 4
      %s17 = sphi 0, %s17
      %s19 = sphi 0, %s17
      %s20 = sphi 0, %s19
      %s34 = sphi 0, %s20
      %s38 = sphi 0, %s38
      %s40 = sphi 0, %s38
      %s41 = sphi 0, %s40
      %s55 = sphi 0, %s41
      %s61 = sphi 0, %s63
      %s64 = sphi 0, %s61
      %s65 = sphi 0, %s64
      %s81 = sphi 0, %s65
      %s87 = sphi 0, %s89
      %s90 = sphi 0, %s87
      %s91 = sphi 0, %s90
      %s107 = sphi 0, %s91
    $region4: #{rfb_forward.8} parent=1 // loop_header_branch
      %12 = sbr.rel (%p10) target = $region8
    $region5: #{rfb_forward.8} parent=1 // loop_body
      %s14 = ssub.s32 %s9, 1
      %s15 = ssub.s32 %s9, 2
      %s16 = sadd.s32 %s9, 1
      %s18 = sadd.s32 %s17, 1
      %p21 = scmp.eq.s32.totalorder %s9, 1
      %p22 = scmp.ne.s32.totalorder %s17, %s19
      %p23 = scmp.eq.s32.totalorder %s9, 0
      %p24 = por %p22, %p23
      %p25 = scmp.ne.s32.totalorder %s17, %s19
      %p26 = scmp.eq.s32.totalorder %s14, 1
      %p27 = por %p25, %p26
      %p28 = scmp.ne.s32.totalorder %s19, %s20
      %p29 = scmp.eq.s32.totalorder %s14, 0
      %p30 = por %p28, %p29
      %p31 = scmp.ne.s32.totalorder %s19, %s20
      %p32 = scmp.eq.s32.totalorder %s15, 1
      %p33 = por %p31, %p32
      %p35 = scmp.ne.s32.totalorder %s20, %s34
      %p36 = scmp.eq.s32.totalorder %s15, 0
      %p37 = por %p35, %p36
      %s39 = sadd.s32 %s38, 1
      %p42 = scmp.eq.s32.totalorder %s9, 1
      %p43 = scmp.ne.s32.totalorder %s38, %s40
      %p44 = scmp.eq.s32.totalorder %s9, 0
      %p45 = por %p43, %p44
      %p46 = scmp.ne.s32.totalorder %s38, %s40
      %p47 = scmp.eq.s32.totalorder %s14, 1
      %p48 = por %p46, %p47
      %p49 = scmp.ne.s32.totalorder %s40, %s41
      %p50 = scmp.eq.s32.totalorder %s14, 0
      %p51 = por %p49, %p50
      %p52 = scmp.ne.s32.totalorder %s40, %s41
      %p53 = scmp.eq.s32.totalorder %s15, 1
      %p54 = por %p52, %p53
      %p56 = scmp.ne.s32.totalorder %s41, %s55
      %p57 = scmp.eq.s32.totalorder %s15, 0
      %p58 = por %p56, %p57
      %s59 = ssub.s32 %s9, %s16
      %p60 = scmp.eq.s32.totalorder %s59, 0
      %s62 = sadd.s32 %s61, 1
      %s63 = scalar_select %p60, %s61, %s62
      %p66 = pneg %p60
      %p67 = scmp.eq.s32.totalorder %s9, 1
      %p68 = por %p66, %p67
      %p69 = scmp.ne.s32.totalorder %s61, %s64
      %p70 = scmp.eq.s32.totalorder %s9, 0
      %p71 = por %p69, %p70
      %p72 = scmp.ne.s32.totalorder %s61, %s64
      %p73 = scmp.eq.s32.totalorder %s14, 1
      %p74 = por %p72, %p73
      %p75 = scmp.ne.s32.totalorder %s64, %s65
      %p76 = scmp.eq.s32.totalorder %s14, 0
      %p77 = por %p75, %p76
      %p78 = scmp.ne.s32.totalorder %s64, %s65
      %p79 = scmp.eq.s32.totalorder %s15, 1
      %p80 = por %p78, %p79
      %p82 = scmp.ne.s32.totalorder %s65, %s81
      %p83 = scmp.eq.s32.totalorder %s15, 0
      %p84 = por %p82, %p83
      %s85 = ssub.s32 %s9, %s16
      %p86 = scmp.eq.s32.totalorder %s85, 0
      %s88 = sadd.s32 %s87, 1
      %s89 = scalar_select %p86, %s87, %s88
      %p92 = pneg %p86
      %p93 = scmp.eq.s32.totalorder %s9, 1
      %p94 = por %p92, %p93
      %p95 = scmp.ne.s32.totalorder %s87, %s90
      %p96 = scmp.eq.s32.totalorder %s9, 0
      %p97 = por %p95, %p96
      %p98 = scmp.ne.s32.totalorder %s87, %s90
      %p99 = scmp.eq.s32.totalorder %s14, 1
      %p100 = por %p98, %p99
      %p101 = scmp.ne.s32.totalorder %s90, %s91
      %p102 = scmp.eq.s32.totalorder %s14, 0
      %p103 = por %p101, %p102
      %p104 = scmp.ne.s32.totalorder %s90, %s91
      %p105 = scmp.eq.s32.totalorder %s15, 1
      %p106 = por %p104, %p105
      %p108 = scmp.ne.s32.totalorder %s91, %s107
      %p109 = scmp.eq.s32.totalorder %s15, 0
      %p110 = por %p108, %p109
      %p111 = scmp.le.s32.totalorder 1, %s9
      %p112 = scmp.lt.s32.totalorder %s9, 3
      %p113 = pnand %p111, %p112
      %p114 = pneg %p113
      // Predicated region
      $region9: #{rfb_forward.8} parent=5 // pred_check
        _
      $region10: #{rfb_forward.8} parent=5 // pred_check_branch
        %116 = sbr.rel (%p113) target = $region12
      $region11: #{rfb_forward.8} parent=5 // pred_region
        %s117 = ssub.s32 %s9, 1
        // Predicated region
        $region13: #{rfb_forward.8} parent=11 // pred_check
          %p118 = pneg %p30
        $region14: #{rfb_forward.8} parent=11 // pred_check_branch
          %120 = sbr.rel (%p118) target = $region16
        $region15: #{rfb_forward.8} parent=11 // pred_region
          _
        $region16: #{rfb_forward.8} parent=11 // pred_fallthru
          _
        // Predicated region
        $region17: #{rfb_forward.8} parent=11 // pred_check
          %p121 = pneg %p51
        $region18: #{rfb_forward.8} parent=11 // pred_check_branch
          %123 = sbr.rel (%p121) target = $region20
        $region19: #{rfb_forward.8} parent=11 // pred_region
          _
        $region20: #{rfb_forward.8} parent=11 // pred_fallthru
          _
      $region12: #{rfb_forward.8} parent=5 // pred_fallthru
        _
      %p124 = scmp.lt.s32.totalorder %s9, 2
      // Predicated region
      $region21: #{rfb_forward.8} parent=5 // pred_check
        %p125 = pneg %p124
      $region22: #{rfb_forward.8} parent=5 // pred_check_branch
        %127 = sbr.rel (%p125) target = $region24
      $region23: #{rfb_forward.8} parent=5 // pred_region
        // Predicated region
        $region25: #{rfb_forward.8} parent=23 // pred_check
          %p128 = pneg %p71
        $region26: #{rfb_forward.8} parent=23 // pred_check_branch
          %130 = sbr.rel (%p128) target = $region28
        $region27: #{rfb_forward.8} parent=23 // pred_region
          %s131 = smul.u32 2, %s9
          %p132 = scmp.lt.s32.totalorder %s131, 3
          %s133 = scalar_select %p132, %s131, 3
          %s134 = smul.addr %s133, 2
          %s135 = scalar_lea.vmem %s2, %s134
          %s136 = smul.u32 2, %s9
        $region28: #{rfb_forward.8} parent=23 // pred_fallthru
          _
      $region24: #{rfb_forward.8} parent=5 // pred_fallthru
        _
      %p137 = scmp.le.s32.totalorder 1, %s9
      %p138 = scmp.lt.s32.totalorder %s9, 3
      %p139 = pnand %p137, %p138
      %p140 = pneg %p139
      // Predicated region
      $region29: #{rfb_forward.8} parent=5 // pred_check
        _
      $region30: #{rfb_forward.8} parent=5 // pred_check_branch
        %142 = sbr.rel (%p139) target = $region32
      $region31: #{rfb_forward.8} parent=5 // pred_region
        %s143 = ssub.s32 %s9, 1
        %p144 = pneg %p30
        %p145 = pneg %p27
        %p146 = pneg %p51
        %p147 = pneg %p48
        %s148 = smul.u32 2, %s14
        %p149 = scmp.lt.s32.totalorder %s148, 3
        %s150 = scalar_select %p149, %s148, 3
        %s151 = smul.addr %s150, 2
        %s152 = scalar_lea.vmem %s2, %s151
        %p153 = pneg %p77
        %p154 = pneg %p74
        %p155 = pneg %p103
        %p156 = pneg %p100
        %s157 = sand.u32 %s90, 1
        %s158 = sand.u32 %s90, 1
        %s159 = smul.addr %s158, 64
        %s160 = scalar_lea.vmem [#allocation2], %s159
        %s161 = smul.u32 2, %s14
        %p162 = scmp.lt.s32.totalorder %s161, 3
        %s163 = scalar_select %p162, %s161, 3
        %s164 = smul.addr %s163, 2
        %s165 = scalar_lea.vmem %s2, %s164
        %s166 = smul.u32 2, %s14
        %s167 = smul.u32 2, %s14
        %v169 = vld [vmem:[%s0] sm:$0xf]
        %v170 = vld [vmem:[%s0 + $0x4] sm:$0xf]
        %v171 = vld [vmem:[%s0 + $0x8] sm:$0xf]
        %v172 = vld [vmem:[%s0 + $0xc] sm:$0xf]
        %v173 = vld [vmem:[%s165] sm:$0xf]
        %v174 = vld [vmem:[%s1] sm:$0xff]
        %v175 = vld [vmem:[%s1 + $0x8] sm:$0xff]
        %v176 = vld [vmem:[%s1 + $0x10] sm:$0xff]
        %v177 = vld [vmem:[%s1 + $0x18] sm:$0xff]
        %179 = vset.pattern.permute.xlu0 0
        %180 = vperm.xlu0 %179, %v174
        %v181 = vpop.permute.xlu0 %180
        %184 = vset.pattern.permute.xlu0 0
        %185 = vperm.xlu0 %184, %v175
        %v186 = vpop.permute.xlu0 %185
        %189 = vset.pattern.permute.xlu0 0
        %190 = vperm.xlu0 %189, %v176
        %v191 = vpop.permute.xlu0 %190
        %194 = vset.pattern.permute.xlu0 0
        %195 = vperm.xlu0 %194, %v177
        %v196 = vpop.permute.xlu0 %195
        %v202 = vunpack.c.l.b16 %v169
        %v203 = vunpack.c.l.b16 %v170
        %v204 = vunpack.c.l.b16 %v171
        %v205 = vunpack.c.l.b16 %v172
        %v206 = vpack.c.b16 %v203, %v202
        %v207 = vpack.c.b16 %v205, %v204
        %v210 = vunpack.c.l.s4 1983009808
        %v211 = vunpack.c.0.s8 %v210
        %v212 = vlaneseq
        %v213 = vshrl.u32 %v212, 7
        %v214 = vsub.s32 %v211, %v213
        %v215 = vrot.slane %v173, %v214
        %v216 = vcombine.high %v215, %v215
        %vm217 = vcmask 31744
        %v219 = vsel %vm217, %v206, 0
        %v222 = vsel %vm217, %v207, 0
        %vm224 = vcmask 1041408
        %v226 = vsel %vm224, %v215, 0
        %v229 = vsel %vm224, %v216, 0
        %231 = vmatprep.subr.bf16.mxu0 0
        %232 = vmatpush1.bf16.msra.mxu0 0
        %233 = vmatprep.subr.bf16.mxu0 0
        %234 = vmatpush1.bf16.msra.mxu0 0
        %235 = vmatprep.subr.bf16.mxu0 0
        %236 = vmatpush1.bf16.msra.mxu0 0
        %237 = vmatprep.subr.bf16.mxu0 0
        %238 = vmatpush1.bf16.msra.mxu0 0
        %239 = vmatprep.subr.bf16.mxu0 0
        %240 = vmatpush1.bf16.msra.mxu0 0
        %241 = vmatprep.subr.bf16.mxu0 0
        %242 = vmatpush1.bf16.msra.mxu0 0
        %243 = vmatprep.subr.bf16.mxu0 0
        %244 = vmatpush1.bf16.msra.mxu0 0
        %245 = vmatprep.subr.bf16.mxu0 %v229
        %246 = vmatpush1.bf16.msra.mxu0 %v226
        %247 = vmatprep.subr.bf16.mxu0 0
        %248 = vmatpush2.bf16.msra.mxu0 0
        %249 = vmatprep.subr.bf16.mxu0 0
        %250 = vmatpush2.bf16.msra.mxu0 0
        %251 = vmatprep.subr.bf16.mxu0 0
        %252 = vmatpush2.bf16.msra.mxu0 0
        %253 = vmatprep.subr.bf16.mxu0 0
        %254 = vmatpush2.bf16.msra.mxu0 0
        %255 = vmatprep.subr.bf16.mxu0 0
        %256 = vmatpush2.bf16.msra.mxu0 0
        %257 = vmatprep.subr.bf16.mxu0 0
        %258 = vmatpush2.bf16.msra.mxu0 0
        %259 = vmatprep.subr.bf16.mxu0 0
        %260 = vmatpush2.bf16.msra.mxu0 0
        %261 = vmatprep.subr.bf16.mxu0 0
        %262 = vmatpush2.bf16.msra.mxu0 0
        %263 = vmatprep.mubr.bf16.mxu0 0
        %264 = vmatmul.mubr.bf16.gmra.mxu0 %v219
        %v265 = vpop.f32.mrf.mxu0
        %v266 = vadd.f32 %v181, %v265
        %v267 = vpop.f32.mrf.mxu0
        %v268 = vadd.f32 %v181, %v267
        %v269 = vpop.f32.mrf.mxu0
        %v270 = vadd.f32 %v186, %v269
        %v271 = vpop.f32.mrf.mxu0
        %v272 = vadd.f32 %v186, %v271
        %273 = vmatprep.mubr.bf16.mxu0 0
        %274 = vmatmul.mubr.bf16.gmra.mxu0 %v222
        %v275 = vpop.f32.mrf.mxu0
        %v276 = vadd.f32 %v191, %v275
        %v277 = vpop.f32.mrf.mxu0
        %v278 = vadd.f32 %v191, %v277
        %v279 = vpop.f32.mrf.mxu0
        %v280 = vadd.f32 %v196, %v279
        %v281 = vpop.f32.mrf.mxu0
        %v282 = vadd.f32 %v196, %v281
        %283 = vdwg.mxu0
        %284 = vst [vmem:[%s160] sm:$0xff] %v266
        %285 = vst [vmem:[%s160 + $0x8] sm:$0xff] %v268
        %286 = vst [vmem:[%s160 + $0x10] sm:$0xff] %v270
        %287 = vst [vmem:[%s160 + $0x18] sm:$0xff] %v272
        %288 = vst [vmem:[%s160 + $0x20] sm:$0xff] %v276
        %289 = vst [vmem:[%s160 + $0x28] sm:$0xff] %v278
        %290 = vst [vmem:[%s160 + $0x30] sm:$0xff] %v280
        %291 = vst [vmem:[%s160 + $0x38] sm:$0xff] %v282
        %s292 = sand.u32 %s90, 1
        %s293 = sand.u32 %s90, 1
        %s294 = smul.addr %s293, 64
        %s295 = scalar_lea.vmem [#allocation2], %s294
        // Predicated region
        $region33: #{rfb_forward.8} parent=31 // pred_check
          %p296 = pneg %p100
        $region34: #{rfb_forward.8} parent=31 // pred_check_branch
          %298 = sbr.rel (%p296) target = $region36
        $region35: #{rfb_forward.8} parent=31 // pred_region
          %s299 = smul.u32 2, %s14
          %s300 = smul.addr %s299, 8
          %s301 = scalar_lea.vmem %s3, %s300
          // Predicated region
          $region37: #{rfb_forward.8} parent=35 // pred_check
            _
          $region38: #{rfb_forward.8} parent=35 // pred_check_branch
            %303 = sbr.rel (0) target = $region40
          $region39: #{rfb_forward.8} parent=35 // pred_region
            // Predicated region
            $region41: #{rfb_forward.8} parent=39 // pred_check
              _
            $region42: #{rfb_forward.8} parent=39 // pred_check_branch
              %305 = sbr.rel (0) target = $region44
            $region43: #{rfb_forward.8} parent=39 // pred_region
              loop: start=0, step=1, limit=1
              $region45: #{rfb_forward.8} parent=43 // loop_pre_header
                _
              $region46: #{rfb_forward.8} parent=43 // loop_header
                %s307 = sphi 0, %s311
                %p308 = scmp.ge.s32.totalorder %s307, 1
                %s312 = sphi %s295, %s295
                %s313 = sphi %s301, %s301
              $region47: #{rfb_forward.8} parent=43 // loop_header_branch
                %310 = sbr.rel (%p308) target = $region51
              $region48: #{rfb_forward.8} parent=43 // loop_body
                %v314 = vld [vmem:[%s312] sm:$0xff]
                %315 = vst [vmem:[%s313] sm:$0xff] %v314
                %v316 = vld [vmem:[%s312 + $0x8] sm:$0xff]
                %317 = vst [vmem:[%s313 + $0x8] sm:$0xff] %v316
                %v318 = vld [vmem:[%s312 + $0x10] sm:$0xff]
                %319 = vst [vmem:[%s313 + $0x20] sm:$0xff] %v318
                %v320 = vld [vmem:[%s312 + $0x18] sm:$0xff]
                %321 = vst [vmem:[%s313 + $0x28] sm:$0xff] %v320
                %v322 = vld [vmem:[%s312 + $0x20] sm:$0xff]
                %323 = vst [vmem:[%s313 + $0x40] sm:$0xff] %v322
                %v324 = vld [vmem:[%s312 + $0x28] sm:$0xff]
                %325 = vst [vmem:[%s313 + $0x48] sm:$0xff] %v324
                %v326 = vld [vmem:[%s312 + $0x30] sm:$0xff]
                %327 = vst [vmem:[%s313 + $0x60] sm:$0xff] %v326
                %v328 = vld [vmem:[%s312 + $0x38] sm:$0xff]
                %329 = vst [vmem:[%s313 + $0x68] sm:$0xff] %v328
              $region49: #{rfb_forward.8} parent=43 // loop_footer
                %s311 = sadd.s32 1, %s307
              $region50: #{rfb_forward.8} parent=43 // loop_footer_branch
                %306 = sbr.rel target = $region46
              $region51: #{rfb_forward.8} parent=43 // loop_exit
                _
            $region44: #{rfb_forward.8} parent=39 // pred_fallthru
              _
            // Predicated region
            $region52: #{rfb_forward.8} parent=39 // pred_check
              _
            $region53: #{rfb_forward.8} parent=39 // pred_check_branch
              %331 = sbr.rel target = $region55
            $region54: #{rfb_forward.8} parent=39 // pred_region
              _
            $region55: #{rfb_forward.8} parent=39 // pred_fallthru
              _
          $region40: #{rfb_forward.8} parent=35 // pred_fallthru
            _
          %332 = vnop
        $region36: #{rfb_forward.8} parent=31 // pred_fallthru
          _
      $region32: #{rfb_forward.8} parent=5 // pred_fallthru
        _
      %p333 = scmp.le.s32.totalorder 2, %s9
      // Predicated region
      $region56: #{rfb_forward.8} parent=5 // pred_check
        %p334 = pneg %p333
      $region57: #{rfb_forward.8} parent=5 // pred_check_branch
        %336 = sbr.rel (%p334) target = $region59
      $region58: #{rfb_forward.8} parent=5 // pred_region
        %s337 = ssub.s32 %s9, 2
        // Predicated region
        $region60: #{rfb_forward.8} parent=58 // pred_check
          %p338 = pneg %p106
        $region61: #{rfb_forward.8} parent=58 // pred_check_branch
          %340 = sbr.rel (%p338) target = $region63
        $region62: #{rfb_forward.8} parent=58 // pred_region
          %s341 = sand.u32 %s91, 1
          %s342 = sand.u32 %s91, 1
          %s343 = smul.addr %s342, 64
          %s344 = scalar_lea.vmem [#allocation2], %s343
        $region63: #{rfb_forward.8} parent=58 // pred_fallthru
          _
      $region59: #{rfb_forward.8} parent=5 // pred_fallthru
        _
    $region6: #{rfb_forward.8} parent=1 // loop_footer
      %s13 = sadd.s32 1, %s9
    $region7: #{rfb_forward.8} parent=1 // loop_footer_branch
      %8 = sbr.rel target = $region3
    $region8: #{rfb_forward.8} parent=1 // loop_exit
      _

// kernel: rfb_forward.9
$region0: #{rfb_forward.9}
  #allocation0 [shape = 'u32[]', space=smem, size = 0x4, offset = 0x4, fixed_abs, tag = 'smem constant byte address 0x4 - core index']
  #allocation1 [shape = 'u32[144,128]{1,0:T(1,128)}', space=vmem, size = 0x12000, scoped, tag = 'internal scratch']
  %s0 = inlined_call_operand.vmem [shape: bf16[8,24], index: 0, kind: input, shape index: {}]
  %s1 = inlined_call_operand.vmem [shape: f32[8,1], index: 1, kind: input, shape index: {}]
  %s2 = inlined_call_operand.vmem [shape: bf16[24,512], index: 2, kind: input, shape index: {}]
  %s3 = inlined_call_operand.vmem [shape: f32[8,512], index: 3, kind: output, shape index: {}]
  %s4 = sld [smem:[#allocation0]]
  $region83: #{rfb_forward.9} parent=0
    _
  %s6 = ssub.s32 1, %s4
  %s7 = scalar_select 0, %s6, %s4
  $region1: #{rfb_forward.9} parent=0
    #allocation2 [shape = 'u8[24576]{0}', space=vmem, size = 0x6000, scoped, tag = 'input window, operand 2']
    loop: start=0, step=1, limit=4
    $region2: #{rfb_forward.9} parent=1 // loop_pre_header
      _
    $region3: #{rfb_forward.9} parent=1 // loop_header
      %s9 = sphi 0, %s13
      %p10 = scmp.ge.s32.totalorder %s9, 4
      %s17 = sphi 0, %s17
      %s19 = sphi 0, %s17
      %s20 = sphi 0, %s19
      %s34 = sphi 0, %s20
      %s38 = sphi 0, %s38
      %s40 = sphi 0, %s38
      %s41 = sphi 0, %s40
      %s55 = sphi 0, %s41
      %s61 = sphi 0, %s63
      %s64 = sphi 0, %s61
      %s65 = sphi 0, %s64
      %s81 = sphi 0, %s65
      %s87 = sphi 0, %s89
      %s90 = sphi 0, %s87
      %s91 = sphi 0, %s90
      %s107 = sphi 0, %s91
    $region4: #{rfb_forward.9} parent=1 // loop_header_branch
      %12 = sbr.rel (%p10) target = $region8
    $region5: #{rfb_forward.9} parent=1 // loop_body
      %s14 = ssub.s32 %s9, 1
      %s15 = ssub.s32 %s9, 2
      %s16 = sadd.s32 %s9, 1
      %s18 = sadd.s32 %s17, 1
      %p21 = scmp.eq.s32.totalorder %s9, 1
      %p22 = scmp.ne.s32.totalorder %s17, %s19
      %p23 = scmp.eq.s32.totalorder %s9, 0
      %p24 = por %p22, %p23
      %p25 = scmp.ne.s32.totalorder %s17, %s19
      %p26 = scmp.eq.s32.totalorder %s14, 1
      %p27 = por %p25, %p26
      %p28 = scmp.ne.s32.totalorder %s19, %s20
      %p29 = scmp.eq.s32.totalorder %s14, 0
      %p30 = por %p28, %p29
      %p31 = scmp.ne.s32.totalorder %s19, %s20
      %p32 = scmp.eq.s32.totalorder %s15, 1
      %p33 = por %p31, %p32
      %p35 = scmp.ne.s32.totalorder %s20, %s34
      %p36 = scmp.eq.s32.totalorder %s15, 0
      %p37 = por %p35, %p36
      %s39 = sadd.s32 %s38, 1
      %p42 = scmp.eq.s32.totalorder %s9, 1
      %p43 = scmp.ne.s32.totalorder %s38, %s40
      %p44 = scmp.eq.s32.totalorder %s9, 0
      %p45 = por %p43, %p44
      %p46 = scmp.ne.s32.totalorder %s38, %s40
      %p47 = scmp.eq.s32.totalorder %s14, 1
      %p48 = por %p46, %p47
      %p49 = scmp.ne.s32.totalorder %s40, %s41
      %p50 = scmp.eq.s32.totalorder %s14, 0
      %p51 = por %p49, %p50
      %p52 = scmp.ne.s32.totalorder %s40, %s41
      %p53 = scmp.eq.s32.totalorder %s15, 1
      %p54 = por %p52, %p53
      %p56 = scmp.ne.s32.totalorder %s41, %s55
      %p57 = scmp.eq.s32.totalorder %s15, 0
      %p58 = por %p56, %p57
      %s59 = ssub.s32 %s9, %s16
      %p60 = scmp.eq.s32.totalorder %s59, 0
      %s62 = sadd.s32 %s61, 1
      %s63 = scalar_select %p60, %s61, %s62
      %p66 = pneg %p60
      %p67 = scmp.eq.s32.totalorder %s9, 1
      %p68 = por %p66, %p67
      %p69 = scmp.ne.s32.totalorder %s61, %s64
      %p70 = scmp.eq.s32.totalorder %s9, 0
      %p71 = por %p69, %p70
      %p72 = scmp.ne.s32.totalorder %s61, %s64
      %p73 = scmp.eq.s32.totalorder %s14, 1
      %p74 = por %p72, %p73
      %p75 = scmp.ne.s32.totalorder %s64, %s65
      %p76 = scmp.eq.s32.totalorder %s14, 0
      %p77 = por %p75, %p76
      %p78 = scmp.ne.s32.totalorder %s64, %s65
      %p79 = scmp.eq.s32.totalorder %s15, 1
      %p80 = por %p78, %p79
      %p82 = scmp.ne.s32.totalorder %s65, %s81
      %p83 = scmp.eq.s32.totalorder %s15, 0
      %p84 = por %p82, %p83
      %s85 = ssub.s32 %s9, %s16
      %p86 = scmp.eq.s32.totalorder %s85, 0
      %s88 = sadd.s32 %s87, 1
      %s89 = scalar_select %p86, %s87, %s88
      %p92 = pneg %p86
      %p93 = scmp.eq.s32.totalorder %s9, 1
      %p94 = por %p92, %p93
      %p95 = scmp.ne.s32.totalorder %s87, %s90
      %p96 = scmp.eq.s32.totalorder %s9, 0
      %p97 = por %p95, %p96
      %p98 = scmp.ne.s32.totalorder %s87, %s90
      %p99 = scmp.eq.s32.totalorder %s14, 1
      %p100 = por %p98, %p99
      %p101 = scmp.ne.s32.totalorder %s90, %s91
      %p102 = scmp.eq.s32.totalorder %s14, 0
      %p103 = por %p101, %p102
      %p104 = scmp.ne.s32.totalorder %s90, %s91
      %p105 = scmp.eq.s32.totalorder %s15, 1
      %p106 = por %p104, %p105
      %p108 = scmp.ne.s32.totalorder %s91, %s107
      %p109 = scmp.eq.s32.totalorder %s15, 0
      %p110 = por %p108, %p109
      %p111 = scmp.le.s32.totalorder 1, %s9
      %p112 = scmp.lt.s32.totalorder %s9, 3
      %p113 = pnand %p111, %p112
      %p114 = pneg %p113
      // Predicated region
      $region9: #{rfb_forward.9} parent=5 // pred_check
        _
      $region10: #{rfb_forward.9} parent=5 // pred_check_branch
        %116 = sbr.rel (%p113) target = $region12
      $region11: #{rfb_forward.9} parent=5 // pred_region
        %s117 = ssub.s32 %s9, 1
        // Predicated region
        $region13: #{rfb_forward.9} parent=11 // pred_check
          %p118 = pneg %p30
        $region14: #{rfb_forward.9} parent=11 // pred_check_branch
          %120 = sbr.rel (%p118) target = $region16
        $region15: #{rfb_forward.9} parent=11 // pred_region
          _
        $region16: #{rfb_forward.9} parent=11 // pred_fallthru
          _
        // Predicated region
        $region17: #{rfb_forward.9} parent=11 // pred_check
          %p121 = pneg %p51
        $region18: #{rfb_forward.9} parent=11 // pred_check_branch
          %123 = sbr.rel (%p121) target = $region20
        $region19: #{rfb_forward.9} parent=11 // pred_region
          _
        $region20: #{rfb_forward.9} parent=11 // pred_fallthru
          _
      $region12: #{rfb_forward.9} parent=5 // pred_fallthru
        _
      %p124 = scmp.lt.s32.totalorder %s9, 2
      // Predicated region
      $region21: #{rfb_forward.9} parent=5 // pred_check
        %p125 = pneg %p124
      $region22: #{rfb_forward.9} parent=5 // pred_check_branch
        %127 = sbr.rel (%p125) target = $region24
      $region23: #{rfb_forward.9} parent=5 // pred_region
        // Predicated region
        $region25: #{rfb_forward.9} parent=23 // pred_check
          %p128 = pneg %p71
        $region26: #{rfb_forward.9} parent=23 // pred_check_branch
          %130 = sbr.rel (%p128) target = $region28
        $region27: #{rfb_forward.9} parent=23 // pred_region
          %s131 = sand.u32 %s61, 1
          %s132 = sand.u32 %s61, 1
          %s133 = smul.addr %s132, 24
          %s134 = scalar_lea.vmem [#allocation2], %s133
          %s135 = smul.u32 2, %s9
          %s136 = smul.addr %s135, 4
          %s137 = scalar_lea.vmem %s2, %s136
          // Predicated region
          $region29: #{rfb_forward.9} parent=27 // pred_check
            _
          $region30: #{rfb_forward.9} parent=27 // pred_check_branch
            %139 = sbr.rel (0) target = $region32
          $region31: #{rfb_forward.9} parent=27 // pred_region
            // Predicated region
            $region33: #{rfb_forward.9} parent=31 // pred_check
              _
            $region34: #{rfb_forward.9} parent=31 // pred_check_branch
              %141 = sbr.rel (0) target = $region36
            $region35: #{rfb_forward.9} parent=31 // pred_region
              // Predicated region
              $region48: #{rfb_forward.9} parent=35 // pred_check
                _
              $region49: #{rfb_forward.9} parent=35 // pred_check_branch
                %161 = sbr.rel (0) target = $region51
              $region50: #{rfb_forward.9} parent=35 // pred_region
                loop: start=0, step=1, limit=1
                $region52: #{rfb_forward.9} parent=50 // loop_pre_header
                  _
                $region53: #{rfb_forward.9} parent=50 // loop_header
                  %s163 = sphi 0, %s167
                  %p164 = scmp.ge.s32.totalorder %s163, 1
                  %s168 = sphi %s137, %s137
                  %s169 = sphi %s134, %s134
                $region54: #{rfb_forward.9} parent=50 // loop_header_branch
                  %166 = sbr.rel (%p164) target = $region58
                $region55: #{rfb_forward.9} parent=50 // loop_body
                  %v170 = vld [vmem:[%s168] sm:$0xff]
                  %171 = vst [vmem:[%s169] sm:$0xff] %v170
                  %v172 = vld [vmem:[%s168 + $0x10] sm:$0xff]
                  %173 = vst [vmem:[%s169 + $0x8] sm:$0xff] %v172
                  %v174 = vld [vmem:[%s168 + $0x20] sm:$0xff]
                  %175 = vst [vmem:[%s169 + $0x10] sm:$0xff] %v174
                $region56: #{rfb_forward.9} parent=50 // loop_footer
                  %s167 = sadd.s32 1, %s163
                $region57: #{rfb_forward.9} parent=50 // loop_footer_branch
                  %162 = sbr.rel target = $region53
                $region58: #{rfb_forward.9} parent=50 // loop_exit
                  _
              $region51: #{rfb_forward.9} parent=35 // pred_fallthru
                _
              // Predicated region
              $region59: #{rfb_forward.9} parent=35 // pred_check
                _
              $region60: #{rfb_forward.9} parent=35 // pred_check_branch
                %177 = sbr.rel target = $region62
              $region61: #{rfb_forward.9} parent=35 // pred_region
                _
              $region62: #{rfb_forward.9} parent=35 // pred_fallthru
                _
            $region36: #{rfb_forward.9} parent=31 // pred_fallthru
              _
            // Predicated region
            $region37: #{rfb_forward.9} parent=31 // pred_check
              _
            $region38: #{rfb_forward.9} parent=31 // pred_check_branch
              %143 = sbr.rel target = $region40
            $region39: #{rfb_forward.9} parent=31 // pred_region
              %s145 = ssub.s32 256, 1
              loop: start=0, step=1, limit=1
              $region41: #{rfb_forward.9} parent=39 // loop_pre_header
                _
              $region42: #{rfb_forward.9} parent=39 // loop_header
                %s147 = sphi 0, %s151
                %p148 = scmp.ge.s32.totalorder %s147, 1
                %s152 = sphi %s137, %s137
                %s153 = sphi %s134, %s134
              $region43: #{rfb_forward.9} parent=39 // loop_header_branch
                %150 = sbr.rel (%p148) target = $region47
              $region44: #{rfb_forward.9} parent=39 // loop_body
                %v154 = vld [vmem:[%s152] sm:%s145]
                %155 = vst [vmem:[%s153] sm:%s145] %v154
                %v156 = vld [vmem:[%s152 + $0x10] sm:%s145]
                %157 = vst [vmem:[%s153 + $0x8] sm:%s145] %v156
                %v158 = vld [vmem:[%s152 + $0x20] sm:%s145]
                %159 = vst [vmem:[%s153 + $0x10] sm:%s145] %v158
              $region45: #{rfb_forward.9} parent=39 // loop_footer
                %s151 = sadd.s32 1, %s147
              $region46: #{rfb_forward.9} parent=39 // loop_footer_branch
                %146 = sbr.rel target = $region42
              $region47: #{rfb_forward.9} parent=39 // loop_exit
                _
            $region40: #{rfb_forward.9} parent=31 // pred_fallthru
              _
          $region32: #{rfb_forward.9} parent=27 // pred_fallthru
            _
          %178 = vnop
        $region28: #{rfb_forward.9} parent=23 // pred_fallthru
          _
      $region24: #{rfb_forward.9} parent=5 // pred_fallthru
        _
      %p179 = scmp.le.s32.totalorder 1, %s9
      %p180 = scmp.lt.s32.totalorder %s9, 3
      %p181 = pnand %p179, %p180
      %p182 = pneg %p181
      // Predicated region
      $region63: #{rfb_forward.9} parent=5 // pred_check
        _
      $region64: #{rfb_forward.9} parent=5 // pred_check_branch
        %184 = sbr.rel (%p181) target = $region66
      $region65: #{rfb_forward.9} parent=5 // pred_region
        %s185 = ssub.s32 %s9, 1
        %s186 = sand.u32 %s64, 1
        %s187 = sand.u32 %s64, 1
        %s188 = smul.addr %s187, 24
        %s189 = scalar_lea.vmem [#allocation2], %s188
        // Predicated region
        $region67: #{rfb_forward.9} parent=65 // pred_check
          %p190 = pneg %p77
        $region68: #{rfb_forward.9} parent=65 // pred_check_branch
          %192 = sbr.rel (%p190) target = $region70
        $region69: #{rfb_forward.9} parent=65 // pred_region
          _
        $region70: #{rfb_forward.9} parent=65 // pred_fallthru
          _
        %p193 = pneg %p30
        %p194 = pneg %p27
        %p195 = pneg %p51
        %p196 = pneg %p48
        %s197 = sand.u32 %s64, 1
        %s198 = sand.u32 %s64, 1
        %s199 = smul.addr %s198, 24
        %s200 = scalar_lea.vmem [#allocation2], %s199
        %p201 = pneg %p77
        %p202 = pneg %p74
        %p203 = pneg %p103
        %p204 = pneg %p100
        %s205 = smul.u32 2, %s14
        %p206 = scmp.lt.s32.totalorder %s205, 3
        %s207 = scalar_select %p206, %s205, 3
        %s208 = smul.addr %s207, 8
        %s209 = scalar_lea.vmem %s3, %s208
        %s210 = smul.u32 2, %s14
        %s211 = smul.u32 2, %s14
        %p212 = scmp.lt.s32.totalorder %s211, 3
        %s213 = scalar_select %p212, %s211, 3
        %s214 = smul.addr %s213, 8
        %s215 = scalar_lea.vmem %s3, %s214
        %s216 = smul.u32 2, %s14
        %v218 = vld [vmem:[%s0] sm:$0xf]
        %v219 = vld [vmem:[%s189] sm:$0xff]
        %v220 = vld [vmem:[%s189 + $0x8] sm:$0xff]
        %v221 = vld [vmem:[%s189 + $0x10] sm:$0xff]
        %v222 = vld [vmem:[%s1] sm:$0xff]
        %224 = vset.pattern.permute.xlu0 0
        %225 = vperm.xlu0 %224, %v222
        %v226 = vpop.permute.xlu0 %225
        %v231 = vunpack.c.l.b16 %v219
        %v232 = vunpack.c.h.b16 %v219
        %v233 = vunpack.c.l.b16 %v220
        %v234 = vunpack.c.h.b16 %v220
        %v235 = vunpack.c.l.b16 %v221
        %v236 = vunpack.c.h.b16 %v221
        %v237 = vpack.c.b16 %v233, %v231
        %v238 = vpack.c.b16 %v234, %v232
        %v239 = vpack.c.b16 %v235, %v235
        %v240 = vpack.c.b16 %v236, %v236
        %vm243 = vcmask 195584
        %v245 = vsel %vm243, %v218, 0
        %vm247 = vcmask 1043456
        %v249 = vsel %vm247, %v239, 0
        %v252 = vsel %vm247, %v240, 0
        %254 = vmatprep.subr.bf16.mxu0 0
        %255 = vmatpush1.bf16.msra.mxu0 0
        %256 = vmatprep.subr.bf16.mxu0 0
        %257 = vmatpush1.bf16.msra.mxu0 0
        %258 = vmatprep.subr.bf16.mxu0 0
        %259 = vmatpush1.bf16.msra.mxu0 0
        %260 = vmatprep.subr.bf16.mxu0 0
        %261 = vmatpush1.bf16.msra.mxu0 0
        %262 = vmatprep.subr.bf16.mxu0 0
        %263 = vmatpush1.bf16.msra.mxu0 0
        %264 = vmatprep.subr.bf16.mxu0 0
        %265 = vmatpush1.bf16.msra.mxu0 0
        %266 = vmatprep.subr.bf16.mxu0 %v252
        %267 = vmatpush1.bf16.msra.mxu0 %v249
        %268 = vmatprep.subr.bf16.mxu0 %v238
        %269 = vmatpush1.bf16.msra.mxu0 %v237
        %270 = vmatprep.subr.bf16.mxu0 0
        %271 = vmatpush2.bf16.msra.mxu0 0
        %272 = vmatprep.subr.bf16.mxu0 0
        %273 = vmatpush2.bf16.msra.mxu0 0
        %274 = vmatprep.subr.bf16.mxu0 0
        %275 = vmatpush2.bf16.msra.mxu0 0
        %276 = vmatprep.subr.bf16.mxu0 0
        %277 = vmatpush2.bf16.msra.mxu0 0
        %278 = vmatprep.subr.bf16.mxu0 0
        %279 = vmatpush2.bf16.msra.mxu0 0
        %280 = vmatprep.subr.bf16.mxu0 0
        %281 = vmatpush2.bf16.msra.mxu0 0
        %282 = vmatprep.subr.bf16.mxu0 0
        %283 = vmatpush2.bf16.msra.mxu0 0
        %284 = vmatprep.subr.bf16.mxu0 0
        %285 = vmatpush2.bf16.msra.mxu0 0
        %286 = vmatprep.mubr.bf16.mxu0 0
        %287 = vmatmul.mubr.bf16.gmra.mxu0 %v245
        %v288 = vpop.f32.mrf.mxu0
        %v289 = vadd.f32 %v226, %v288
        %v290 = vpop.f32.mrf.mxu0
        %v291 = vadd.f32 %v226, %v290
        %v292 = vpop.f32.mrf.mxu0
        %v293 = vpop.f32.mrf.mxu0
        %294 = vdwg.mxu0
        %295 = vst [vmem:[%s215] sm:$0xff] %v289
        %296 = vst [vmem:[%s215 + $0x8] sm:$0xff] %v291
        %s297 = smul.u32 2, %s14
        %p298 = scmp.lt.s32.totalorder %s297, 3
        %s299 = scalar_select %p298, %s297, 3
        %s300 = smul.addr %s299, 8
        %s301 = scalar_lea.vmem %s3, %s300
        // Predicated region
        $region71: #{rfb_forward.9} parent=65 // pred_check
          %p302 = pneg %p100
        $region72: #{rfb_forward.9} parent=65 // pred_check_branch
          %304 = sbr.rel (%p302) target = $region74
        $region73: #{rfb_forward.9} parent=65 // pred_region
          %s305 = smul.u32 2, %s14
        $region74: #{rfb_forward.9} parent=65 // pred_fallthru
          _
      $region66: #{rfb_forward.9} parent=5 // pred_fallthru
        _
      %p306 = scmp.le.s32.totalorder 2, %s9
      // Predicated region
      $region75: #{rfb_forward.9} parent=5 // pred_check
        %p307 = pneg %p306
      $region76: #{rfb_forward.9} parent=5 // pred_check_branch
        %309 = sbr.rel (%p307) target = $region78
      $region77: #{rfb_forward.9} parent=5 // pred_region
        %s310 = ssub.s32 %s9, 2
        // Predicated region
        $region79: #{rfb_forward.9} parent=77 // pred_check
          %p311 = pneg %p106
        $region80: #{rfb_forward.9} parent=77 // pred_check_branch
          %313 = sbr.rel (%p311) target = $region82
        $region81: #{rfb_forward.9} parent=77 // pred_region
          %s314 = smul.u32 2, %s15
          %p315 = scmp.lt.s32.totalorder %s314, 3
          %s316 = scalar_select %p315, %s314, 3
          %s317 = smul.addr %s316, 8
          %s318 = scalar_lea.vmem %s3, %s317
        $region82: #{rfb_forward.9} parent=77 // pred_fallthru
          _
      $region78: #{rfb_forward.9} parent=5 // pred_fallthru
        _
    $region6: #{rfb_forward.9} parent=1 // loop_footer
      %s13 = sadd.s32 1, %s9
    $region7: #{rfb_forward.9} parent=1 // loop_footer_branch
      %8 = sbr.rel target = $region3
    $region8: #{rfb_forward.9} parent=1 // loop_exit
      _

// kernel: rfb_forward.12
$region0: #{rfb_forward.12}
  #allocation0 [shape = 'u32[]', space=smem, size = 0x4, offset = 0x4, fixed_abs, tag = 'smem constant byte address 0x4 - core index']
  #allocation1 [shape = 'u32[144,128]{1,0:T(1,128)}', space=vmem, size = 0x12000, scoped, tag = 'internal scratch']
  %s0 = inlined_call_operand.vmem [shape: bf16[8,40], index: 0, kind: input, shape index: {}]
  %s1 = inlined_call_operand.vmem [shape: f32[8,1], index: 1, kind: input, shape index: {}]
  %s2 = inlined_call_operand.vmem [shape: bf16[40,512], index: 2, kind: input, shape index: {}]
  %s3 = inlined_call_operand.vmem [shape: f32[8,512], index: 3, kind: output, shape index: {}]
  %s4 = sld [smem:[#allocation0]]
  $region83: #{rfb_forward.12} parent=0
    _
  %s6 = ssub.s32 1, %s4
  %s7 = scalar_select 0, %s6, %s4
  $region1: #{rfb_forward.12} parent=0
    #allocation2 [shape = 'u8[40960]{0}', space=vmem, size = 0xa000, scoped, tag = 'input window, operand 2']
    loop: start=0, step=1, limit=4
    $region2: #{rfb_forward.12} parent=1 // loop_pre_header
      _
    $region3: #{rfb_forward.12} parent=1 // loop_header
      %s9 = sphi 0, %s13
      %p10 = scmp.ge.s32.totalorder %s9, 4
      %s17 = sphi 0, %s17
      %s19 = sphi 0, %s17
      %s20 = sphi 0, %s19
      %s34 = sphi 0, %s20
      %s38 = sphi 0, %s38
      %s40 = sphi 0, %s38
      %s41 = sphi 0, %s40
      %s55 = sphi 0, %s41
      %s61 = sphi 0, %s63
      %s64 = sphi 0, %s61
      %s65 = sphi 0, %s64
      %s81 = sphi 0, %s65
      %s87 = sphi 0, %s89
      %s90 = sphi 0, %s87
      %s91 = sphi 0, %s90
      %s107 = sphi 0, %s91
    $region4: #{rfb_forward.12} parent=1 // loop_header_branch
      %12 = sbr.rel (%p10) target = $region8
    $region5: #{rfb_forward.12} parent=1 // loop_body
      %s14 = ssub.s32 %s9, 1
      %s15 = ssub.s32 %s9, 2
      %s16 = sadd.s32 %s9, 1
      %s18 = sadd.s32 %s17, 1
      %p21 = scmp.eq.s32.totalorder %s9, 1
      %p22 = scmp.ne.s32.totalorder %s17, %s19
      %p23 = scmp.eq.s32.totalorder %s9, 0
      %p24 = por %p22, %p23
      %p25 = scmp.ne.s32.totalorder %s17, %s19
      %p26 = scmp.eq.s32.totalorder %s14, 1
      %p27 = por %p25, %p26
      %p28 = scmp.ne.s32.totalorder %s19, %s20
      %p29 = scmp.eq.s32.totalorder %s14, 0
      %p30 = por %p28, %p29
      %p31 = scmp.ne.s32.totalorder %s19, %s20
      %p32 = scmp.eq.s32.totalorder %s15, 1
      %p33 = por %p31, %p32
      %p35 = scmp.ne.s32.totalorder %s20, %s34
      %p36 = scmp.eq.s32.totalorder %s15, 0
      %p37 = por %p35, %p36
      %s39 = sadd.s32 %s38, 1
      %p42 = scmp.eq.s32.totalorder %s9, 1
      %p43 = scmp.ne.s32.totalorder %s38, %s40
      %p44 = scmp.eq.s32.totalorder %s9, 0
      %p45 = por %p43, %p44
      %p46 = scmp.ne.s32.totalorder %s38, %s40
      %p47 = scmp.eq.s32.totalorder %s14, 1
      %p48 = por %p46, %p47
      %p49 = scmp.ne.s32.totalorder %s40, %s41
      %p50 = scmp.eq.s32.totalorder %s14, 0
      %p51 = por %p49, %p50
      %p52 = scmp.ne.s32.totalorder %s40, %s41
      %p53 = scmp.eq.s32.totalorder %s15, 1
      %p54 = por %p52, %p53
      %p56 = scmp.ne.s32.totalorder %s41, %s55
      %p57 = scmp.eq.s32.totalorder %s15, 0
      %p58 = por %p56, %p57
      %s59 = ssub.s32 %s9, %s16
      %p60 = scmp.eq.s32.totalorder %s59, 0
      %s62 = sadd.s32 %s61, 1
      %s63 = scalar_select %p60, %s61, %s62
      %p66 = pneg %p60
      %p67 = scmp.eq.s32.totalorder %s9, 1
      %p68 = por %p66, %p67
      %p69 = scmp.ne.s32.totalorder %s61, %s64
      %p70 = scmp.eq.s32.totalorder %s9, 0
      %p71 = por %p69, %p70
      %p72 = scmp.ne.s32.totalorder %s61, %s64
      %p73 = scmp.eq.s32.totalorder %s14, 1
      %p74 = por %p72, %p73
      %p75 = scmp.ne.s32.totalorder %s64, %s65
      %p76 = scmp.eq.s32.totalorder %s14, 0
      %p77 = por %p75, %p76
      %p78 = scmp.ne.s32.totalorder %s64, %s65
      %p79 = scmp.eq.s32.totalorder %s15, 1
      %p80 = por %p78, %p79
      %p82 = scmp.ne.s32.totalorder %s65, %s81
      %p83 = scmp.eq.s32.totalorder %s15, 0
      %p84 = por %p82, %p83
      %s85 = ssub.s32 %s9, %s16
      %p86 = scmp.eq.s32.totalorder %s85, 0
      %s88 = sadd.s32 %s87, 1
      %s89 = scalar_select %p86, %s87, %s88
      %p92 = pneg %p86
      %p93 = scmp.eq.s32.totalorder %s9, 1
      %p94 = por %p92, %p93
      %p95 = scmp.ne.s32.totalorder %s87, %s90
      %p96 = scmp.eq.s32.totalorder %s9, 0
      %p97 = por %p95, %p96
      %p98 = scmp.ne.s32.totalorder %s87, %s90
      %p99 = scmp.eq.s32.totalorder %s14, 1
      %p100 = por %p98, %p99
      %p101 = scmp.ne.s32.totalorder %s90, %s91
      %p102 = scmp.eq.s32.totalorder %s14, 0
      %p103 = por %p101, %p102
      %p104 = scmp.ne.s32.totalorder %s90, %s91
      %p105 = scmp.eq.s32.totalorder %s15, 1
      %p106 = por %p104, %p105
      %p108 = scmp.ne.s32.totalorder %s91, %s107
      %p109 = scmp.eq.s32.totalorder %s15, 0
      %p110 = por %p108, %p109
      %p111 = scmp.le.s32.totalorder 1, %s9
      %p112 = scmp.lt.s32.totalorder %s9, 3
      %p113 = pnand %p111, %p112
      %p114 = pneg %p113
      // Predicated region
      $region9: #{rfb_forward.12} parent=5 // pred_check
        _
      $region10: #{rfb_forward.12} parent=5 // pred_check_branch
        %116 = sbr.rel (%p113) target = $region12
      $region11: #{rfb_forward.12} parent=5 // pred_region
        %s117 = ssub.s32 %s9, 1
        // Predicated region
        $region13: #{rfb_forward.12} parent=11 // pred_check
          %p118 = pneg %p30
        $region14: #{rfb_forward.12} parent=11 // pred_check_branch
          %120 = sbr.rel (%p118) target = $region16
        $region15: #{rfb_forward.12} parent=11 // pred_region
          _
        $region16: #{rfb_forward.12} parent=11 // pred_fallthru
          _
        // Predicated region
        $region17: #{rfb_forward.12} parent=11 // pred_check
          %p121 = pneg %p51
        $region18: #{rfb_forward.12} parent=11 // pred_check_branch
          %123 = sbr.rel (%p121) target = $region20
        $region19: #{rfb_forward.12} parent=11 // pred_region
          _
        $region20: #{rfb_forward.12} parent=11 // pred_fallthru
          _
      $region12: #{rfb_forward.12} parent=5 // pred_fallthru
        _
      %p124 = scmp.lt.s32.totalorder %s9, 2
      // Predicated region
      $region21: #{rfb_forward.12} parent=5 // pred_check
        %p125 = pneg %p124
      $region22: #{rfb_forward.12} parent=5 // pred_check_branch
        %127 = sbr.rel (%p125) target = $region24
      $region23: #{rfb_forward.12} parent=5 // pred_region
        // Predicated region
        $region25: #{rfb_forward.12} parent=23 // pred_check
          %p128 = pneg %p71
        $region26: #{rfb_forward.12} parent=23 // pred_check_branch
          %130 = sbr.rel (%p128) target = $region28
        $region27: #{rfb_forward.12} parent=23 // pred_region
          %s131 = sand.u32 %s61, 1
          %s132 = sand.u32 %s61, 1
          %s133 = smul.addr %s132, 40
          %s134 = scalar_lea.vmem [#allocation2], %s133
          %s135 = smul.u32 2, %s9
          %s136 = smul.addr %s135, 4
          %s137 = scalar_lea.vmem %s2, %s136
          // Predicated region
          $region29: #{rfb_forward.12} parent=27 // pred_check
            _
          $region30: #{rfb_forward.12} parent=27 // pred_check_branch
            %139 = sbr.rel (0) target = $region32
          $region31: #{rfb_forward.12} parent=27 // pred_region
            // Predicated region
            $region33: #{rfb_forward.12} parent=31 // pred_check
              _
            $region34: #{rfb_forward.12} parent=31 // pred_check_branch
              %141 = sbr.rel (0) target = $region36
            $region35: #{rfb_forward.12} parent=31 // pred_region
              // Predicated region
              $region48: #{rfb_forward.12} parent=35 // pred_check
                _
              $region49: #{rfb_forward.12} parent=35 // pred_check_branch
                %165 = sbr.rel (0) target = $region51
              $region50: #{rfb_forward.12} parent=35 // pred_region
                loop: start=0, step=1, limit=1
                $region52: #{rfb_forward.12} parent=50 // loop_pre_header
                  _
                $region53: #{rfb_forward.12} parent=50 // loop_header
                  %s167 = sphi 0, %s171
                  %p168 = scmp.ge.s32.totalorder %s167, 1
                  %s172 = sphi %s137, %s137
                  %s173 = sphi %s134, %s134
                $region54: #{rfb_forward.12} parent=50 // loop_header_branch
                  %170 = sbr.rel (%p168) target = $region58
                $region55: #{rfb_forward.12} parent=50 // loop_body
                  %v174 = vld [vmem:[%s172] sm:$0xff]
                  %175 = vst [vmem:[%s173] sm:$0xff] %v174
                  %v176 = vld [vmem:[%s172 + $0x10] sm:$0xff]
                  %177 = vst [vmem:[%s173 + $0x8] sm:$0xff] %v176
                  %v178 = vld [vmem:[%s172 + $0x20] sm:$0xff]
                  %179 = vst [vmem:[%s173 + $0x10] sm:$0xff] %v178
                  %v180 = vld [vmem:[%s172 + $0x30] sm:$0xff]
                  %181 = vst [vmem:[%s173 + $0x18] sm:$0xff] %v180
                  %v182 = vld [vmem:[%s172 + $0x40] sm:$0xff]
                  %183 = vst [vmem:[%s173 + $0x20] sm:$0xff] %v182
                $region56: #{rfb_forward.12} parent=50 // loop_footer
                  %s171 = sadd.s32 1, %s167
                $region57: #{rfb_forward.12} parent=50 // loop_footer_branch
                  %166 = sbr.rel target = $region53
                $region58: #{rfb_forward.12} parent=50 // loop_exit
                  _
              $region51: #{rfb_forward.12} parent=35 // pred_fallthru
                _
              // Predicated region
              $region59: #{rfb_forward.12} parent=35 // pred_check
                _
              $region60: #{rfb_forward.12} parent=35 // pred_check_branch
                %185 = sbr.rel target = $region62
              $region61: #{rfb_forward.12} parent=35 // pred_region
                _
              $region62: #{rfb_forward.12} parent=35 // pred_fallthru
                _
            $region36: #{rfb_forward.12} parent=31 // pred_fallthru
              _
            // Predicated region
            $region37: #{rfb_forward.12} parent=31 // pred_check
              _
            $region38: #{rfb_forward.12} parent=31 // pred_check_branch
              %143 = sbr.rel target = $region40
            $region39: #{rfb_forward.12} parent=31 // pred_region
              %s145 = ssub.s32 256, 1
              loop: start=0, step=1, limit=1
              $region41: #{rfb_forward.12} parent=39 // loop_pre_header
                _
              $region42: #{rfb_forward.12} parent=39 // loop_header
                %s147 = sphi 0, %s151
                %p148 = scmp.ge.s32.totalorder %s147, 1
                %s152 = sphi %s137, %s137
                %s153 = sphi %s134, %s134
              $region43: #{rfb_forward.12} parent=39 // loop_header_branch
                %150 = sbr.rel (%p148) target = $region47
              $region44: #{rfb_forward.12} parent=39 // loop_body
                %v154 = vld [vmem:[%s152] sm:%s145]
                %155 = vst [vmem:[%s153] sm:%s145] %v154
                %v156 = vld [vmem:[%s152 + $0x10] sm:%s145]
                %157 = vst [vmem:[%s153 + $0x8] sm:%s145] %v156
                %v158 = vld [vmem:[%s152 + $0x20] sm:%s145]
                %159 = vst [vmem:[%s153 + $0x10] sm:%s145] %v158
                %v160 = vld [vmem:[%s152 + $0x30] sm:%s145]
                %161 = vst [vmem:[%s153 + $0x18] sm:%s145] %v160
                %v162 = vld [vmem:[%s152 + $0x40] sm:%s145]
                %163 = vst [vmem:[%s153 + $0x20] sm:%s145] %v162
              $region45: #{rfb_forward.12} parent=39 // loop_footer
                %s151 = sadd.s32 1, %s147
              $region46: #{rfb_forward.12} parent=39 // loop_footer_branch
                %146 = sbr.rel target = $region42
              $region47: #{rfb_forward.12} parent=39 // loop_exit
                _
            $region40: #{rfb_forward.12} parent=31 // pred_fallthru
              _
          $region32: #{rfb_forward.12} parent=27 // pred_fallthru
            _
          %186 = vnop
        $region28: #{rfb_forward.12} parent=23 // pred_fallthru
          _
      $region24: #{rfb_forward.12} parent=5 // pred_fallthru
        _
      %p187 = scmp.le.s32.totalorder 1, %s9
      %p188 = scmp.lt.s32.totalorder %s9, 3
      %p189 = pnand %p187, %p188
      %p190 = pneg %p189
      // Predicated region
      $region63: #{rfb_forward.12} parent=5 // pred_check
        _
      $region64: #{rfb_forward.12} parent=5 // pred_check_branch
        %192 = sbr.rel (%p189) target = $region66
      $region65: #{rfb_forward.12} parent=5 // pred_region
        %s193 = ssub.s32 %s9, 1
        %s194 = sand.u32 %s64, 1
        %s195 = sand.u32 %s64, 1
        %s196 = smul.addr %s195, 40
        %s197 = scalar_lea.vmem [#allocation2], %s196
        // Predicated region
        $region67: #{rfb_forward.12} parent=65 // pred_check
          %p198 = pneg %p77
        $region68: #{rfb_forward.12} parent=65 // pred_check_branch
          %200 = sbr.rel (%p198) target = $region70
        $region69: #{rfb_forward.12} parent=65 // pred_region
          _
        $region70: #{rfb_forward.12} parent=65 // pred_fallthru
          _
        %p201 = pneg %p30
        %p202 = pneg %p27
        %p203 = pneg %p51
        %p204 = pneg %p48
        %s205 = sand.u32 %s64, 1
        %s206 = sand.u32 %s64, 1
        %s207 = smul.addr %s206, 40
        %s208 = scalar_lea.vmem [#allocation2], %s207
        %p209 = pneg %p77
        %p210 = pneg %p74
        %p211 = pneg %p103
        %p212 = pneg %p100
        %s213 = smul.u32 2, %s14
        %p214 = scmp.lt.s32.totalorder %s213, 3
        %s215 = scalar_select %p214, %s213, 3
        %s216 = smul.addr %s215, 8
        %s217 = scalar_lea.vmem %s3, %s216
        %s218 = smul.u32 2, %s14
        %s219 = smul.u32 2, %s14
        %p220 = scmp.lt.s32.totalorder %s219, 3
        %s221 = scalar_select %p220, %s219, 3
        %s222 = smul.addr %s221, 8
        %s223 = scalar_lea.vmem %s3, %s222
        %s224 = smul.u32 2, %s14
        %v226 = vld [vmem:[%s0] sm:$0xf]
        %v227 = vld [vmem:[%s197] sm:$0xff]
        %v228 = vld [vmem:[%s197 + $0x8] sm:$0xff]
        %v229 = vld [vmem:[%s197 + $0x10] sm:$0xff]
        %v230 = vld [vmem:[%s197 + $0x18] sm:$0xff]
        %v231 = vld [vmem:[%s197 + $0x20] sm:$0xff]
        %v232 = vld [vmem:[%s1] sm:$0xff]
        %234 = vset.pattern.permute.xlu0 0
        %235 = vperm.xlu0 %234, %v232
        %v236 = vpop.permute.xlu0 %235
        %v243 = vunpack.c.l.b16 %v227
        %v244 = vunpack.c.h.b16 %v227
        %v245 = vunpack.c.l.b16 %v228
        %v246 = vunpack.c.h.b16 %v228
        %v247 = vunpack.c.l.b16 %v229
        %v248 = vunpack.c.h.b16 %v229
        %v249 = vunpack.c.l.b16 %v230
        %v250 = vunpack.c.h.b16 %v230
        %v251 = vunpack.c.l.b16 %v231
        %v252 = vunpack.c.h.b16 %v231
        %v253 = vpack.c.b16 %v245, %v243
        %v254 = vpack.c.b16 %v246, %v244
        %v255 = vpack.c.b16 %v249, %v247
        %v256 = vpack.c.b16 %v250, %v248
        %v257 = vpack.c.b16 %v251, %v251
        %v258 = vpack.c.b16 %v252, %v252
        %vm263 = vcmask 326656
        %v265 = vsel %vm263, %v226, 0
        %vm267 = vcmask 1043456
        %v269 = vsel %vm267, %v257, 0
        %v272 = vsel %vm267, %v258, 0
        %274 = vmatprep.subr.bf16.mxu0 0
        %275 = vmatpush1.bf16.msra.mxu0 0
        %276 = vmatprep.subr.bf16.mxu0 0
        %277 = vmatpush1.bf16.msra.mxu0 0
        %278 = vmatprep.subr.bf16.mxu0 0
        %279 = vmatpush1.bf16.msra.mxu0 0
        %280 = vmatprep.subr.bf16.mxu0 0
        %281 = vmatpush1.bf16.msra.mxu0 0
        %282 = vmatprep.subr.bf16.mxu0 0
        %283 = vmatpush1.bf16.msra.mxu0 0
        %284 = vmatprep.subr.bf16.mxu0 %v272
        %285 = vmatpush1.bf16.msra.mxu0 %v269
        %286 = vmatprep.subr.bf16.mxu0 %v256
        %287 = vmatpush1.bf16.msra.mxu0 %v255
        %288 = vmatprep.subr.bf16.mxu0 %v254
        %289 = vmatpush1.bf16.msra.mxu0 %v253
        %290 = vmatprep.subr.bf16.mxu0 0
        %291 = vmatpush2.bf16.msra.mxu0 0
        %292 = vmatprep.subr.bf16.mxu0 0
        %293 = vmatpush2.bf16.msra.mxu0 0
        %294 = vmatprep.subr.bf16.mxu0 0
        %295 = vmatpush2.bf16.msra.mxu0 0
        %296 = vmatprep.subr.bf16.mxu0 0
        %297 = vmatpush2.bf16.msra.mxu0 0
        %298 = vmatprep.subr.bf16.mxu0 0
        %299 = vmatpush2.bf16.msra.mxu0 0
        %300 = vmatprep.subr.bf16.mxu0 0
        %301 = vmatpush2.bf16.msra.mxu0 0
        %302 = vmatprep.subr.bf16.mxu0 0
        %303 = vmatpush2.bf16.msra.mxu0 0
        %304 = vmatprep.subr.bf16.mxu0 0
        %305 = vmatpush2.bf16.msra.mxu0 0
        %306 = vmatprep.mubr.bf16.mxu0 0
        %307 = vmatmul.mubr.bf16.gmra.mxu0 %v265
        %v308 = vpop.f32.mrf.mxu0
        %v309 = vadd.f32 %v236, %v308
        %v310 = vpop.f32.mrf.mxu0
        %v311 = vadd.f32 %v236, %v310
        %v312 = vpop.f32.mrf.mxu0
        %v313 = vpop.f32.mrf.mxu0
        %314 = vdwg.mxu0
        %315 = vst [vmem:[%s223] sm:$0xff] %v309
        %316 = vst [vmem:[%s223 + $0x8] sm:$0xff] %v311
        %s317 = smul.u32 2, %s14
        %p318 = scmp.lt.s32.totalorder %s317, 3
        %s319 = scalar_select %p318, %s317, 3
        %s320 = smul.addr %s319, 8
        %s321 = scalar_lea.vmem %s3, %s320
        // Predicated region
        $region71: #{rfb_forward.12} parent=65 // pred_check
          %p322 = pneg %p100
        $region72: #{rfb_forward.12} parent=65 // pred_check_branch
          %324 = sbr.rel (%p322) target = $region74
        $region73: #{rfb_forward.12} parent=65 // pred_region
          %s325 = smul.u32 2, %s14
        $region74: #{rfb_forward.12} parent=65 // pred_fallthru
          _
      $region66: #{rfb_forward.12} parent=5 // pred_fallthru
        _
      %p326 = scmp.le.s32.totalorder 2, %s9
      // Predicated region
      $region75: #{rfb_forward.12} parent=5 // pred_check
        %p327 = pneg %p326
      $region76: #{rfb_forward.12} parent=5 // pred_check_branch
        %329 = sbr.rel (%p327) target = $region78
      $region77: #{rfb_forward.12} parent=5 // pred_region
        %s330 = ssub.s32 %s9, 2
        // Predicated region
        $region79: #{rfb_forward.12} parent=77 // pred_check
          %p331 = pneg %p106
        $region80: #{rfb_forward.12} parent=77 // pred_check_branch
          %333 = sbr.rel (%p331) target = $region82
        $region81: #{rfb_forward.12} parent=77 // pred_region
          %s334 = smul.u32 2, %s15
          %p335 = scmp.lt.s32.totalorder %s334, 3
          %s336 = scalar_select %p335, %s334, 3
          %s337 = smul.addr %s336, 8
          %s338 = scalar_lea.vmem %s3, %s337
        $region82: #{rfb_forward.12} parent=77 // pred_fallthru
          _
      $region78: #{rfb_forward.12} parent=5 // pred_fallthru
        _
    $region6: #{rfb_forward.12} parent=1 // loop_footer
      %s13 = sadd.s32 1, %s9
    $region7: #{rfb_forward.12} parent=1 // loop_footer_branch
      %8 = sbr.rel target = $region3
    $region8: #{rfb_forward.12} parent=1 // loop_exit
      _

// kernel: rfb_forward.14
$region0: #{rfb_forward.14}
  #allocation0 [shape = 'u32[]', space=smem, size = 0x4, offset = 0x4, fixed_abs, tag = 'smem constant byte address 0x4 - core index']
  #allocation1 [shape = 'u32[144,128]{1,0:T(1,128)}', space=vmem, size = 0x12000, scoped, tag = 'internal scratch']
  %s0 = inlined_call_operand.vmem [shape: bf16[8,72], index: 0, kind: input, shape index: {}]
  %s1 = inlined_call_operand.vmem [shape: f32[8,1], index: 1, kind: input, shape index: {}]
  %s2 = inlined_call_operand.vmem [shape: bf16[72,512], index: 2, kind: input, shape index: {}]
  %s3 = inlined_call_operand.vmem [shape: f32[8,512], index: 3, kind: output, shape index: {}]
  %s4 = sld [smem:[#allocation0]]
  $region83: #{rfb_forward.14} parent=0
    _
  %s6 = ssub.s32 1, %s4
  %s7 = scalar_select 0, %s6, %s4
  $region1: #{rfb_forward.14} parent=0
    #allocation2 [shape = 'u8[73728]{0}', space=vmem, size = 0x12000, scoped, tag = 'input window, operand 2']
    loop: start=0, step=1, limit=4
    $region2: #{rfb_forward.14} parent=1 // loop_pre_header
      _
    $region3: #{rfb_forward.14} parent=1 // loop_header
      %s9 = sphi 0, %s13
      %p10 = scmp.ge.s32.totalorder %s9, 4
      %s17 = sphi 0, %s17
      %s19 = sphi 0, %s17
      %s20 = sphi 0, %s19
      %s34 = sphi 0, %s20
      %s38 = sphi 0, %s38
      %s40 = sphi 0, %s38
      %s41 = sphi 0, %s40
      %s55 = sphi 0, %s41
      %s61 = sphi 0, %s63
      %s64 = sphi 0, %s61
      %s65 = sphi 0, %s64
      %s81 = sphi 0, %s65
      %s87 = sphi 0, %s89
      %s90 = sphi 0, %s87
      %s91 = sphi 0, %s90
      %s107 = sphi 0, %s91
    $region4: #{rfb_forward.14} parent=1 // loop_header_branch
      %12 = sbr.rel (%p10) target = $region8
    $region5: #{rfb_forward.14} parent=1 // loop_body
      %s14 = ssub.s32 %s9, 1
      %s15 = ssub.s32 %s9, 2
      %s16 = sadd.s32 %s9, 1
      %s18 = sadd.s32 %s17, 1
      %p21 = scmp.eq.s32.totalorder %s9, 1
      %p22 = scmp.ne.s32.totalorder %s17, %s19
      %p23 = scmp.eq.s32.totalorder %s9, 0
      %p24 = por %p22, %p23
      %p25 = scmp.ne.s32.totalorder %s17, %s19
      %p26 = scmp.eq.s32.totalorder %s14, 1
      %p27 = por %p25, %p26
      %p28 = scmp.ne.s32.totalorder %s19, %s20
      %p29 = scmp.eq.s32.totalorder %s14, 0
      %p30 = por %p28, %p29
      %p31 = scmp.ne.s32.totalorder %s19, %s20
      %p32 = scmp.eq.s32.totalorder %s15, 1
      %p33 = por %p31, %p32
      %p35 = scmp.ne.s32.totalorder %s20, %s34
      %p36 = scmp.eq.s32.totalorder %s15, 0
      %p37 = por %p35, %p36
      %s39 = sadd.s32 %s38, 1
      %p42 = scmp.eq.s32.totalorder %s9, 1
      %p43 = scmp.ne.s32.totalorder %s38, %s40
      %p44 = scmp.eq.s32.totalorder %s9, 0
      %p45 = por %p43, %p44
      %p46 = scmp.ne.s32.totalorder %s38, %s40
      %p47 = scmp.eq.s32.totalorder %s14, 1
      %p48 = por %p46, %p47
      %p49 = scmp.ne.s32.totalorder %s40, %s41
      %p50 = scmp.eq.s32.totalorder %s14, 0
      %p51 = por %p49, %p50
      %p52 = scmp.ne.s32.totalorder %s40, %s41
      %p53 = scmp.eq.s32.totalorder %s15, 1
      %p54 = por %p52, %p53
      %p56 = scmp.ne.s32.totalorder %s41, %s55
      %p57 = scmp.eq.s32.totalorder %s15, 0
      %p58 = por %p56, %p57
      %s59 = ssub.s32 %s9, %s16
      %p60 = scmp.eq.s32.totalorder %s59, 0
      %s62 = sadd.s32 %s61, 1
      %s63 = scalar_select %p60, %s61, %s62
      %p66 = pneg %p60
      %p67 = scmp.eq.s32.totalorder %s9, 1
      %p68 = por %p66, %p67
      %p69 = scmp.ne.s32.totalorder %s61, %s64
      %p70 = scmp.eq.s32.totalorder %s9, 0
      %p71 = por %p69, %p70
      %p72 = scmp.ne.s32.totalorder %s61, %s64
      %p73 = scmp.eq.s32.totalorder %s14, 1
      %p74 = por %p72, %p73
      %p75 = scmp.ne.s32.totalorder %s64, %s65
      %p76 = scmp.eq.s32.totalorder %s14, 0
      %p77 = por %p75, %p76
      %p78 = scmp.ne.s32.totalorder %s64, %s65
      %p79 = scmp.eq.s32.totalorder %s15, 1
      %p80 = por %p78, %p79
      %p82 = scmp.ne.s32.totalorder %s65, %s81
      %p83 = scmp.eq.s32.totalorder %s15, 0
      %p84 = por %p82, %p83
      %s85 = ssub.s32 %s9, %s16
      %p86 = scmp.eq.s32.totalorder %s85, 0
      %s88 = sadd.s32 %s87, 1
      %s89 = scalar_select %p86, %s87, %s88
      %p92 = pneg %p86
      %p93 = scmp.eq.s32.totalorder %s9, 1
      %p94 = por %p92, %p93
      %p95 = scmp.ne.s32.totalorder %s87, %s90
      %p96 = scmp.eq.s32.totalorder %s9, 0
      %p97 = por %p95, %p96
      %p98 = scmp.ne.s32.totalorder %s87, %s90
      %p99 = scmp.eq.s32.totalorder %s14, 1
      %p100 = por %p98, %p99
      %p101 = scmp.ne.s32.totalorder %s90, %s91
      %p102 = scmp.eq.s32.totalorder %s14, 0
      %p103 = por %p101, %p102
      %p104 = scmp.ne.s32.totalorder %s90, %s91
      %p105 = scmp.eq.s32.totalorder %s15, 1
      %p106 = por %p104, %p105
      %p108 = scmp.ne.s32.totalorder %s91, %s107
      %p109 = scmp.eq.s32.totalorder %s15, 0
      %p110 = por %p108, %p109
      %p111 = scmp.le.s32.totalorder 1, %s9
      %p112 = scmp.lt.s32.totalorder %s9, 3
      %p113 = pnand %p111, %p112
      %p114 = pneg %p113
      // Predicated region
      $region9: #{rfb_forward.14} parent=5 // pred_check
        _
      $region10: #{rfb_forward.14} parent=5 // pred_check_branch
        %116 = sbr.rel (%p113) target = $region12
      $region11: #{rfb_forward.14} parent=5 // pred_region
        %s117 = ssub.s32 %s9, 1
        // Predicated region
        $region13: #{rfb_forward.14} parent=11 // pred_check
          %p118 = pneg %p30
        $region14: #{rfb_forward.14} parent=11 // pred_check_branch
          %120 = sbr.rel (%p118) target = $region16
        $region15: #{rfb_forward.14} parent=11 // pred_region
          _
        $region16: #{rfb_forward.14} parent=11 // pred_fallthru
          _
        // Predicated region
        $region17: #{rfb_forward.14} parent=11 // pred_check
          %p121 = pneg %p51
        $region18: #{rfb_forward.14} parent=11 // pred_check_branch
          %123 = sbr.rel (%p121) target = $region20
        $region19: #{rfb_forward.14} parent=11 // pred_region
          _
        $region20: #{rfb_forward.14} parent=11 // pred_fallthru
          _
      $region12: #{rfb_forward.14} parent=5 // pred_fallthru
        _
      %p124 = scmp.lt.s32.totalorder %s9, 2
      // Predicated region
      $region21: #{rfb_forward.14} parent=5 // pred_check
        %p125 = pneg %p124
      $region22: #{rfb_forward.14} parent=5 // pred_check_branch
        %127 = sbr.rel (%p125) target = $region24
      $region23: #{rfb_forward.14} parent=5 // pred_region
        // Predicated region
        $region25: #{rfb_forward.14} parent=23 // pred_check
          %p128 = pneg %p71
        $region26: #{rfb_forward.14} parent=23 // pred_check_branch
          %130 = sbr.rel (%p128) target = $region28
        $region27: #{rfb_forward.14} parent=23 // pred_region
          %s131 = sand.u32 %s61, 1
          %s132 = sand.u32 %s61, 1
          %s133 = smul.addr %s132, 72
          %s134 = scalar_lea.vmem [#allocation2], %s133
          %s135 = smul.u32 2, %s9
          %s136 = smul.addr %s135, 4
          %s137 = scalar_lea.vmem %s2, %s136
          // Predicated region
          $region29: #{rfb_forward.14} parent=27 // pred_check
            _
          $region30: #{rfb_forward.14} parent=27 // pred_check_branch
            %139 = sbr.rel (0) target = $region32
          $region31: #{rfb_forward.14} parent=27 // pred_region
            // Predicated region
            $region33: #{rfb_forward.14} parent=31 // pred_check
              _
            $region34: #{rfb_forward.14} parent=31 // pred_check_branch
              %141 = sbr.rel (0) target = $region36
            $region35: #{rfb_forward.14} parent=31 // pred_region
              // Predicated region
              $region48: #{rfb_forward.14} parent=35 // pred_check
                _
              $region49: #{rfb_forward.14} parent=35 // pred_check_branch
                %173 = sbr.rel (0) target = $region51
              $region50: #{rfb_forward.14} parent=35 // pred_region
                loop: start=0, step=1, limit=1
                $region52: #{rfb_forward.14} parent=50 // loop_pre_header
                  _
                $region53: #{rfb_forward.14} parent=50 // loop_header
                  %s175 = sphi 0, %s179
                  %p176 = scmp.ge.s32.totalorder %s175, 1
                  %s180 = sphi %s137, %s137
                  %s181 = sphi %s134, %s134
                $region54: #{rfb_forward.14} parent=50 // loop_header_branch
                  %178 = sbr.rel (%p176) target = $region58
                $region55: #{rfb_forward.14} parent=50 // loop_body
                  %v182 = vld [vmem:[%s180] sm:$0xff]
                  %183 = vst [vmem:[%s181] sm:$0xff] %v182
                  %v184 = vld [vmem:[%s180 + $0x10] sm:$0xff]
                  %185 = vst [vmem:[%s181 + $0x8] sm:$0xff] %v184
                  %v186 = vld [vmem:[%s180 + $0x20] sm:$0xff]
                  %187 = vst [vmem:[%s181 + $0x10] sm:$0xff] %v186
                  %v188 = vld [vmem:[%s180 + $0x30] sm:$0xff]
                  %189 = vst [vmem:[%s181 + $0x18] sm:$0xff] %v188
                  %v190 = vld [vmem:[%s180 + $0x40] sm:$0xff]
                  %191 = vst [vmem:[%s181 + $0x20] sm:$0xff] %v190
                  %v192 = vld [vmem:[%s180 + $0x50] sm:$0xff]
                  %193 = vst [vmem:[%s181 + $0x28] sm:$0xff] %v192
                  %v194 = vld [vmem:[%s180 + $0x60] sm:$0xff]
                  %195 = vst [vmem:[%s181 + $0x30] sm:$0xff] %v194
                  %v196 = vld [vmem:[%s180 + $0x70] sm:$0xff]
                  %197 = vst [vmem:[%s181 + $0x38] sm:$0xff] %v196
                  %v198 = vld [vmem:[%s180 + $0x80] sm:$0xff]
                  %199 = vst [vmem:[%s181 + $0x40] sm:$0xff] %v198
                $region56: #{rfb_forward.14} parent=50 // loop_footer
                  %s179 = sadd.s32 1, %s175
                $region57: #{rfb_forward.14} parent=50 // loop_footer_branch
                  %174 = sbr.rel target = $region53
                $region58: #{rfb_forward.14} parent=50 // loop_exit
                  _
              $region51: #{rfb_forward.14} parent=35 // pred_fallthru
                _
              // Predicated region
              $region59: #{rfb_forward.14} parent=35 // pred_check
                _
              $region60: #{rfb_forward.14} parent=35 // pred_check_branch
                %201 = sbr.rel target = $region62
              $region61: #{rfb_forward.14} parent=35 // pred_region
                _
              $region62: #{rfb_forward.14} parent=35 // pred_fallthru
                _
            $region36: #{rfb_forward.14} parent=31 // pred_fallthru
              _
            // Predicated region
            $region37: #{rfb_forward.14} parent=31 // pred_check
              _
            $region38: #{rfb_forward.14} parent=31 // pred_check_branch
              %143 = sbr.rel target = $region40
            $region39: #{rfb_forward.14} parent=31 // pred_region
              %s145 = ssub.s32 256, 1
              loop: start=0, step=1, limit=1
              $region41: #{rfb_forward.14} parent=39 // loop_pre_header
                _
              $region42: #{rfb_forward.14} parent=39 // loop_header
                %s147 = sphi 0, %s151
                %p148 = scmp.ge.s32.totalorder %s147, 1
                %s152 = sphi %s137, %s137
                %s153 = sphi %s134, %s134
              $region43: #{rfb_forward.14} parent=39 // loop_header_branch
                %150 = sbr.rel (%p148) target = $region47
              $region44: #{rfb_forward.14} parent=39 // loop_body
                %v154 = vld [vmem:[%s152] sm:%s145]
                %155 = vst [vmem:[%s153] sm:%s145] %v154
                %v156 = vld [vmem:[%s152 + $0x10] sm:%s145]
                %157 = vst [vmem:[%s153 + $0x8] sm:%s145] %v156
                %v158 = vld [vmem:[%s152 + $0x20] sm:%s145]
                %159 = vst [vmem:[%s153 + $0x10] sm:%s145] %v158
                %v160 = vld [vmem:[%s152 + $0x30] sm:%s145]
                %161 = vst [vmem:[%s153 + $0x18] sm:%s145] %v160
                %v162 = vld [vmem:[%s152 + $0x40] sm:%s145]
                %163 = vst [vmem:[%s153 + $0x20] sm:%s145] %v162
                %v164 = vld [vmem:[%s152 + $0x50] sm:%s145]
                %165 = vst [vmem:[%s153 + $0x28] sm:%s145] %v164
                %v166 = vld [vmem:[%s152 + $0x60] sm:%s145]
                %167 = vst [vmem:[%s153 + $0x30] sm:%s145] %v166
                %v168 = vld [vmem:[%s152 + $0x70] sm:%s145]
                %169 = vst [vmem:[%s153 + $0x38] sm:%s145] %v168
                %v170 = vld [vmem:[%s152 + $0x80] sm:%s145]
                %171 = vst [vmem:[%s153 + $0x40] sm:%s145] %v170
              $region45: #{rfb_forward.14} parent=39 // loop_footer
                %s151 = sadd.s32 1, %s147
              $region46: #{rfb_forward.14} parent=39 // loop_footer_branch
                %146 = sbr.rel target = $region42
              $region47: #{rfb_forward.14} parent=39 // loop_exit
                _
            $region40: #{rfb_forward.14} parent=31 // pred_fallthru
              _
          $region32: #{rfb_forward.14} parent=27 // pred_fallthru
            _
          %202 = vnop
        $region28: #{rfb_forward.14} parent=23 // pred_fallthru
          _
      $region24: #{rfb_forward.14} parent=5 // pred_fallthru
        _
      %p203 = scmp.le.s32.totalorder 1, %s9
      %p204 = scmp.lt.s32.totalorder %s9, 3
      %p205 = pnand %p203, %p204
      %p206 = pneg %p205
      // Predicated region
      $region63: #{rfb_forward.14} parent=5 // pred_check
        _
      $region64: #{rfb_forward.14} parent=5 // pred_check_branch
        %208 = sbr.rel (%p205) target = $region66
      $region65: #{rfb_forward.14} parent=5 // pred_region
        %s209 = ssub.s32 %s9, 1
        %s210 = sand.u32 %s64, 1
        %s211 = sand.u32 %s64, 1
        %s212 = smul.addr %s211, 72
        %s213 = scalar_lea.vmem [#allocation2], %s212
        // Predicated region
        $region67: #{rfb_forward.14} parent=65 // pred_check
          %p214 = pneg %p77
        $region68: #{rfb_forward.14} parent=65 // pred_check_branch
          %216 = sbr.rel (%p214) target = $region70
        $region69: #{rfb_forward.14} parent=65 // pred_region
          _
        $region70: #{rfb_forward.14} parent=65 // pred_fallthru
          _
        %p217 = pneg %p30
        %p218 = pneg %p27
        %p219 = pneg %p51
        %p220 = pneg %p48
        %s221 = sand.u32 %s64, 1
        %s222 = sand.u32 %s64, 1
        %s223 = smul.addr %s222, 72
        %s224 = scalar_lea.vmem [#allocation2], %s223
        %p225 = pneg %p77
        %p226 = pneg %p74
        %p227 = pneg %p103
        %p228 = pneg %p100
        %s229 = smul.u32 2, %s14
        %p230 = scmp.lt.s32.totalorder %s229, 3
        %s231 = scalar_select %p230, %s229, 3
        %s232 = smul.addr %s231, 8
        %s233 = scalar_lea.vmem %s3, %s232
        %s234 = smul.u32 2, %s14
        %s235 = smul.u32 2, %s14
        %p236 = scmp.lt.s32.totalorder %s235, 3
        %s237 = scalar_select %p236, %s235, 3
        %s238 = smul.addr %s237, 8
        %s239 = scalar_lea.vmem %s3, %s238
        %s240 = smul.u32 2, %s14
        %v242 = vld [vmem:[%s0] sm:$0xf]
        %v243 = vld [vmem:[%s213] sm:$0xff]
        %v244 = vld [vmem:[%s213 + $0x8] sm:$0xff]
        %v245 = vld [vmem:[%s213 + $0x10] sm:$0xff]
        %v246 = vld [vmem:[%s213 + $0x18] sm:$0xff]
        %v247 = vld [vmem:[%s213 + $0x20] sm:$0xff]
        %v248 = vld [vmem:[%s213 + $0x28] sm:$0xff]
        %v249 = vld [vmem:[%s213 + $0x30] sm:$0xff]
        %v250 = vld [vmem:[%s213 + $0x38] sm:$0xff]
        %v251 = vld [vmem:[%s213 + $0x40] sm:$0xff]
        %v252 = vld [vmem:[%s1] sm:$0xff]
        %254 = vset.pattern.permute.xlu0 0
        %255 = vperm.xlu0 %254, %v252
        %v256 = vpop.permute.xlu0 %255
        %v267 = vunpack.c.l.b16 %v243
        %v268 = vunpack.c.h.b16 %v243
        %v269 = vunpack.c.l.b16 %v244
        %v270 = vunpack.c.h.b16 %v244
        %v271 = vunpack.c.l.b16 %v245
        %v272 = vunpack.c.h.b16 %v245
        %v273 = vunpack.c.l.b16 %v246
        %v274 = vunpack.c.h.b16 %v246
        %v275 = vunpack.c.l.b16 %v247
        %v276 = vunpack.c.h.b16 %v247
        %v277 = vunpack.c.l.b16 %v248
        %v278 = vunpack.c.h.b16 %v248
        %v279 = vunpack.c.l.b16 %v249
        %v280 = vunpack.c.h.b16 %v249
        %v281 = vunpack.c.l.b16 %v250
        %v282 = vunpack.c.h.b16 %v250
        %v283 = vunpack.c.l.b16 %v251
        %v284 = vunpack.c.h.b16 %v251
        %v285 = vpack.c.b16 %v269, %v267
        %v286 = vpack.c.b16 %v270, %v268
        %v287 = vpack.c.b16 %v273, %v271
        %v288 = vpack.c.b16 %v274, %v272
        %v289 = vpack.c.b16 %v277, %v275
        %v290 = vpack.c.b16 %v278, %v276
        %v291 = vpack.c.b16 %v281, %v279
        %v292 = vpack.c.b16 %v282, %v280
        %v293 = vpack.c.b16 %v283, %v283
        %v294 = vpack.c.b16 %v284, %v284
        %vm303 = vcmask 588800
        %v305 = vsel %vm303, %v242, 0
        %vm307 = vcmask 1043456
        %v309 = vsel %vm307, %v293, 0
        %v312 = vsel %vm307, %v294, 0
        %314 = vmatprep.subr.bf16.mxu0 0
        %315 = vmatpush1.bf16.msra.mxu0 0
        %316 = vmatprep.subr.bf16.mxu0 0
        %317 = vmatpush1.bf16.msra.mxu0 0
        %318 = vmatprep.subr.bf16.mxu0 0
        %319 = vmatpush1.bf16.msra.mxu0 0
        %320 = vmatprep.subr.bf16.mxu0 %v312
        %321 = vmatpush1.bf16.msra.mxu0 %v309
        %322 = vmatprep.subr.bf16.mxu0 %v292
        %323 = vmatpush1.bf16.msra.mxu0 %v291
        %324 = vmatprep.subr.bf16.mxu0 %v290
        %325 = vmatpush1.bf16.msra.mxu0 %v289
        %326 = vmatprep.subr.bf16.mxu0 %v288
        %327 = vmatpush1.bf16.msra.mxu0 %v287
        %328 = vmatprep.subr.bf16.mxu0 %v286
        %329 = vmatpush1.bf16.msra.mxu0 %v285
        %330 = vmatprep.subr.bf16.mxu0 0
        %331 = vmatpush2.bf16.msra.mxu0 0
        %332 = vmatprep.subr.bf16.mxu0 0
        %333 = vmatpush2.bf16.msra.mxu0 0
        %334 = vmatprep.subr.bf16.mxu0 0
        %335 = vmatpush2.bf16.msra.mxu0 0
        %336 = vmatprep.subr.bf16.mxu0 0
        %337 = vmatpush2.bf16.msra.mxu0 0
        %338 = vmatprep.subr.bf16.mxu0 0
        %339 = vmatpush2.bf16.msra.mxu0 0
        %340 = vmatprep.subr.bf16.mxu0 0
        %341 = vmatpush2.bf16.msra.mxu0 0
        %342 = vmatprep.subr.bf16.mxu0 0
        %343 = vmatpush2.bf16.msra.mxu0 0
        %344 = vmatprep.subr.bf16.mxu0 0
        %345 = vmatpush2.bf16.msra.mxu0 0
        %346 = vmatprep.mubr.bf16.mxu0 0
        %347 = vmatmul.mubr.bf16.gmra.mxu0 %v305
        %v348 = vpop.f32.mrf.mxu0
        %v349 = vadd.f32 %v256, %v348
        %v350 = vpop.f32.mrf.mxu0
        %v351 = vadd.f32 %v256, %v350
        %v352 = vpop.f32.mrf.mxu0
        %v353 = vpop.f32.mrf.mxu0
        %354 = vdwg.mxu0
        %355 = vst [vmem:[%s239] sm:$0xff] %v349
        %356 = vst [vmem:[%s239 + $0x8] sm:$0xff] %v351
        %s357 = smul.u32 2, %s14
        %p358 = scmp.lt.s32.totalorder %s357, 3
        %s359 = scalar_select %p358, %s357, 3
        %s360 = smul.addr %s359, 8
        %s361 = scalar_lea.vmem %s3, %s360
        // Predicated region
        $region71: #{rfb_forward.14} parent=65 // pred_check
          %p362 = pneg %p100
        $region72: #{rfb_forward.14} parent=65 // pred_check_branch
          %364 = sbr.rel (%p362) target = $region74
        $region73: #{rfb_forward.14} parent=65 // pred_region
          %s365 = smul.u32 2, %s14
        $region74: #{rfb_forward.14} parent=65 // pred_fallthru
          _
      $region66: #{rfb_forward.14} parent=5 // pred_fallthru
        _
      %p366 = scmp.le.s32.totalorder 2, %s9
      // Predicated region
      $region75: #{rfb_forward.14} parent=5 // pred_check
        %p367 = pneg %p366
      $region76: #{rfb_forward.14} parent=5 // pred_check_branch
        %369 = sbr.rel (%p367) target = $region78
      $region77: #{rfb_forward.14} parent=5 // pred_region
        %s370 = ssub.s32 %s9, 2
        // Predicated region
        $region79: #{rfb_forward.14} parent=77 // pred_check
          %p371 = pneg %p106
        $region80: #{rfb_forward.14} parent=77 // pred_check_branch
          %373 = sbr.rel (%p371) target = $region82
        $region81: #{rfb_forward.14} parent=77 // pred_region
          %s374 = smul.u32 2, %s15
          %p375 = scmp.lt.s32.totalorder %s374, 3
          %s376 = scalar_select %p375, %s374, 3
          %s377 = smul.addr %s376, 8
          %s378 = scalar_lea.vmem %s3, %s377
        $region82: #{rfb_forward.14} parent=77 // pred_fallthru
          _
      $region78: #{rfb_forward.14} parent=5 // pred_fallthru
        _
    $region6: #{rfb_forward.14} parent=1 // loop_footer
      %s13 = sadd.s32 1, %s9
    $region7: #{rfb_forward.14} parent=1 // loop_footer_branch
      %8 = sbr.rel target = $region3
    $region8: #{rfb_forward.14} parent=1 // loop_exit
      _

// kernel: rfb_forward.15
$region0: #{rfb_forward.15}
  #allocation0 [shape = 'u32[]', space=smem, size = 0x4, offset = 0x4, fixed_abs, tag = 'smem constant byte address 0x4 - core index']
  #allocation1 [shape = 'u32[144,128]{1,0:T(1,128)}', space=vmem, size = 0x12000, scoped, tag = 'internal scratch']
  %s0 = inlined_call_operand.vmem [shape: bf16[8,216], index: 0, kind: input, shape index: {}]
  %s1 = inlined_call_operand.vmem [shape: f32[8,1], index: 1, kind: input, shape index: {}]
  %s2 = inlined_call_operand.vmem [shape: bf16[216,512], index: 2, kind: input, shape index: {}]
  %s3 = inlined_call_operand.vmem [shape: f32[8,512], index: 3, kind: input, shape index: {}]
  %s4 = inlined_call_operand.vmem [shape: f32[8,512], index: 4, kind: output, shape index: {}]
  %s5 = sld [smem:[#allocation0]]
  $region87: #{rfb_forward.15} parent=0
    _
  %s7 = ssub.s32 1, %s5
  %s8 = scalar_select 0, %s7, %s5
  $region1: #{rfb_forward.15} parent=0
    #allocation2 [shape = 'u8[221184]{0}', space=vmem, size = 0x36000, scoped, tag = 'input window, operand 2']
    loop: start=0, step=1, limit=4
    $region2: #{rfb_forward.15} parent=1 // loop_pre_header
      _
    $region3: #{rfb_forward.15} parent=1 // loop_header
      %s10 = sphi 0, %s14
      %p11 = scmp.ge.s32.totalorder %s10, 4
      %s18 = sphi 0, %s18
      %s20 = sphi 0, %s18
      %s21 = sphi 0, %s20
      %s35 = sphi 0, %s21
      %s39 = sphi 0, %s39
      %s41 = sphi 0, %s39
      %s42 = sphi 0, %s41
      %s56 = sphi 0, %s42
      %s62 = sphi 0, %s64
      %s65 = sphi 0, %s62
      %s66 = sphi 0, %s65
      %s82 = sphi 0, %s66
      %s88 = sphi 0, %s90
      %s91 = sphi 0, %s88
      %s92 = sphi 0, %s91
      %s108 = sphi 0, %s92
      %s114 = sphi 0, %s116
      %s117 = sphi 0, %s114
      %s118 = sphi 0, %s117
      %s134 = sphi 0, %s118
    $region4: #{rfb_forward.15} parent=1 // loop_header_branch
      %13 = sbr.rel (%p11) target = $region8
    $region5: #{rfb_forward.15} parent=1 // loop_body
      %s15 = ssub.s32 %s10, 1
      %s16 = ssub.s32 %s10, 2
      %s17 = sadd.s32 %s10, 1
      %s19 = sadd.s32 %s18, 1
      %p22 = scmp.eq.s32.totalorder %s10, 1
      %p23 = scmp.ne.s32.totalorder %s18, %s20
      %p24 = scmp.eq.s32.totalorder %s10, 0
      %p25 = por %p23, %p24
      %p26 = scmp.ne.s32.totalorder %s18, %s20
      %p27 = scmp.eq.s32.totalorder %s15, 1
      %p28 = por %p26, %p27
      %p29 = scmp.ne.s32.totalorder %s20, %s21
      %p30 = scmp.eq.s32.totalorder %s15, 0
      %p31 = por %p29, %p30
      %p32 = scmp.ne.s32.totalorder %s20, %s21
      %p33 = scmp.eq.s32.totalorder %s16, 1
      %p34 = por %p32, %p33
      %p36 = scmp.ne.s32.totalorder %s21, %s35
      %p37 = scmp.eq.s32.totalorder %s16, 0
      %p38 = por %p36, %p37
      %s40 = sadd.s32 %s39, 1
      %p43 = scmp.eq.s32.totalorder %s10, 1
      %p44 = scmp.ne.s32.totalorder %s39, %s41
      %p45 = scmp.eq.s32.totalorder %s10, 0
      %p46 = por %p44, %p45
      %p47 = scmp.ne.s32.totalorder %s39, %s41
      %p48 = scmp.eq.s32.totalorder %s15, 1
      %p49 = por %p47, %p48
      %p50 = scmp.ne.s32.totalorder %s41, %s42
      %p51 = scmp.eq.s32.totalorder %s15, 0
      %p52 = por %p50, %p51
      %p53 = scmp.ne.s32.totalorder %s41, %s42
      %p54 = scmp.eq.s32.totalorder %s16, 1
      %p55 = por %p53, %p54
      %p57 = scmp.ne.s32.totalorder %s42, %s56
      %p58 = scmp.eq.s32.totalorder %s16, 0
      %p59 = por %p57, %p58
      %s60 = ssub.s32 %s10, %s17
      %p61 = scmp.eq.s32.totalorder %s60, 0
      %s63 = sadd.s32 %s62, 1
      %s64 = scalar_select %p61, %s62, %s63
      %p67 = pneg %p61
      %p68 = scmp.eq.s32.totalorder %s10, 1
      %p69 = por %p67, %p68
      %p70 = scmp.ne.s32.totalorder %s62, %s65
      %p71 = scmp.eq.s32.totalorder %s10, 0
      %p72 = por %p70, %p71
      %p73 = scmp.ne.s32.totalorder %s62, %s65
      %p74 = scmp.eq.s32.totalorder %s15, 1
      %p75 = por %p73, %p74
      %p76 = scmp.ne.s32.totalorder %s65, %s66
      %p77 = scmp.eq.s32.totalorder %s15, 0
      %p78 = por %p76, %p77
      %p79 = scmp.ne.s32.totalorder %s65, %s66
      %p80 = scmp.eq.s32.totalorder %s16, 1
      %p81 = por %p79, %p80
      %p83 = scmp.ne.s32.totalorder %s66, %s82
      %p84 = scmp.eq.s32.totalorder %s16, 0
      %p85 = por %p83, %p84
      %s86 = ssub.s32 %s10, %s17
      %p87 = scmp.eq.s32.totalorder %s86, 0
      %s89 = sadd.s32 %s88, 1
      %s90 = scalar_select %p87, %s88, %s89
      %p93 = pneg %p87
      %p94 = scmp.eq.s32.totalorder %s10, 1
      %p95 = por %p93, %p94
      %p96 = scmp.ne.s32.totalorder %s88, %s91
      %p97 = scmp.eq.s32.totalorder %s10, 0
      %p98 = por %p96, %p97
      %p99 = scmp.ne.s32.totalorder %s88, %s91
      %p100 = scmp.eq.s32.totalorder %s15, 1
      %p101 = por %p99, %p100
      %p102 = scmp.ne.s32.totalorder %s91, %s92
      %p103 = scmp.eq.s32.totalorder %s15, 0
      %p104 = por %p102, %p103
      %p105 = scmp.ne.s32.totalorder %s91, %s92
      %p106 = scmp.eq.s32.totalorder %s16, 1
      %p107 = por %p105, %p106
      %p109 = scmp.ne.s32.totalorder %s92, %s108
      %p110 = scmp.eq.s32.totalorder %s16, 0
      %p111 = por %p109, %p110
      %s112 = ssub.s32 %s10, %s17
      %p113 = scmp.eq.s32.totalorder %s112, 0
      %s115 = sadd.s32 %s114, 1
      %s116 = scalar_select %p113, %s114, %s115
      %p119 = pneg %p113
      %p120 = scmp.eq.s32.totalorder %s10, 1
      %p121 = por %p119, %p120
      %p122 = scmp.ne.s32.totalorder %s114, %s117
      %p123 = scmp.eq.s32.totalorder %s10, 0
      %p124 = por %p122, %p123
      %p125 = scmp.ne.s32.totalorder %s114, %s117
      %p126 = scmp.eq.s32.totalorder %s15, 1
      %p127 = por %p125, %p126
      %p128 = scmp.ne.s32.totalorder %s117, %s118
      %p129 = scmp.eq.s32.totalorder %s15, 0
      %p130 = por %p128, %p129
      %p131 = scmp.ne.s32.totalorder %s117, %s118
      %p132 = scmp.eq.s32.totalorder %s16, 1
      %p133 = por %p131, %p132
      %p135 = scmp.ne.s32.totalorder %s118, %s134
      %p136 = scmp.eq.s32.totalorder %s16, 0
      %p137 = por %p135, %p136
      %p138 = scmp.le.s32.totalorder 1, %s10
      %p139 = scmp.lt.s32.totalorder %s10, 3
      %p140 = pnand %p138, %p139
      %p141 = pneg %p140
      // Predicated region
      $region9: #{rfb_forward.15} parent=5 // pred_check
        _
      $region10: #{rfb_forward.15} parent=5 // pred_check_branch
        %143 = sbr.rel (%p140) target = $region12
      $region11: #{rfb_forward.15} parent=5 // pred_region
        %s144 = ssub.s32 %s10, 1
        // Predicated region
        $region13: #{rfb_forward.15} parent=11 // pred_check
          %p145 = pneg %p31
        $region14: #{rfb_forward.15} parent=11 // pred_check_branch
          %147 = sbr.rel (%p145) target = $region16
        $region15: #{rfb_forward.15} parent=11 // pred_region
          _
        $region16: #{rfb_forward.15} parent=11 // pred_fallthru
          _
        // Predicated region
        $region17: #{rfb_forward.15} parent=11 // pred_check
          %p148 = pneg %p52
        $region18: #{rfb_forward.15} parent=11 // pred_check_branch
          %150 = sbr.rel (%p148) target = $region20
        $region19: #{rfb_forward.15} parent=11 // pred_region
          _
        $region20: #{rfb_forward.15} parent=11 // pred_fallthru
          _
      $region12: #{rfb_forward.15} parent=5 // pred_fallthru
        _
      %p151 = scmp.lt.s32.totalorder %s10, 2
      // Predicated region
      $region21: #{rfb_forward.15} parent=5 // pred_check
        %p152 = pneg %p151
      $region22: #{rfb_forward.15} parent=5 // pred_check_branch
        %154 = sbr.rel (%p152) target = $region24
      $region23: #{rfb_forward.15} parent=5 // pred_region
        // Predicated region
        $region25: #{rfb_forward.15} parent=23 // pred_check
          %p155 = pneg %p72
        $region26: #{rfb_forward.15} parent=23 // pred_check_branch
          %157 = sbr.rel (%p155) target = $region28
        $region27: #{rfb_forward.15} parent=23 // pred_region
          %s158 = sand.u32 %s62, 1
          %s159 = sand.u32 %s62, 1
          %s160 = smul.addr %s159, 216
          %s161 = scalar_lea.vmem [#allocation2], %s160
          %s162 = smul.u32 2, %s10
          %s163 = smul.addr %s162, 4
          %s164 = scalar_lea.vmem %s2, %s163
          // Predicated region
          $region29: #{rfb_forward.15} parent=27 // pred_check
            _
          $region30: #{rfb_forward.15} parent=27 // pred_check_branch
            %166 = sbr.rel (0) target = $region32
          $region31: #{rfb_forward.15} parent=27 // pred_region
            // Predicated region
            $region33: #{rfb_forward.15} parent=31 // pred_check
              _
            $region34: #{rfb_forward.15} parent=31 // pred_check_branch
              %168 = sbr.rel (0) target = $region36
            $region35: #{rfb_forward.15} parent=31 // pred_region
              // Predicated region
              $region48: #{rfb_forward.15} parent=35 // pred_check
                _
              $region49: #{rfb_forward.15} parent=35 // pred_check_branch
                %236 = sbr.rel (0) target = $region51
              $region50: #{rfb_forward.15} parent=35 // pred_region
                loop: start=0, step=1, limit=1
                $region52: #{rfb_forward.15} parent=50 // loop_pre_header
                  _
                $region53: #{rfb_forward.15} parent=50 // loop_header
                  %s238 = sphi 0, %s242
                  %p239 = scmp.ge.s32.totalorder %s238, 1
                  %s243 = sphi %s164, %s164
                  %s244 = sphi %s161, %s161
                $region54: #{rfb_forward.15} parent=50 // loop_header_branch
                  %241 = sbr.rel (%p239) target = $region58
                $region55: #{rfb_forward.15} parent=50 // loop_body
                  %v245 = vld [vmem:[%s243] sm:$0xff]
                  %246 = vst [vmem:[%s244] sm:$0xff] %v245
                  %v247 = vld [vmem:[%s243 + $0x10] sm:$0xff]
                  %248 = vst [vmem:[%s244 + $0x8] sm:$0xff] %v247
                  %v249 = vld [vmem:[%s243 + $0x20] sm:$0xff]
                  %250 = vst [vmem:[%s244 + $0x10] sm:$0xff] %v249
                  %v251 = vld [vmem:[%s243 + $0x30] sm:$0xff]
                  %252 = vst [vmem:[%s244 + $0x18] sm:$0xff] %v251
                  %v253 = vld [vmem:[%s243 + $0x40] sm:$0xff]
                  %254 = vst [vmem:[%s244 + $0x20] sm:$0xff] %v253
                  %v255 = vld [vmem:[%s243 + $0x50] sm:$0xff]
                  %256 = vst [vmem:[%s244 + $0x28] sm:$0xff] %v255
                  %v257 = vld [vmem:[%s243 + $0x60] sm:$0xff]
                  %258 = vst [vmem:[%s244 + $0x30] sm:$0xff] %v257
                  %v259 = vld [vmem:[%s243 + $0x70] sm:$0xff]
                  %260 = vst [vmem:[%s244 + $0x38] sm:$0xff] %v259
                  %v261 = vld [vmem:[%s243 + $0x80] sm:$0xff]
                  %262 = vst [vmem:[%s244 + $0x40] sm:$0xff] %v261
                  %v263 = vld [vmem:[%s243 + $0x90] sm:$0xff]
                  %264 = vst [vmem:[%s244 + $0x48] sm:$0xff] %v263
                  %v265 = vld [vmem:[%s243 + $0xa0] sm:$0xff]
                  %266 = vst [vmem:[%s244 + $0x50] sm:$0xff] %v265
                  %v267 = vld [vmem:[%s243 + $0xb0] sm:$0xff]
                  %268 = vst [vmem:[%s244 + $0x58] sm:$0xff] %v267
                  %v269 = vld [vmem:[%s243 + $0xc0] sm:$0xff]
                  %270 = vst [vmem:[%s244 + $0x60] sm:$0xff] %v269
                  %v271 = vld [vmem:[%s243 + $0xd0] sm:$0xff]
                  %272 = vst [vmem:[%s244 + $0x68] sm:$0xff] %v271
                  %v273 = vld [vmem:[%s243 + $0xe0] sm:$0xff]
                  %274 = vst [vmem:[%s244 + $0x70] sm:$0xff] %v273
                  %v275 = vld [vmem:[%s243 + $0xf0] sm:$0xff]
                  %276 = vst [vmem:[%s244 + $0x78] sm:$0xff] %v275
                  %v277 = vld [vmem:[%s243 + $0x100] sm:$0xff]
                  %278 = vst [vmem:[%s244 + $0x80] sm:$0xff] %v277
                  %v279 = vld [vmem:[%s243 + $0x110] sm:$0xff]
                  %280 = vst [vmem:[%s244 + $0x88] sm:$0xff] %v279
                  %v281 = vld [vmem:[%s243 + $0x120] sm:$0xff]
                  %282 = vst [vmem:[%s244 + $0x90] sm:$0xff] %v281
                  %v283 = vld [vmem:[%s243 + $0x130] sm:$0xff]
                  %284 = vst [vmem:[%s244 + $0x98] sm:$0xff] %v283
                  %v285 = vld [vmem:[%s243 + $0x140] sm:$0xff]
                  %286 = vst [vmem:[%s244 + $0xa0] sm:$0xff] %v285
                  %v287 = vld [vmem:[%s243 + $0x150] sm:$0xff]
                  %288 = vst [vmem:[%s244 + $0xa8] sm:$0xff] %v287
                  %v289 = vld [vmem:[%s243 + $0x160] sm:$0xff]
                  %290 = vst [vmem:[%s244 + $0xb0] sm:$0xff] %v289
                  %v291 = vld [vmem:[%s243 + $0x170] sm:$0xff]
                  %292 = vst [vmem:[%s244 + $0xb8] sm:$0xff] %v291
                  %v293 = vld [vmem:[%s243 + $0x180] sm:$0xff]
                  %294 = vst [vmem:[%s244 + $0xc0] sm:$0xff] %v293
                  %v295 = vld [vmem:[%s243 + $0x190] sm:$0xff]
                  %296 = vst [vmem:[%s244 + $0xc8] sm:$0xff] %v295
                  %v297 = vld [vmem:[%s243 + $0x1a0] sm:$0xff]
                  %298 = vst [vmem:[%s244 + $0xd0] sm:$0xff] %v297
                $region56: #{rfb_forward.15} parent=50 // loop_footer
                  %s242 = sadd.s32 1, %s238
                $region57: #{rfb_forward.15} parent=50 // loop_footer_branch
                  %237 = sbr.rel target = $region53
                $region58: #{rfb_forward.15} parent=50 // loop_exit
                  _
              $region51: #{rfb_forward.15} parent=35 // pred_fallthru
                _
              // Predicated region
              $region59: #{rfb_forward.15} parent=35 // pred_check
                _
              $region60: #{rfb_forward.15} parent=35 // pred_check_branch
                %300 = sbr.rel target = $region62
              $region61: #{rfb_forward.15} parent=35 // pred_region
                _
              $region62: #{rfb_forward.15} parent=35 // pred_fallthru
                _
            $region36: #{rfb_forward.15} parent=31 // pred_fallthru
              _
            // Predicated region
            $region37: #{rfb_forward.15} parent=31 // pred_check
              _
            $region38: #{rfb_forward.15} parent=31 // pred_check_branch
              %170 = sbr.rel target = $region40
            $region39: #{rfb_forward.15} parent=31 // pred_region
              %s172 = ssub.s32 256, 1
              loop: start=0, step=1, limit=1
              $region41: #{rfb_forward.15} parent=39 // loop_pre_header
                _
              $region42: #{rfb_forward.15} parent=39 // loop_header
                %s174 = sphi 0, %s178
                %p175 = scmp.ge.s32.totalorder %s174, 1
                %s179 = sphi %s164, %s164
                %s180 = sphi %s161, %s161
              $region43: #{rfb_forward.15} parent=39 // loop_header_branch
                %177 = sbr.rel (%p175) target = $region47
              $region44: #{rfb_forward.15} parent=39 // loop_body
                %v181 = vld [vmem:[%s179] sm:%s172]
                %182 = vst [vmem:[%s180] sm:%s172] %v181
                %v183 = vld [vmem:[%s179 + $0x10] sm:%s172]
                %184 = vst [vmem:[%s180 + $0x8] sm:%s172] %v183
                %v185 = vld [vmem:[%s179 + $0x20] sm:%s172]
                %186 = vst [vmem:[%s180 + $0x10] sm:%s172] %v185
                %v187 = vld [vmem:[%s179 + $0x30] sm:%s172]
                %188 = vst [vmem:[%s180 + $0x18] sm:%s172] %v187
                %v189 = vld [vmem:[%s179 + $0x40] sm:%s172]
                %190 = vst [vmem:[%s180 + $0x20] sm:%s172] %v189
                %v191 = vld [vmem:[%s179 + $0x50] sm:%s172]
                %192 = vst [vmem:[%s180 + $0x28] sm:%s172] %v191
                %v193 = vld [vmem:[%s179 + $0x60] sm:%s172]
                %194 = vst [vmem:[%s180 + $0x30] sm:%s172] %v193
                %v195 = vld [vmem:[%s179 + $0x70] sm:%s172]
                %196 = vst [vmem:[%s180 + $0x38] sm:%s172] %v195
                %v197 = vld [vmem:[%s179 + $0x80] sm:%s172]
                %198 = vst [vmem:[%s180 + $0x40] sm:%s172] %v197
                %v199 = vld [vmem:[%s179 + $0x90] sm:%s172]
                %200 = vst [vmem:[%s180 + $0x48] sm:%s172] %v199
                %v201 = vld [vmem:[%s179 + $0xa0] sm:%s172]
                %202 = vst [vmem:[%s180 + $0x50] sm:%s172] %v201
                %v203 = vld [vmem:[%s179 + $0xb0] sm:%s172]
                %204 = vst [vmem:[%s180 + $0x58] sm:%s172] %v203
                %v205 = vld [vmem:[%s179 + $0xc0] sm:%s172]
                %206 = vst [vmem:[%s180 + $0x60] sm:%s172] %v205
                %v207 = vld [vmem:[%s179 + $0xd0] sm:%s172]
                %208 = vst [vmem:[%s180 + $0x68] sm:%s172] %v207
                %v209 = vld [vmem:[%s179 + $0xe0] sm:%s172]
                %210 = vst [vmem:[%s180 + $0x70] sm:%s172] %v209
                %v211 = vld [vmem:[%s179 + $0xf0] sm:%s172]
                %212 = vst [vmem:[%s180 + $0x78] sm:%s172] %v211
                %v213 = vld [vmem:[%s179 + $0x100] sm:%s172]
                %214 = vst [vmem:[%s180 + $0x80] sm:%s172] %v213
                %v215 = vld [vmem:[%s179 + $0x110] sm:%s172]
                %216 = vst [vmem:[%s180 + $0x88] sm:%s172] %v215
                %v217 = vld [vmem:[%s179 + $0x120] sm:%s172]
                %218 = vst [vmem:[%s180 + $0x90] sm:%s172] %v217
                %v219 = vld [vmem:[%s179 + $0x130] sm:%s172]
                %220 = vst [vmem:[%s180 + $0x98] sm:%s172] %v219
                %v221 = vld [vmem:[%s179 + $0x140] sm:%s172]
                %222 = vst [vmem:[%s180 + $0xa0] sm:%s172] %v221
                %v223 = vld [vmem:[%s179 + $0x150] sm:%s172]
                %224 = vst [vmem:[%s180 + $0xa8] sm:%s172] %v223
                %v225 = vld [vmem:[%s179 + $0x160] sm:%s172]
                %226 = vst [vmem:[%s180 + $0xb0] sm:%s172] %v225
                %v227 = vld [vmem:[%s179 + $0x170] sm:%s172]
                %228 = vst [vmem:[%s180 + $0xb8] sm:%s172] %v227
                %v229 = vld [vmem:[%s179 + $0x180] sm:%s172]
                %230 = vst [vmem:[%s180 + $0xc0] sm:%s172] %v229
                %v231 = vld [vmem:[%s179 + $0x190] sm:%s172]
                %232 = vst [vmem:[%s180 + $0xc8] sm:%s172] %v231
                %v233 = vld [vmem:[%s179 + $0x1a0] sm:%s172]
                %234 = vst [vmem:[%s180 + $0xd0] sm:%s172] %v233
              $region45: #{rfb_forward.15} parent=39 // loop_footer
                %s178 = sadd.s32 1, %s174
              $region46: #{rfb_forward.15} parent=39 // loop_footer_branch
                %173 = sbr.rel target = $region42
              $region47: #{rfb_forward.15} parent=39 // loop_exit
                _
            $region40: #{rfb_forward.15} parent=31 // pred_fallthru
              _
          $region32: #{rfb_forward.15} parent=27 // pred_fallthru
            _
          %301 = vnop
        $region28: #{rfb_forward.15} parent=23 // pred_fallthru
          _
        // Predicated region
        $region63: #{rfb_forward.15} parent=23 // pred_check
          %p302 = pneg %p98
        $region64: #{rfb_forward.15} parent=23 // pred_check_branch
          %304 = sbr.rel (%p302) target = $region66
        $region65: #{rfb_forward.15} parent=23 // pred_region
          %s305 = smul.u32 2, %s10
          %p306 = scmp.lt.s32.totalorder %s305, 3
          %s307 = scalar_select %p306, %s305, 3
          %s308 = smul.addr %s307, 8
          %s309 = scalar_lea.vmem %s3, %s308
          %s310 = smul.u32 2, %s10
        $region66: #{rfb_forward.15} parent=23 // pred_fallthru
          _
      $region24: #{rfb_forward.15} parent=5 // pred_fallthru
        _
      %p311 = scmp.le.s32.totalorder 1, %s10
      %p312 = scmp.lt.s32.totalorder %s10, 3
      %p313 = pnand %p311, %p312
      %p314 = pneg %p313
      // Predicated region
      $region67: #{rfb_forward.15} parent=5 // pred_check
        _
      $region68: #{rfb_forward.15} parent=5 // pred_check_branch
        %316 = sbr.rel (%p313) target = $region70
      $region69: #{rfb_forward.15} parent=5 // pred_region
        %s317 = ssub.s32 %s10, 1
        %s318 = sand.u32 %s65, 1
        %s319 = sand.u32 %s65, 1
        %s320 = smul.addr %s319, 216
        %s321 = scalar_lea.vmem [#allocation2], %s320
        // Predicated region
        $region71: #{rfb_forward.15} parent=69 // pred_check
          %p322 = pneg %p78
        $region72: #{rfb_forward.15} parent=69 // pred_check_branch
          %324 = sbr.rel (%p322) target = $region74
        $region73: #{rfb_forward.15} parent=69 // pred_region
          _
        $region74: #{rfb_forward.15} parent=69 // pred_fallthru
          _
        %p325 = pneg %p31
        %p326 = pneg %p28
        %p327 = pneg %p52
        %p328 = pneg %p49
        %s329 = sand.u32 %s65, 1
        %s330 = sand.u32 %s65, 1
        %s331 = smul.addr %s330, 216
        %s332 = scalar_lea.vmem [#allocation2], %s331
        %p333 = pneg %p78
        %p334 = pneg %p75
        %s335 = smul.u32 2, %s15
        %p336 = scmp.lt.s32.totalorder %s335, 3
        %s337 = scalar_select %p336, %s335, 3
        %s338 = smul.addr %s337, 8
        %s339 = scalar_lea.vmem %s3, %s338
        %p340 = pneg %p104
        %p341 = pneg %p101
        %p342 = pneg %p130
        %p343 = pneg %p127
        %s344 = smul.u32 2, %s15
        %p345 = scmp.lt.s32.totalorder %s344, 3
        %s346 = scalar_select %p345, %s344, 3
        %s347 = smul.addr %s346, 8
        %s348 = scalar_lea.vmem %s4, %s347
        %s349 = smul.u32 2, %s15
        %s350 = smul.u32 2, %s15
        %p351 = scmp.lt.s32.totalorder %s350, 3
        %s352 = scalar_select %p351, %s350, 3
        %s353 = smul.addr %s352, 8
        %s354 = scalar_lea.vmem %s3, %s353
        %s355 = smul.u32 2, %s15
        %s356 = smul.u32 2, %s15
        %p357 = scmp.lt.s32.totalorder %s356, 3
        %s358 = scalar_select %p357, %s356, 3
        %s359 = smul.addr %s358, 8
        %s360 = scalar_lea.vmem %s4, %s359
        %s361 = smul.u32 2, %s15
        %v363 = vld [vmem:[%s0] sm:$0xff]
        %v364 = vld [vmem:[%s321] sm:$0xff]
        %v365 = vld [vmem:[%s321 + $0x8] sm:$0xff]
        %v366 = vld [vmem:[%s321 + $0x10] sm:$0xff]
        %v367 = vld [vmem:[%s321 + $0x18] sm:$0xff]
        %v368 = vld [vmem:[%s321 + $0x20] sm:$0xff]
        %v369 = vld [vmem:[%s321 + $0x28] sm:$0xff]
        %v370 = vld [vmem:[%s321 + $0x30] sm:$0xff]
        %v371 = vld [vmem:[%s321 + $0x38] sm:$0xff]
        %v372 = vld [vmem:[%s321 + $0x40] sm:$0xff]
        %v373 = vld [vmem:[%s321 + $0x48] sm:$0xff]
        %v374 = vld [vmem:[%s321 + $0x50] sm:$0xff]
        %v375 = vld [vmem:[%s321 + $0x58] sm:$0xff]
        %v376 = vld [vmem:[%s321 + $0x60] sm:$0xff]
        %v377 = vld [vmem:[%s321 + $0x68] sm:$0xff]
        %v378 = vld [vmem:[%s321 + $0x70] sm:$0xff]
        %v379 = vld [vmem:[%s321 + $0x78] sm:$0xff]
        %v380 = vld [vmem:[%s321 + $0x80] sm:$0xff]
        %v381 = vld [vmem:[%s321 + $0x88] sm:$0xff]
        %v382 = vld [vmem:[%s321 + $0x90] sm:$0xff]
        %v383 = vld [vmem:[%s321 + $0x98] sm:$0xff]
        %v384 = vld [vmem:[%s321 + $0xa0] sm:$0xff]
        %v385 = vld [vmem:[%s321 + $0xa8] sm:$0xff]
        %v386 = vld [vmem:[%s321 + $0xb0] sm:$0xff]
        %v387 = vld [vmem:[%s321 + $0xb8] sm:$0xff]
        %v388 = vld [vmem:[%s321 + $0xc0] sm:$0xff]
        %v389 = vld [vmem:[%s321 + $0xc8] sm:$0xff]
        %v390 = vld [vmem:[%s321 + $0xd0] sm:$0xff]
        %v391 = vld [vmem:[%s1] sm:$0xff]
        %393 = vset.pattern.permute.xlu0 0
        %394 = vperm.xlu0 %393, %v391
        %v395 = vpop.permute.xlu0 %394
        %v398 = vunpack.c.l.b16 %v363
        %v399 = vunpack.c.h.b16 %v363
        %v400 = vpack.c.b16 %v398, %v398
        %v401 = vpack.c.b16 %v399, %v399
        %v430 = vunpack.c.l.b16 %v364
        %v431 = vunpack.c.h.b16 %v364
        %v432 = vunpack.c.l.b16 %v365
        %v433 = vunpack.c.h.b16 %v365
        %v434 = vunpack.c.l.b16 %v366
        %v435 = vunpack.c.h.b16 %v366
        %v436 = vunpack.c.l.b16 %v367
        %v437 = vunpack.c.h.b16 %v367
        %v438 = vunpack.c.l.b16 %v368
        %v439 = vunpack.c.h.b16 %v368
        %v440 = vunpack.c.l.b16 %v369
        %v441 = vunpack.c.h.b16 %v369
        %v442 = vunpack.c.l.b16 %v370
        %v443 = vunpack.c.h.b16 %v370
        %v444 = vunpack.c.l.b16 %v371
        %v445 = vunpack.c.h.b16 %v371
        %v446 = vunpack.c.l.b16 %v372
        %v447 = vunpack.c.h.b16 %v372
        %v448 = vunpack.c.l.b16 %v373
        %v449 = vunpack.c.h.b16 %v373
        %v450 = vunpack.c.l.b16 %v374
        %v451 = vunpack.c.h.b16 %v374
        %v452 = vunpack.c.l.b16 %v375
        %v453 = vunpack.c.h.b16 %v375
        %v454 = vunpack.c.l.b16 %v376
        %v455 = vunpack.c.h.b16 %v376
        %v456 = vunpack.c.l.b16 %v377
        %v457 = vunpack.c.h.b16 %v377
        %v458 = vunpack.c.l.b16 %v378
        %v459 = vunpack.c.h.b16 %v378
        %v460 = vunpack.c.l.b16 %v379
        %v461 = vunpack.c.h.b16 %v379
        %v462 = vunpack.c.l.b16 %v380
        %v463 = vunpack.c.h.b16 %v380
        %v464 = vunpack.c.l.b16 %v381
        %v465 = vunpack.c.h.b16 %v381
        %v466 = vunpack.c.l.b16 %v382
        %v467 = vunpack.c.h.b16 %v382
        %v468 = vunpack.c.l.b16 %v383
        %v469 = vunpack.c.h.b16 %v383
        %v470 = vunpack.c.l.b16 %v384
        %v471 = vunpack.c.h.b16 %v384
        %v472 = vunpack.c.l.b16 %v385
        %v473 = vunpack.c.h.b16 %v385
        %v474 = vunpack.c.l.b16 %v386
        %v475 = vunpack.c.h.b16 %v386
        %v476 = vunpack.c.l.b16 %v387
        %v477 = vunpack.c.h.b16 %v387
        %v478 = vunpack.c.l.b16 %v388
        %v479 = vunpack.c.h.b16 %v388
        %v480 = vunpack.c.l.b16 %v389
        %v481 = vunpack.c.h.b16 %v389
        %v482 = vunpack.c.l.b16 %v390
        %v483 = vunpack.c.h.b16 %v390
        %v484 = vpack.c.b16 %v432, %v430
        %v485 = vpack.c.b16 %v433, %v431
        %v486 = vpack.c.b16 %v436, %v434
        %v487 = vpack.c.b16 %v437, %v435
        %v488 = vpack.c.b16 %v440, %v438
        %v489 = vpack.c.b16 %v441, %v439
        %v490 = vpack.c.b16 %v444, %v442
        %v491 = vpack.c.b16 %v445, %v443
        %v492 = vpack.c.b16 %v448, %v446
        %v493 = vpack.c.b16 %v449, %v447
        %v494 = vpack.c.b16 %v452, %v450
        %v495 = vpack.c.b16 %v453, %v451
        %v496 = vpack.c.b16 %v456, %v454
        %v497 = vpack.c.b16 %v457, %v455
        %v498 = vpack.c.b16 %v460, %v458
        %v499 = vpack.c.b16 %v461, %v459
        %v500 = vpack.c.b16 %v464, %v462
        %v501 = vpack.c.b16 %v465, %v463
        %v502 = vpack.c.b16 %v468, %v466
        %v503 = vpack.c.b16 %v469, %v467
        %v504 = vpack.c.b16 %v472, %v470
        %v505 = vpack.c.b16 %v473, %v471
        %v506 = vpack.c.b16 %v476, %v474
        %v507 = vpack.c.b16 %v477, %v475
        %v508 = vpack.c.b16 %v480, %v478
        %v509 = vpack.c.b16 %v481, %v479
        %v510 = vpack.c.b16 %v482, %v482
        %v511 = vpack.c.b16 %v483, %v483
        %vm538 = vcmask 719872
        %v540 = vsel %vm538, %v401, 0
        %vm542 = vcmask 1043456
        %v544 = vsel %vm542, %v510, 0
        %v547 = vsel %vm542, %v511, 0
        %549 = vmatprep.subr.bf16.mxu0 %v499
        %550 = vmatpush1.bf16.msra.mxu0 %v498
        %551 = vmatprep.subr.bf16.mxu0 %v497
        %552 = vmatpush1.bf16.msra.mxu0 %v496
        %553 = vmatprep.subr.bf16.mxu0 %v495
        %554 = vmatpush1.bf16.msra.mxu0 %v494
        %555 = vmatprep.subr.bf16.mxu0 %v493
        %556 = vmatpush1.bf16.msra.mxu0 %v492
        %557 = vmatprep.subr.bf16.mxu0 %v491
        %558 = vmatpush1.bf16.msra.mxu0 %v490
        %559 = vmatprep.subr.bf16.mxu0 %v489
        %560 = vmatpush1.bf16.msra.mxu0 %v488
        %561 = vmatprep.subr.bf16.mxu0 %v487
        %562 = vmatpush1.bf16.msra.mxu0 %v486
        %563 = vmatprep.subr.bf16.mxu0 %v485
        %564 = vmatpush1.bf16.msra.mxu0 %v484
        %565 = vmatprep.subr.bf16.mxu0 0
        %566 = vmatpush2.bf16.msra.mxu0 0
        %567 = vmatprep.subr.bf16.mxu0 0
        %568 = vmatpush2.bf16.msra.mxu0 0
        %569 = vmatprep.subr.bf16.mxu0 %v547
        %570 = vmatpush2.bf16.msra.mxu0 %v544
        %571 = vmatprep.subr.bf16.mxu0 %v509
        %572 = vmatpush2.bf16.msra.mxu0 %v508
        %573 = vmatprep.subr.bf16.mxu0 %v507
        %574 = vmatpush2.bf16.msra.mxu0 %v506
        %575 = vmatprep.subr.bf16.mxu0 %v505
        %576 = vmatpush2.bf16.msra.mxu0 %v504
        %577 = vmatprep.subr.bf16.mxu0 %v503
        %578 = vmatpush2.bf16.msra.mxu0 %v502
        %579 = vmatprep.subr.bf16.mxu0 %v501
        %580 = vmatpush2.bf16.msra.mxu0 %v500
        %581 = vmatprep.mubr.bf16.mxu0 %v540
        %582 = vmatmul.mubr.bf16.gmra.mxu0 %v400
        %v583 = vpop.f32.mrf.mxu0
        %v584 = vadd.f32 %v395, %v583
        %v585 = vpop.f32.mrf.mxu0
        %v586 = vadd.f32 %v395, %v585
        %v587 = vpop.f32.mrf.mxu0
        %v588 = vpop.f32.mrf.mxu0
        %589 = vdwg.mxu0
        %v590 = vld [vmem:[%s354] sm:$0xff]
        %v591 = vld [vmem:[%s354 + $0x8] sm:$0xff]
        %v592 = vadd.f32 %v584, %v590
        %v593 = vadd.f32 %v586, %v591
        %v594 = vmax.f32 %v592, 0.0
        %v595 = vmax.f32 %v593, 0.0
        %596 = vst [vmem:[%s360] sm:$0xff] %v594
        %597 = vst [vmem:[%s360 + $0x8] sm:$0xff] %v595
        %s598 = smul.u32 2, %s15
        %p599 = scmp.lt.s32.totalorder %s598, 3
        %s600 = scalar_select %p599, %s598, 3
        %s601 = smul.addr %s600, 8
        %s602 = scalar_lea.vmem %s4, %s601
        // Predicated region
        $region75: #{rfb_forward.15} parent=69 // pred_check
          %p603 = pneg %p127
        $region76: #{rfb_forward.15} parent=69 // pred_check_branch
          %605 = sbr.rel (%p603) target = $region78
        $region77: #{rfb_forward.15} parent=69 // pred_region
          %s606 = smul.u32 2, %s15
        $region78: #{rfb_forward.15} parent=69 // pred_fallthru
          _
      $region70: #{rfb_forward.15} parent=5 // pred_fallthru
        _
      %p607 = scmp.le.s32.totalorder 2, %s10
      // Predicated region
      $region79: #{rfb_forward.15} parent=5 // pred_check
        %p608 = pneg %p607
      $region80: #{rfb_forward.15} parent=5 // pred_check_branch
        %610 = sbr.rel (%p608) target = $region82
      $region81: #{rfb_forward.15} parent=5 // pred_region
        %s611 = ssub.s32 %s10, 2
        // Predicated region
        $region83: #{rfb_forward.15} parent=81 // pred_check
          %p612 = pneg %p133
        $region84: #{rfb_forward.15} parent=81 // pred_check_branch
          %614 = sbr.rel (%p612) target = $region86
        $region85: #{rfb_forward.15} parent=81 // pred_region
          %s615 = smul.u32 2, %s16
          %p616 = scmp.lt.s32.totalorder %s615, 3
          %s617 = scalar_select %p616, %s615, 3
          %s618 = smul.addr %s617, 8
          %s619 = scalar_lea.vmem %s4, %s618
        $region86: #{rfb_forward.15} parent=81 // pred_fallthru
          _
      $region82: #{rfb_forward.15} parent=5 // pred_fallthru
        _
    $region6: #{rfb_forward.15} parent=1 // loop_footer
      %s14 = sadd.s32 1, %s10
    $region7: #{rfb_forward.15} parent=1 // loop_footer_branch
      %9 = sbr.rel target = $region3
    $region8: #{rfb_forward.15} parent=1 // loop_exit
      _

</llo_original>
